<compile_context>
chip_gen: v7x
topology: tpu7x:2x2x1
jax: 0.10.0
libtpu: 0.0.40
codegen_flags: <defaults>
</compile_context>

<pallas_src>
import jax
import jax.numpy as jnp
from jax.experimental import pallas as pl
from jax.experimental.pallas import tpu as pltpu


# --------------------------------------------------------------------------------------
# Kernel 1: per-node conv layers + per-core pooled partial sums (node axis streamed).
# Grid = (num_cores "parallel", node_tiles "arbitrary").  Activations are node-transposed
# ([Hp, tile]) so the streamed x tile is lane-dense.
# --------------------------------------------------------------------------------------
def pooled_conv_kernel(x_ref, batch_ref, wc0_ref, bc0_ref, wc1_ref, bc1_ref, part_ref):
    i = pl.program_id(1)

    @pl.when(i == 0)
    def _init():
        part_ref[...] = jnp.zeros_like(part_ref)

    hp = wc0_ref.shape[0]
    cin = x_ref.shape[0]
    tile = x_ref.shape[1]
    mm = wc1_ref.dtype                       # MXU operand dtype (f32 or bf16)

    # ---- conv layer 1: Linear(in=cin) -- cin is tiny, so do it on the VPU -------------
    x = x_ref[...].astype(jnp.float32)       # [cin, tile]
    if cin <= 8:
        # 4 broadcast-multiply-adds (outer products), bias as the init; avoids a
        # zero-padded (K=4 -> 256) MXU pass.  Static unroll: cin is a trace-time constant.
        w0 = wc0_ref[...]                    # [Hp, cin] f32
        h = jnp.broadcast_to(bc0_ref[...], (hp, tile))
        for k in range(cin):
            h = h + w0[:, k:k + 1] * x[k:k + 1, :]
    else:
        h = jnp.dot(wc0_ref[...].astype(mm), x.astype(mm),
                    preferred_element_type=jnp.float32) + bc0_ref[...]
    h = jnp.maximum(h, 0.0)                  # [Hp, tile] f32

    # ---- conv layer 2: Linear on the MXU (contraction = Hp) ---------------------------
    h2 = jnp.dot(wc1_ref[...], h.astype(mm), preferred_element_type=jnp.float32)
    h2 = jnp.maximum(h2 + bc1_ref[...], 0.0)  # f32 epilogue -> f32 operand for the pooling

    # ---- per-tile segment sum for global_mean_pool (f32 operands for accuracy) --------
    g = part_ref.shape[0]
    ids = jax.lax.broadcasted_iota(jnp.int32, (g, tile), 0)
    onehot = (ids == batch_ref[...]).astype(jnp.float32)   # padded nodes (id == g) drop out
    part_ref[...] += jax.lax.dot_general(                  # contract node (lane) dim of both
        onehot, h2, (((1,), (1,)), ((), ())),
        preferred_element_type=jnp.float32)                # -> [G, Hp]


# --------------------------------------------------------------------------------------
# Kernel 2: combine per-core partials, apply 1/count (mean pool), run the FC head.
# Tiny problem ([G, Hp]); single invocation, whole arrays resident in VMEM.
# --------------------------------------------------------------------------------------
def pool_fc_kernel(part_ref, invc_ref, wf0_ref, bf0_ref, wf1_ref, bf1_ref, out_ref):
    mm = wf0_ref.dtype
    pooled = jnp.sum(part_ref[...], axis=0) * invc_ref[...]      # [G, Hp] f32 mean pool
    h = jnp.dot(pooled.astype(mm), wf0_ref[...], preferred_element_type=jnp.float32)
    h = jnp.maximum(h + bf0_ref[...], 0.0)
    h = jnp.dot(h.astype(mm), wf1_ref[...], preferred_element_type=jnp.float32)
    out_ref[...] = (h + bf1_ref[...]).astype(out_ref.dtype)


def _round_up(a, m):
    return ((a + m - 1) // m) * m


def _pad2d(a, rows, cols):
    return jnp.pad(a, ((0, rows - a.shape[0]), (0, cols - a.shape[1])))


def gnn_regressor_forward(x, edge_index, batch, num_graphs, params, *,
                          node_tile=2048, num_cores=2,
                          compute_dtype=jnp.float32, lane=128):
    """Pallas forward for GNNRegressor(conv_name='DEEPSET', num_layers=2, num_layers_fc=2).

    x:          [N, in_channels] float32 node features
    edge_index: ignored (DEEPSET conv does not use graph connectivity)
    batch:      [N] int32 graph assignment per node (values in [0, num_graphs))
    params:     dict of PyTorch-layout weights W[out, in] and biases b[out]
    """
    del edge_index                                    # unused by the DEEPSET conv
    N, cin = x.shape
    H = params["wc0"].shape[0]                        # torch layout: [out, in]
    Hfc = params["wf1"].shape[0]
    Hp = _round_up(H, lane)
    Hfcp = _round_up(Hfc, lane)
    G = int(num_graphs)
    f32 = jnp.float32

    # Kernel-layout, lane-dense zero-padded parameters.
    wc0_k = _pad2d(params["wc0"].astype(f32), Hp, cin)                       # [Hp, cin] (VPU, f32)
    bc0_k = _pad2d(params["bc0"].astype(f32).reshape(H, 1), Hp, 1)           # [Hp, 1]
    wc1_k = _pad2d(params["wc1"].astype(f32), Hp, Hp).astype(compute_dtype)  # [Hp, Hp] (MXU)
    bc1_k = _pad2d(params["bc1"].astype(f32).reshape(H, 1), Hp, 1)           # [Hp, 1]
    wf0_k = _pad2d(params["wf0"].astype(f32).T, Hp, Hfcp).astype(compute_dtype)
    bf0_k = _pad2d(params["bf0"].astype(f32).reshape(1, Hfc), 1, Hfcp)
    wf1_k = _pad2d(params["wf1"].astype(f32).T, Hfcp, Hfcp).astype(compute_dtype)
    bf1_k = _pad2d(params["bf1"].astype(f32).reshape(1, Hfc), 1, Hfcp)

    # Node axis: lane-dense transposed stream, padded so every core gets whole tiles.
    n_pad = _round_up(max(N, 1), num_cores * node_tile)
    tiles_per_core = n_pad // (num_cores * node_tile)
    x_t = jnp.pad(x.astype(compute_dtype).T, ((0, 0), (0, n_pad - N)))       # [cin, n_pad]
    batch_row = jnp.pad(batch.astype(jnp.int32), (0, n_pad - N),
                        constant_values=G).reshape(1, n_pad)                 # padded ids excluded

    # Per-graph 1/count via scatter-add (no [G, N] one-hot outside the kernel);
    # guard against empty graphs (matches FC(0) behaviour of the reference).
    counts = jnp.zeros((G,), f32).at[batch.astype(jnp.int32)].add(1.0)
    inv_counts = (1.0 / jnp.maximum(counts, 1.0)).reshape(G, 1)

    flops = int(2 * n_pad * (cin * Hp + Hp * Hp + G * Hp))
    bytes_accessed = int(x_t.size * x_t.dtype.itemsize + batch_row.size * 4
                         + (wc0_k.size + bc0_k.size + bc1_k.size) * 4
                         + wc1_k.size * wc1_k.dtype.itemsize
                         + num_cores * G * Hp * 4)
    cost = pl.CostEstimate(flops=flops, transcendentals=0, bytes_accessed=bytes_accessed)

    grid_spec = pltpu.PrefetchScalarGridSpec(
        num_scalar_prefetch=0,
        grid=(num_cores, tiles_per_core),
        in_specs=[
            pl.BlockSpec((cin, node_tile), lambda c, i: (0, c * tiles_per_core + i)),  # x (lane-dense)
            pl.BlockSpec((1, node_tile), lambda c, i: (0, c * tiles_per_core + i)),    # batch ids
            pl.BlockSpec((Hp, cin), lambda c, i: (0, 0)),    # wc0 (resident)
            pl.BlockSpec((Hp, 1), lambda c, i: (0, 0)),      # bc0
            pl.BlockSpec((Hp, Hp), lambda c, i: (0, 0)),     # wc1
            pl.BlockSpec((Hp, 1), lambda c, i: (0, 0)),      # bc1
        ],
        # One pooled-sum partial per core; revisited (accumulated) across the inner axis.
        out_specs=pl.BlockSpec((None, G, Hp), lambda c, i: (c, 0, 0)),
    )

    partials = pl.pallas_call(
        pooled_conv_kernel,
        out_shape=jax.ShapeDtypeStruct((num_cores, G, Hp), jnp.float32),
        grid_spec=grid_spec,
        compiler_params=pltpu.CompilerParams(
            dimension_semantics=("parallel", "arbitrary"),   # cores x node-tile reduction
            vmem_limit_bytes=32 * 1024 * 1024,               # ~5 MiB used at tile=2048
        ),
        cost_estimate=cost,
    )(x_t, batch_row, wc0_k, bc0_k, wc1_k, bc1_k)

    out_padded = pl.pallas_call(
        pool_fc_kernel,
        out_shape=jax.ShapeDtypeStruct((G, Hfcp), jnp.float32),
    )(partials, inv_counts, wf0_k, bf0_k, wf1_k, bf1_k)

    return out_padded[:, :Hfc]


def _torch_linear_init(key, fan_in, fan_out):
    """Deterministic init matching nn.Linear's uniform(-1/sqrt(in), 1/sqrt(in)); torch layout."""
    kw, kb = jax.random.split(key)
    bound = float(fan_in) ** -0.5
    w = jax.random.uniform(kw, (fan_out, fan_in), jnp.float32, -bound, bound)   # W[out, in]
    b = jax.random.uniform(kb, (fan_out,), jnp.float32, -bound, bound)          # b[out]
    return w, b


def _reference_forward(x, batch, num_graphs, p):
    """Pure-JAX reference for correctness checking (torch-layout params)."""
    h = jnp.maximum(x @ p["wc0"].T + p["bc0"], 0.0)
    h = jnp.maximum(h @ p["wc1"].T + p["bc1"], 0.0)
    onehot = (jnp.arange(num_graphs)[:, None] == batch[None, :]).astype(jnp.float32)
    counts = jnp.maximum(onehot.sum(axis=1, keepdims=True), 1.0)
    pooled = (onehot @ h) / counts
    h = jnp.maximum(pooled @ p["wf0"].T + p["bf0"], 0.0)
    return h @ p["wf1"].T + p["bf1"]


if __name__ == "__main__":
    # Module hyperparameters (conv_name='DEEPSET', num_layers=2, num_layers_fc=2)
    in_channels = 4
    hidden_channels = 32
    hidden_channels_fc = 32

    key = jax.random.PRNGKey(0)
    kc0, kc1, kf0, kf1, kx1, kx2, kb2 = jax.random.split(key, 7)

    params = {}
    params["wc0"], params["bc0"] = _torch_linear_init(kc0, in_channels, hidden_channels)
    params["wc1"], params["bc1"] = _torch_linear_init(kc1, hidden_channels, hidden_channels)
    params["wf0"], params["bf0"] = _torch_linear_init(kf0, hidden_channels, hidden_channels_fc)
    params["wf1"], params["bf1"] = _torch_linear_init(kf1, hidden_channels_fc, hidden_channels_fc)

    # --- Case 1: module-sized toy problem (N=16 nodes, 2 graphs), default tiling -------
    N1, G1 = 16, 2
    x1 = jax.random.normal(kx1, (N1, in_channels), jnp.float32)
    batch1 = jnp.repeat(jnp.arange(G1, dtype=jnp.int32), N1 // G1)
    edge_index1 = jnp.zeros((2, N1), jnp.int32)   # interface only; unused by DEEPSET

    out1 = jax.block_until_ready(gnn_regressor_forward(x1, edge_index1, batch1, G1, params))
    ref1 = _reference_forward(x1, batch1, G1, params)
    assert out1.shape == (G1, hidden_channels_fc)
    assert jnp.allclose(out1, ref1, atol=1e-4, rtol=1e-4), "f32 single-tile mismatch"

    # --- Case 2: multi-tile node grid over both grid axes (grid (2, 6)), f32 -----------
    N2, G2 = 6000, 4
    x2 = jax.random.normal(kx2, (N2, in_channels), jnp.float32)
    batch2 = jnp.sort(jax.random.randint(kb2, (N2,), 0, G2)).astype(jnp.int32)
    edge_index2 = jnp.zeros((2, N2), jnp.int32)
    out2 = jax.block_until_ready(
        gnn_regressor_forward(x2, edge_index2, batch2, G2, params, node_tile=512))
    ref2 = _reference_forward(x2, batch2, G2, params)
    assert out2.shape == (G2, hidden_channels_fc)
    assert jnp.allclose(out2, ref2, atol=1e-4, rtol=1e-4), "f32 multi-tile mismatch"

    # --- Case 3: bf16 MXU operands (layer 2 + FC head); layer 1 and pooling stay f32 ---
    out3 = jax.block_until_ready(
        gnn_regressor_forward(x2, edge_index2, batch2, G2, params,
                              compute_dtype=jnp.bfloat16))
    assert jnp.allclose(out3, ref2, atol=5e-2, rtol=5e-2), "bf16 mismatch"

    print("KERNEL_OK")
</pallas_src>

<mosaic_0001>
module attributes {stable_mosaic.version = 11 : i64} {
  func.func @pooled_conv_kernel(%arg0: i32, %arg1: i32, %arg2: memref<4x2048xf32, #tpu.memory_space<vmem>>, %arg3: memref<1x2048xi32, #tpu.memory_space<vmem>>, %arg4: memref<128x4xf32, #tpu.memory_space<vmem>>, %arg5: memref<128x1xf32, #tpu.memory_space<vmem>>, %arg6: memref<128x128xf32, #tpu.memory_space<vmem>>, %arg7: memref<128x1xf32, #tpu.memory_space<vmem>>, %arg8: memref<1x2x128xf32, #tpu.memory_space<vmem>>) attributes {dimension_semantics = [#tpu.dimension_semantics<parallel>, #tpu.dimension_semantics<arbitrary>], iteration_bounds = array<i64: 2, 1>, scalar_prefetch = 0 : i64, scratch_operands = 0 : i64, tpu.core_type = #tpu.core_type<tc>, window_params = [{transform_indices = @transform_0, window_bounds = array<i64: 4, 2048>}, {transform_indices = @transform_1, window_bounds = array<i64: 1, 2048>}, {pipeline_mode = #tpu.pipeline_mode<synchronous>, transform_indices = @transform_2, window_bounds = array<i64: 128, 4>}, {pipeline_mode = #tpu.pipeline_mode<synchronous>, transform_indices = @transform_3, window_bounds = array<i64: 128, 1>}, {pipeline_mode = #tpu.pipeline_mode<synchronous>, transform_indices = @transform_4, window_bounds = array<i64: 128, 128>}, {pipeline_mode = #tpu.pipeline_mode<synchronous>, transform_indices = @transform_5, window_bounds = array<i64: 128, 1>}, {transform_indices = @transform_6, window_bounds = array<i64: 1, 2, 128>}]} {
    %c0_i32 = arith.constant 0 : i32
    %0 = arith.cmpi eq, %arg1, %c0_i32 : i32
    %1 = arith.extui %0 : i1 to i32
    %c0_i32_0 = arith.constant 0 : i32
    %2 = arith.cmpi ne, %1, %c0_i32_0 : i32
    scf.if %2 {
      %cst_21 = arith.constant 0.000000e+00 : f32
      %54 = vector.broadcast %cst_21 : f32 to vector<2x128xf32>
      %c0_22 = arith.constant 0 : index
      %c0_23 = arith.constant 0 : index
      %c0_24 = arith.constant 0 : index
      %55 = vector.load %arg8[%c0_22, %c0_23, %c0_24] : memref<1x2x128xf32, #tpu.memory_space<vmem>>, vector<1x2x128xf32>
      %56 = vector.shape_cast %55 : vector<1x2x128xf32> to vector<2x128xf32>
      %57 = vector.shape_cast %54 : vector<2x128xf32> to vector<1x2x128xf32>
      tpu.vector_store %arg8[%c0_22, %c0_23, %c0_24], %57 {strides = array<i32>} : memref<1x2x128xf32, #tpu.memory_space<vmem>>, vector<1x2x128xf32>,
    } else {
    }
    %c0 = arith.constant 0 : index
    %c0_1 = arith.constant 0 : index
    %3 = vector.load %arg2[%c0, %c0_1] : memref<4x2048xf32, #tpu.memory_space<vmem>>, vector<4x2048xf32>
    %c0_2 = arith.constant 0 : index
    %c0_3 = arith.constant 0 : index
    %4 = vector.load %arg4[%c0_2, %c0_3] : memref<128x4xf32, #tpu.memory_space<vmem>>, vector<128x4xf32>
    %c0_4 = arith.constant 0 : index
    %c0_5 = arith.constant 0 : index
    %5 = vector.load %arg5[%c0_4, %c0_5] : memref<128x1xf32, #tpu.memory_space<vmem>>, vector<128x1xf32>
    %6 = vector.shape_cast %5 : vector<128x1xf32> to vector<128x1xf32>
    %7 = vector.broadcast %6 : vector<128x1xf32> to vector<128x2048xf32>
    %8 = vector.extract_strided_slice %4 {offsets = [0, 0], sizes = [128, 1], strides = [1, 1]} : vector<128x4xf32> to vector<128x1xf32>
    %9 = vector.extract_strided_slice %3 {offsets = [0, 0], sizes = [1, 2048], strides = [1, 1]} : vector<4x2048xf32> to vector<1x2048xf32>
    %10 = vector.broadcast %8 : vector<128x1xf32> to vector<128x2048xf32>
    %11 = vector.broadcast %9 : vector<1x2048xf32> to vector<128x2048xf32>
    %12 = arith.mulf %10, %11 : vector<128x2048xf32>
    %13 = arith.addf %7, %12 : vector<128x2048xf32>
    %14 = vector.extract_strided_slice %4 {offsets = [0, 1], sizes = [128, 1], strides = [1, 1]} : vector<128x4xf32> to vector<128x1xf32>
    %15 = vector.extract_strided_slice %3 {offsets = [1, 0], sizes = [1, 2048], strides = [1, 1]} : vector<4x2048xf32> to vector<1x2048xf32>
    %16 = vector.broadcast %14 : vector<128x1xf32> to vector<128x2048xf32>
    %17 = vector.broadcast %15 : vector<1x2048xf32> to vector<128x2048xf32>
    %18 = arith.mulf %16, %17 : vector<128x2048xf32>
    %19 = arith.addf %13, %18 : vector<128x2048xf32>
    %20 = vector.extract_strided_slice %4 {offsets = [0, 2], sizes = [128, 1], strides = [1, 1]} : vector<128x4xf32> to vector<128x1xf32>
    %21 = vector.extract_strided_slice %3 {offsets = [2, 0], sizes = [1, 2048], strides = [1, 1]} : vector<4x2048xf32> to vector<1x2048xf32>
    %22 = vector.broadcast %20 : vector<128x1xf32> to vector<128x2048xf32>
    %23 = vector.broadcast %21 : vector<1x2048xf32> to vector<128x2048xf32>
    %24 = arith.mulf %22, %23 : vector<128x2048xf32>
    %25 = arith.addf %19, %24 : vector<128x2048xf32>
    %26 = vector.extract_strided_slice %4 {offsets = [0, 3], sizes = [128, 1], strides = [1, 1]} : vector<128x4xf32> to vector<128x1xf32>
    %27 = vector.extract_strided_slice %3 {offsets = [3, 0], sizes = [1, 2048], strides = [1, 1]} : vector<4x2048xf32> to vector<1x2048xf32>
    %28 = vector.broadcast %26 : vector<128x1xf32> to vector<128x2048xf32>
    %29 = vector.broadcast %27 : vector<1x2048xf32> to vector<128x2048xf32>
    %30 = arith.mulf %28, %29 : vector<128x2048xf32>
    %31 = arith.addf %25, %30 : vector<128x2048xf32>
    %cst = arith.constant 0.000000e+00 : f32
    %32 = vector.broadcast %cst : f32 to vector<128x2048xf32>
    %33 = arith.maximumf %31, %32 : vector<128x2048xf32>
    %c0_6 = arith.constant 0 : index
    %c0_7 = arith.constant 0 : index
    %34 = vector.load %arg6[%c0_6, %c0_7] : memref<128x128xf32, #tpu.memory_space<vmem>>, vector<128x128xf32>
    %cst_8 = arith.constant dense<0.000000e+00> : vector<128x2048xf32>
    %35 = tpu.matmul %34, %33, %cst_8 {dimension_numbers = #tpu.dot_dimension_numbers<[1], [0], [0], [1], [0, 0, 1, 1], [], []>} : vector<128x128xf32>, vector<128x2048xf32>, vector<128x2048xf32> -> vector<128x2048xf32>
    %c0_9 = arith.constant 0 : index
    %c0_10 = arith.constant 0 : index
    %36 = vector.load %arg7[%c0_9, %c0_10] : memref<128x1xf32, #tpu.memory_space<vmem>>, vector<128x1xf32>
    %37 = vector.broadcast %36 : vector<128x1xf32> to vector<128x2048xf32>
    %38 = arith.addf %35, %37 : vector<128x2048xf32>
    %cst_11 = arith.constant 0.000000e+00 : f32
    %39 = vector.broadcast %cst_11 : f32 to vector<128x2048xf32>
    %40 = arith.maximumf %38, %39 : vector<128x2048xf32>
    %41 = tpu.iota {dimensions = array<i32: 0>} : vector<2x2048xi32>
    %c0_12 = arith.constant 0 : index
    %c0_13 = arith.constant 0 : index
    %42 = vector.load %arg3[%c0_12, %c0_13] : memref<1x2048xi32, #tpu.memory_space<vmem>>, vector<1x2048xi32>
    %43 = vector.broadcast %42 : vector<1x2048xi32> to vector<2x2048xi32>
    %44 = arith.cmpi eq, %41, %43 : vector<2x2048xi32>
    %45 = arith.extui %44 : vector<2x2048xi1> to vector<2x2048xi32>
    %46 = arith.sitofp %45 : vector<2x2048xi32> to vector<2x2048xf32>
    %c0_14 = arith.constant 0 : index
    %c0_15 = arith.constant 0 : index
    %c0_16 = arith.constant 0 : index
    %47 = vector.load %arg8[%c0_14, %c0_15, %c0_16] : memref<1x2x128xf32, #tpu.memory_space<vmem>>, vector<1x2x128xf32>
    %48 = vector.shape_cast %47 : vector<1x2x128xf32> to vector<2x128xf32>
    %cst_17 = arith.constant dense<0.000000e+00> : vector<2x128xf32>
    %49 = tpu.matmul %46, %40, %cst_17 {dimension_numbers = #tpu.dot_dimension_numbers<[1], [1], [0], [0], [0, 0, 1, 0], [], []>} : vector<2x2048xf32>, vector<128x2048xf32>, vector<2x128xf32> -> vector<2x128xf32>
    %50 = arith.addf %48, %49 : vector<2x128xf32>
    %c0_18 = arith.constant 0 : index
    %c0_19 = arith.constant 0 : index
    %c0_20 = arith.constant 0 : index
    %51 = vector.load %arg8[%c0_18, %c0_19, %c0_20] : memref<1x2x128xf32, #tpu.memory_space<vmem>>, vector<1x2x128xf32>
    %52 = vector.shape_cast %51 : vector<1x2x128xf32> to vector<2x128xf32>
    %53 = vector.shape_cast %50 : vector<2x128xf32> to vector<1x2x128xf32>
    tpu.vector_store %arg8[%c0_18, %c0_19, %c0_20], %53 {strides = array<i32>} : memref<1x2x128xf32, #tpu.memory_space<vmem>>, vector<1x2x128xf32>,
    return
  }
  func.func @transform_0(%arg0: i32, %arg1: i32) -> (i32, i32) {
    %c1_i32 = arith.constant 1 : i32
    %0 = arith.muli %arg0, %c1_i32 : i32
    %1 = arith.addi %0, %arg1 : i32
    %c0_i32 = arith.constant 0 : i32
    %c0_i32_0 = arith.constant 0 : i32
    return %c0_i32, %1 : i32, i32
  }
  func.func @transform_1(%arg0: i32, %arg1: i32) -> (i32, i32) {
    %c1_i32 = arith.constant 1 : i32
    %0 = arith.muli %arg0, %c1_i32 : i32
    %1 = arith.addi %0, %arg1 : i32
    %c0_i32 = arith.constant 0 : i32
    %c0_i32_0 = arith.constant 0 : i32
    return %c0_i32, %1 : i32, i32
  }
  func.func @transform_2(%arg0: i32, %arg1: i32) -> (i32, i32) {
    %c0_i32 = arith.constant 0 : i32
    %c0_i32_0 = arith.constant 0 : i32
    %c0_i32_1 = arith.constant 0 : i32
    return %c0_i32, %c0_i32_0 : i32, i32
  }
  func.func @transform_3(%arg0: i32, %arg1: i32) -> (i32, i32) {
    %c0_i32 = arith.constant 0 : i32
    %c0_i32_0 = arith.constant 0 : i32
    %c0_i32_1 = arith.constant 0 : i32
    return %c0_i32, %c0_i32_0 : i32, i32
  }
  func.func @transform_4(%arg0: i32, %arg1: i32) -> (i32, i32) {
    %c0_i32 = arith.constant 0 : i32
    %c0_i32_0 = arith.constant 0 : i32
    %c0_i32_1 = arith.constant 0 : i32
    return %c0_i32, %c0_i32_0 : i32, i32
  }
  func.func @transform_5(%arg0: i32, %arg1: i32) -> (i32, i32) {
    %c0_i32 = arith.constant 0 : i32
    %c0_i32_0 = arith.constant 0 : i32
    %c0_i32_1 = arith.constant 0 : i32
    return %c0_i32, %c0_i32_0 : i32, i32
  }
  func.func @transform_6(%arg0: i32, %arg1: i32) -> (i32, i32, i32) {
    %c0_i32 = arith.constant 0 : i32
    %c0_i32_0 = arith.constant 0 : i32
    %c0_i32_1 = arith.constant 0 : i32
    return %arg0, %c0_i32, %c0_i32_0 : i32, i32, i32
  }
}

</mosaic_0001>

<llo_original>
// kernel: tpu_custom_call.1
$region0: #{tpu_custom_call.1}
  #allocation0 [shape = 'u32[]', space=smem, size = 0x4, offset = 0x4, fixed_abs, tag = 'smem constant byte address 0x4 - core index']
  #allocation1 [shape = 'u32[144,128]{1,0:T(1,128)}', space=vmem, size = 0x12000, scoped, tag = 'internal scratch']
  %s0 = inlined_call_operand.vmem [shape: f32[4,4096], index: 0, kind: input, shape index: {}]
  %s1 = inlined_call_operand.vmem [shape: s32[1,4096], index: 1, kind: input, shape index: {}]
  %s2 = inlined_call_operand.vmem [shape: f32[128,4], index: 2, kind: input, shape index: {}]
  %s3 = inlined_call_operand.vmem [shape: f32[128,1], index: 3, kind: input, shape index: {}]
  %s4 = inlined_call_operand.vmem [shape: f32[128,128], index: 4, kind: input, shape index: {}]
  %s5 = inlined_call_operand.vmem [shape: f32[128,1], index: 5, kind: input, shape index: {}]
  %s6 = inlined_call_operand.hbm [shape: f32[2,2,128], index: 6, kind: output, shape index: {}]
  %s7 = sld [smem:[#allocation0]]
  $region61: #{tpu_custom_call.1} parent=0
    _
  %s9 = ssub.s32 1, %s7
  %s10 = scalar_select 0, %s9, %s7
  $region1: #{tpu_custom_call.1} parent=0
    #allocation2 [shape = 'u8[2048]{0}', space=vmem, size = 0x800, scoped, tag = 'output window, operand 0']
    #allocation3 [shape = 's32[2]{0}', space=sflag, size = 0x8, scoped, tag = 'scoped memory for tpu_custom_call.1']
    %11 = vsyncpa [#allocation3], 0
    %s12 = scalar_lea.sflag [#allocation3], 1
    %13 = vsyncpa %s12, 0
    loop: start=0, step=1, limit=4
    $region2: #{tpu_custom_call.1} parent=1 // loop_pre_header
      _
    $region3: #{tpu_custom_call.1} parent=1 // loop_header
      %s15 = sphi 0, %s19
      %p16 = scmp.ge.s32.totalorder %s15, 4
      %s22 = sphi 0, %s34
      %s23 = sphi 0, %s30
      %s24 = sphi 0, %s22
      %s25 = sphi 0, %s23
      %s26 = sphi 0, %s24
      %s27 = sphi 0, %s25
      %s39 = sphi 0, %s41
      %s42 = sphi 0, %s39
      %s43 = sphi 0, %s42
      %s59 = sphi 0, %s43
      %s67 = sphi 0, %s69
      %s70 = sphi 0, %s67
      %s71 = sphi 0, %s70
      %s87 = sphi 0, %s71
      %s91 = sphi 0, %s91
      %s93 = sphi 0, %s91
      %s94 = sphi 0, %s93
      %s108 = sphi 0, %s94
      %s112 = sphi 0, %s112
      %s114 = sphi 0, %s112
      %s115 = sphi 0, %s114
      %s129 = sphi 0, %s115
      %s133 = sphi 0, %s133
      %s135 = sphi 0, %s133
      %s136 = sphi 0, %s135
      %s150 = sphi 0, %s136
      %s154 = sphi 0, %s154
      %s156 = sphi 0, %s154
      %s157 = sphi 0, %s156
      %s171 = sphi 0, %s157
      %s177 = sphi 0, %s179
      %s180 = sphi 0, %s177
      %s181 = sphi 0, %s180
      %s197 = sphi 0, %s181
    $region4: #{tpu_custom_call.1} parent=1 // loop_header_branch
      %18 = sbr.rel (%p16) target = $region8
    $region5: #{tpu_custom_call.1} parent=1 // loop_body
      %s20 = ssub.s32 %s15, 1
      %s21 = ssub.s32 %s15, 2
      %s28 = sadd.s32 1, %s23
      %p29 = scmp.ge.s32.totalorder %s28, 1
      %s30 = scalar_select %p29, 0, %s28
      %s31 = sadd.s32 1, %s22
      %s32 = scalar_select %p29, %s31, %s22
      %p33 = scmp.ge.s32.totalorder %s32, 2
      %s34 = scalar_select %p33, 0, %s32
      %s35 = sadd.s32 %s22, %s23
      %s36 = sadd.s32 %s34, %s30
      %s37 = ssub.s32 %s35, %s36
      %p38 = scmp.eq.s32.totalorder %s37, 0
      %s40 = sadd.s32 %s39, 1
      %s41 = scalar_select %p38, %s39, %s40
      %p44 = pneg %p38
      %p45 = scmp.eq.s32.totalorder %s15, 1
      %p46 = por %p44, %p45
      %p47 = scmp.ne.s32.totalorder %s39, %s42
      %p48 = scmp.eq.s32.totalorder %s15, 0
      %p49 = por %p47, %p48
      %p50 = scmp.ne.s32.totalorder %s39, %s42
      %p51 = scmp.eq.s32.totalorder %s20, 1
      %p52 = por %p50, %p51
      %p53 = scmp.ne.s32.totalorder %s42, %s43
      %p54 = scmp.eq.s32.totalorder %s20, 0
      %p55 = por %p53, %p54
      %p56 = scmp.ne.s32.totalorder %s42, %s43
      %p57 = scmp.eq.s32.totalorder %s21, 1
      %p58 = por %p56, %p57
      %p60 = scmp.ne.s32.totalorder %s43, %s59
      %p61 = scmp.eq.s32.totalorder %s21, 0
      %p62 = por %p60, %p61
      %s63 = sadd.s32 %s22, %s23
      %s64 = sadd.s32 %s34, %s30
      %s65 = ssub.s32 %s63, %s64
      %p66 = scmp.eq.s32.totalorder %s65, 0
      %s68 = sadd.s32 %s67, 1
      %s69 = scalar_select %p66, %s67, %s68
      %p72 = pneg %p66
      %p73 = scmp.eq.s32.totalorder %s15, 1
      %p74 = por %p72, %p73
      %p75 = scmp.ne.s32.totalorder %s67, %s70
      %p76 = scmp.eq.s32.totalorder %s15, 0
      %p77 = por %p75, %p76
      %p78 = scmp.ne.s32.totalorder %s67, %s70
      %p79 = scmp.eq.s32.totalorder %s20, 1
      %p80 = por %p78, %p79
      %p81 = scmp.ne.s32.totalorder %s70, %s71
      %p82 = scmp.eq.s32.totalorder %s20, 0
      %p83 = por %p81, %p82
      %p84 = scmp.ne.s32.totalorder %s70, %s71
      %p85 = scmp.eq.s32.totalorder %s21, 1
      %p86 = por %p84, %p85
      %p88 = scmp.ne.s32.totalorder %s71, %s87
      %p89 = scmp.eq.s32.totalorder %s21, 0
      %p90 = por %p88, %p89
      %s92 = sadd.s32 %s91, 1
      %p95 = scmp.eq.s32.totalorder %s15, 1
      %p96 = scmp.ne.s32.totalorder %s91, %s93
      %p97 = scmp.eq.s32.totalorder %s15, 0
      %p98 = por %p96, %p97
      %p99 = scmp.ne.s32.totalorder %s91, %s93
      %p100 = scmp.eq.s32.totalorder %s20, 1
      %p101 = por %p99, %p100
      %p102 = scmp.ne.s32.totalorder %s93, %s94
      %p103 = scmp.eq.s32.totalorder %s20, 0
      %p104 = por %p102, %p103
      %p105 = scmp.ne.s32.totalorder %s93, %s94
      %p106 = scmp.eq.s32.totalorder %s21, 1
      %p107 = por %p105, %p106
      %p109 = scmp.ne.s32.totalorder %s94, %s108
      %p110 = scmp.eq.s32.totalorder %s21, 0
      %p111 = por %p109, %p110
      %s113 = sadd.s32 %s112, 1
      %p116 = scmp.eq.s32.totalorder %s15, 1
      %p117 = scmp.ne.s32.totalorder %s112, %s114
      %p118 = scmp.eq.s32.totalorder %s15, 0
      %p119 = por %p117, %p118
      %p120 = scmp.ne.s32.totalorder %s112, %s114
      %p121 = scmp.eq.s32.totalorder %s20, 1
      %p122 = por %p120, %p121
      %p123 = scmp.ne.s32.totalorder %s114, %s115
      %p124 = scmp.eq.s32.totalorder %s20, 0
      %p125 = por %p123, %p124
      %p126 = scmp.ne.s32.totalorder %s114, %s115
      %p127 = scmp.eq.s32.totalorder %s21, 1
      %p128 = por %p126, %p127
      %p130 = scmp.ne.s32.totalorder %s115, %s129
      %p131 = scmp.eq.s32.totalorder %s21, 0
      %p132 = por %p130, %p131
      %s134 = sadd.s32 %s133, 1
      %p137 = scmp.eq.s32.totalorder %s15, 1
      %p138 = scmp.ne.s32.totalorder %s133, %s135
      %p139 = scmp.eq.s32.totalorder %s15, 0
      %p140 = por %p138, %p139
      %p141 = scmp.ne.s32.totalorder %s133, %s135
      %p142 = scmp.eq.s32.totalorder %s20, 1
      %p143 = por %p141, %p142
      %p144 = scmp.ne.s32.totalorder %s135, %s136
      %p145 = scmp.eq.s32.totalorder %s20, 0
      %p146 = por %p144, %p145
      %p147 = scmp.ne.s32.totalorder %s135, %s136
      %p148 = scmp.eq.s32.totalorder %s21, 1
      %p149 = por %p147, %p148
      %p151 = scmp.ne.s32.totalorder %s136, %s150
      %p152 = scmp.eq.s32.totalorder %s21, 0
      %p153 = por %p151, %p152
      %s155 = sadd.s32 %s154, 1
      %p158 = scmp.eq.s32.totalorder %s15, 1
      %p159 = scmp.ne.s32.totalorder %s154, %s156
      %p160 = scmp.eq.s32.totalorder %s15, 0
      %p161 = por %p159, %p160
      %p162 = scmp.ne.s32.totalorder %s154, %s156
      %p163 = scmp.eq.s32.totalorder %s20, 1
      %p164 = por %p162, %p163
      %p165 = scmp.ne.s32.totalorder %s156, %s157
      %p166 = scmp.eq.s32.totalorder %s20, 0
      %p167 = por %p165, %p166
      %p168 = scmp.ne.s32.totalorder %s156, %s157
      %p169 = scmp.eq.s32.totalorder %s21, 1
      %p170 = por %p168, %p169
      %p172 = scmp.ne.s32.totalorder %s157, %s171
      %p173 = scmp.eq.s32.totalorder %s21, 0
      %p174 = por %p172, %p173
      %s175 = ssub.s32 %s22, %s34
      %p176 = scmp.eq.s32.totalorder %s175, 0
      %s178 = sadd.s32 %s177, 1
      %s179 = scalar_select %p176, %s177, %s178
      %p182 = pneg %p176
      %p183 = scmp.eq.s32.totalorder %s15, 1
      %p184 = por %p182, %p183
      %p185 = scmp.ne.s32.totalorder %s177, %s180
      %p186 = scmp.eq.s32.totalorder %s15, 0
      %p187 = por %p185, %p186
      %p188 = scmp.ne.s32.totalorder %s177, %s180
      %p189 = scmp.eq.s32.totalorder %s20, 1
      %p190 = por %p188, %p189
      %p191 = scmp.ne.s32.totalorder %s180, %s181
      %p192 = scmp.eq.s32.totalorder %s20, 0
      %p193 = por %p191, %p192
      %p194 = scmp.ne.s32.totalorder %s180, %s181
      %p195 = scmp.eq.s32.totalorder %s21, 1
      %p196 = por %p194, %p195
      %p198 = scmp.ne.s32.totalorder %s181, %s197
      %p199 = scmp.eq.s32.totalorder %s21, 0
      %p200 = por %p198, %p199
      %p201 = scmp.le.s32.totalorder 1, %s15
      %p202 = scmp.lt.s32.totalorder %s15, 3
      %p203 = pnand %p201, %p202
      %p204 = pneg %p203
      // Predicated region
      $region9: #{tpu_custom_call.1} parent=5 // pred_check
        _
      $region10: #{tpu_custom_call.1} parent=5 // pred_check_branch
        %206 = sbr.rel (%p203) target = $region12
      $region11: #{tpu_custom_call.1} parent=5 // pred_region
        %s207 = ssub.s32 %s15, 1
        // Predicated region
        $region13: #{tpu_custom_call.1} parent=11 // pred_check
          %p208 = pneg %p104
        $region14: #{tpu_custom_call.1} parent=11 // pred_check_branch
          %210 = sbr.rel (%p208) target = $region16
        $region15: #{tpu_custom_call.1} parent=11 // pred_region
          _
        $region16: #{tpu_custom_call.1} parent=11 // pred_fallthru
          _
        // Predicated region
        $region17: #{tpu_custom_call.1} parent=11 // pred_check
          %p211 = pneg %p125
        $region18: #{tpu_custom_call.1} parent=11 // pred_check_branch
          %213 = sbr.rel (%p211) target = $region20
        $region19: #{tpu_custom_call.1} parent=11 // pred_region
          _
        $region20: #{tpu_custom_call.1} parent=11 // pred_fallthru
          _
        // Predicated region
        $region21: #{tpu_custom_call.1} parent=11 // pred_check
          %p214 = pneg %p146
        $region22: #{tpu_custom_call.1} parent=11 // pred_check_branch
          %216 = sbr.rel (%p214) target = $region24
        $region23: #{tpu_custom_call.1} parent=11 // pred_region
          _
        $region24: #{tpu_custom_call.1} parent=11 // pred_fallthru
          _
        // Predicated region
        $region25: #{tpu_custom_call.1} parent=11 // pred_check
          %p217 = pneg %p167
        $region26: #{tpu_custom_call.1} parent=11 // pred_check_branch
          %219 = sbr.rel (%p217) target = $region28
        $region27: #{tpu_custom_call.1} parent=11 // pred_region
          _
        $region28: #{tpu_custom_call.1} parent=11 // pred_fallthru
          _
      $region12: #{tpu_custom_call.1} parent=5 // pred_fallthru
        _
      %p220 = scmp.lt.s32.totalorder %s15, 2
      // Predicated region
      $region29: #{tpu_custom_call.1} parent=5 // pred_check
        %p221 = pneg %p220
      $region30: #{tpu_custom_call.1} parent=5 // pred_check_branch
        %223 = sbr.rel (%p221) target = $region32
      $region31: #{tpu_custom_call.1} parent=5 // pred_region
        // Predicated region
        $region33: #{tpu_custom_call.1} parent=31 // pred_check
          %p224 = pneg %p49
        $region34: #{tpu_custom_call.1} parent=31 // pred_check_branch
          %226 = sbr.rel (%p224) target = $region36
        $region35: #{tpu_custom_call.1} parent=31 // pred_region
          %s227 = sadd.s32 %s22, %s23
          %s228 = smul.u32 16, %s227
          %p229 = scmp.lt.s32.totalorder %s228, 31
          %s230 = scalar_select %p229, %s228, 31
          %s231 = smul.addr %s230, 4
          %s232 = scalar_lea.vmem %s0, %s231
          %s233 = sadd.s32 %s22, %s23
          %s234 = smul.u32 16, %s233
        $region36: #{tpu_custom_call.1} parent=31 // pred_fallthru
          _
        // Predicated region
        $region37: #{tpu_custom_call.1} parent=31 // pred_check
          %p235 = pneg %p77
        $region38: #{tpu_custom_call.1} parent=31 // pred_check_branch
          %237 = sbr.rel (%p235) target = $region40
        $region39: #{tpu_custom_call.1} parent=31 // pred_region
          %s238 = sadd.s32 %s22, %s23
          %s239 = smul.u32 16, %s238
          %p240 = scmp.lt.s32.totalorder %s239, 31
          %s241 = scalar_select %p240, %s239, 31
          %s242 = scalar_lea.vmem %s1, %s241
          %s243 = sadd.s32 %s22, %s23
          %s244 = smul.u32 16, %s243
        $region40: #{tpu_custom_call.1} parent=31 // pred_fallthru
          _
      $region32: #{tpu_custom_call.1} parent=5 // pred_fallthru
        _
      %p245 = scmp.le.s32.totalorder 1, %s15
      %p246 = scmp.lt.s32.totalorder %s15, 3
      %p247 = pnand %p245, %p246
      %p248 = pneg %p247
      // Predicated region
      $region41: #{tpu_custom_call.1} parent=5 // pred_check
        _
      $region42: #{tpu_custom_call.1} parent=5 // pred_check_branch
        %250 = sbr.rel (%p247) target = $region44
      $region43: #{tpu_custom_call.1} parent=5 // pred_region
        %s251 = ssub.s32 %s15, 1
        %s252 = sadd.s32 %s24, %s25
        %s253 = smul.u32 16, %s252
        %p254 = scmp.lt.s32.totalorder %s253, 31
        %s255 = scalar_select %p254, %s253, 31
        %s256 = smul.addr %s255, 4
        %s257 = scalar_lea.vmem %s0, %s256
        %p258 = pneg %p55
        %p259 = pneg %p52
        %s260 = sadd.s32 %s24, %s25
        %s261 = smul.u32 16, %s260
        %p262 = scmp.lt.s32.totalorder %s261, 31
        %s263 = scalar_select %p262, %s261, 31
        %s264 = scalar_lea.vmem %s1, %s263
        %p265 = pneg %p83
        %p266 = pneg %p80
        %p267 = pneg %p104
        %p268 = pneg %p101
        %p269 = pneg %p125
        %p270 = pneg %p122
        %p271 = pneg %p146
        %p272 = pneg %p143
        %p273 = pneg %p167
        %p274 = pneg %p164
        %p275 = pneg %p193
        %p276 = pneg %p190
        %s277 = sand.u32 %s180, 1
        %s278 = scalar_lea.sflag [#allocation3], %s277
        %s279 = sand.u32 %s180, 1
        %s280 = smul.addr %s279, 2
        %s281 = scalar_lea.vmem [#allocation2], %s280
        %s282 = sadd.s32 %s24, %s25
        %s283 = smul.u32 16, %s282
        %p284 = scmp.lt.s32.totalorder %s283, 31
        %s285 = scalar_select %p284, %s283, 31
        %s286 = smul.addr %s285, 4
        %s287 = scalar_lea.vmem %s0, %s286
        %s288 = sadd.s32 %s24, %s25
        %s289 = smul.u32 16, %s288
        %s290 = sadd.s32 %s24, %s25
        %s291 = smul.u32 16, %s290
        %p292 = scmp.lt.s32.totalorder %s291, 31
        %s293 = scalar_select %p292, %s291, 31
        %s294 = scalar_lea.vmem %s1, %s293
        %s295 = sadd.s32 %s24, %s25
        %s296 = smul.u32 16, %s295
        %p297 = scmp.eq.s32.totalorder %s25, 0
        // Predicated region
        $region45: #{tpu_custom_call.1} parent=43 // pred_check
          %p298 = pneg %p297
        $region46: #{tpu_custom_call.1} parent=43 // pred_check_branch
          %300 = sbr.rel (%p298) target = $region48
        $region47: #{tpu_custom_call.1} parent=43 // pred_region
          %301 = vst [vmem:[%s281] sm:$0x3] 0.0
        $region48: #{tpu_custom_call.1} parent=43 // pred_fallthru
          _
        %v302 = vld [vmem:[%s287] sm:$0xff]
        %v303 = vld [vmem:[%s287 + $0x8] sm:$0xff]
        %v304 = vld [vmem:[%s287 + $0x10] sm:$0xff]
        %v305 = vld [vmem:[%s287 + $0x18] sm:$0xff]
        %v306 = vld [vmem:[%s287 + $0x20] sm:$0xff]
        %v307 = vld [vmem:[%s287 + $0x28] sm:$0xff]
        %v308 = vld [vmem:[%s287 + $0x30] sm:$0xff]
        %v309 = vld [vmem:[%s287 + $0x38] sm:$0xff]
        %v310 = vld [vmem:[%s2] sm:$0xff]
        %v311 = vld [vmem:[%s2 + $0x8] sm:$0xff]
        %v312 = vld [vmem:[%s2 + $0x10] sm:$0xff]
        %v313 = vld [vmem:[%s2 + $0x18] sm:$0xff]
        %v314 = vld [vmem:[%s2 + $0x20] sm:$0xff]
        %v315 = vld [vmem:[%s2 + $0x28] sm:$0xff]
        %v316 = vld [vmem:[%s2 + $0x30] sm:$0xff]
        %v317 = vld [vmem:[%s2 + $0x38] sm:$0xff]
        %v318 = vld [vmem:[%s2 + $0x40] sm:$0xff]
        %v319 = vld [vmem:[%s2 + $0x48] sm:$0xff]
        %v320 = vld [vmem:[%s2 + $0x50] sm:$0xff]
        %v321 = vld [vmem:[%s2 + $0x58] sm:$0xff]
        %v322 = vld [vmem:[%s2 + $0x60] sm:$0xff]
        %v323 = vld [vmem:[%s2 + $0x68] sm:$0xff]
        %v324 = vld [vmem:[%s2 + $0x70] sm:$0xff]
        %v325 = vld [vmem:[%s2 + $0x78] sm:$0xff]
        %v326 = vld [vmem:[%s3] sm:$0xff]
        %v327 = vld [vmem:[%s3 + $0x8] sm:$0xff]
        %v328 = vld [vmem:[%s3 + $0x10] sm:$0xff]
        %v329 = vld [vmem:[%s3 + $0x18] sm:$0xff]
        %v330 = vld [vmem:[%s3 + $0x20] sm:$0xff]
        %v331 = vld [vmem:[%s3 + $0x28] sm:$0xff]
        %v332 = vld [vmem:[%s3 + $0x30] sm:$0xff]
        %v333 = vld [vmem:[%s3 + $0x38] sm:$0xff]
        %v334 = vld [vmem:[%s3 + $0x40] sm:$0xff]
        %v335 = vld [vmem:[%s3 + $0x48] sm:$0xff]
        %v336 = vld [vmem:[%s3 + $0x50] sm:$0xff]
        %v337 = vld [vmem:[%s3 + $0x58] sm:$0xff]
        %v338 = vld [vmem:[%s3 + $0x60] sm:$0xff]
        %v339 = vld [vmem:[%s3 + $0x68] sm:$0xff]
        %v340 = vld [vmem:[%s3 + $0x70] sm:$0xff]
        %v341 = vld [vmem:[%s3 + $0x78] sm:$0xff]
        %343 = vset.pattern.permute.xlu0 0
        %344 = vperm.xlu0 %343, %v326
        %v345 = vpop.permute.xlu0 %344
        %348 = vset.pattern.permute.xlu0 0
        %349 = vperm.xlu0 %348, %v327
        %v350 = vpop.permute.xlu0 %349
        %353 = vset.pattern.permute.xlu0 0
        %354 = vperm.xlu0 %353, %v328
        %v355 = vpop.permute.xlu0 %354
        %358 = vset.pattern.permute.xlu0 0
        %359 = vperm.xlu0 %358, %v329
        %v360 = vpop.permute.xlu0 %359
        %363 = vset.pattern.permute.xlu0 0
        %364 = vperm.xlu0 %363, %v330
        %v365 = vpop.permute.xlu0 %364
        %368 = vset.pattern.permute.xlu0 0
        %369 = vperm.xlu0 %368, %v331
        %v370 = vpop.permute.xlu0 %369
        %373 = vset.pattern.permute.xlu0 0
        %374 = vperm.xlu0 %373, %v332
        %v375 = vpop.permute.xlu0 %374
        %378 = vset.pattern.permute.xlu0 0
        %379 = vperm.xlu0 %378, %v333
        %v380 = vpop.permute.xlu0 %379
        %383 = vset.pattern.permute.xlu0 0
        %384 = vperm.xlu0 %383, %v334
        %v385 = vpop.permute.xlu0 %384
        %388 = vset.pattern.permute.xlu0 0
        %389 = vperm.xlu0 %388, %v335
        %v390 = vpop.permute.xlu0 %389
        %393 = vset.pattern.permute.xlu0 0
        %394 = vperm.xlu0 %393, %v336
        %v395 = vpop.permute.xlu0 %394
        %398 = vset.pattern.permute.xlu0 0
        %399 = vperm.xlu0 %398, %v337
        %v400 = vpop.permute.xlu0 %399
        %403 = vset.pattern.permute.xlu0 0
        %404 = vperm.xlu0 %403, %v338
        %v405 = vpop.permute.xlu0 %404
        %408 = vset.pattern.permute.xlu0 0
        %409 = vperm.xlu0 %408, %v339
        %v410 = vpop.permute.xlu0 %409
        %413 = vset.pattern.permute.xlu0 0
        %414 = vperm.xlu0 %413, %v340
        %v415 = vpop.permute.xlu0 %414
        %418 = vset.pattern.permute.xlu0 0
        %419 = vperm.xlu0 %418, %v341
        %v420 = vpop.permute.xlu0 %419
        %423 = vset.pattern.permute.xlu0 0
        %424 = vperm.xlu0 %423, %v310
        %v425 = vpop.permute.xlu0 %424
        %428 = vset.pattern.permute.xlu0 0
        %429 = vperm.xlu0 %428, %v311
        %v430 = vpop.permute.xlu0 %429
        %433 = vset.pattern.permute.xlu0 0
        %434 = vperm.xlu0 %433, %v312
        %v435 = vpop.permute.xlu0 %434
        %438 = vset.pattern.permute.xlu0 0
        %439 = vperm.xlu0 %438, %v313
        %v440 = vpop.permute.xlu0 %439
        %443 = vset.pattern.permute.xlu0 0
        %444 = vperm.xlu0 %443, %v314
        %v445 = vpop.permute.xlu0 %444
        %448 = vset.pattern.permute.xlu0 0
        %449 = vperm.xlu0 %448, %v315
        %v450 = vpop.permute.xlu0 %449
        %453 = vset.pattern.permute.xlu0 0
        %454 = vperm.xlu0 %453, %v316
        %v455 = vpop.permute.xlu0 %454
        %458 = vset.pattern.permute.xlu0 0
        %459 = vperm.xlu0 %458, %v317
        %v460 = vpop.permute.xlu0 %459
        %463 = vset.pattern.permute.xlu0 0
        %464 = vperm.xlu0 %463, %v318
        %v465 = vpop.permute.xlu0 %464
        %468 = vset.pattern.permute.xlu0 0
        %469 = vperm.xlu0 %468, %v319
        %v470 = vpop.permute.xlu0 %469
        %473 = vset.pattern.permute.xlu0 0
        %474 = vperm.xlu0 %473, %v320
        %v475 = vpop.permute.xlu0 %474
        %478 = vset.pattern.permute.xlu0 0
        %479 = vperm.xlu0 %478, %v321
        %v480 = vpop.permute.xlu0 %479
        %483 = vset.pattern.permute.xlu0 0
        %484 = vperm.xlu0 %483, %v322
        %v485 = vpop.permute.xlu0 %484
        %488 = vset.pattern.permute.xlu0 0
        %489 = vperm.xlu0 %488, %v323
        %v490 = vpop.permute.xlu0 %489
        %493 = vset.pattern.permute.xlu0 0
        %494 = vperm.xlu0 %493, %v324
        %v495 = vpop.permute.xlu0 %494
        %498 = vset.pattern.permute.xlu0 0
        %499 = vperm.xlu0 %498, %v325
        %v500 = vpop.permute.xlu0 %499
        %v510 = vlaneseq
        %v511 = vshrl.u32 %v510, 7
        %v512 = vsub.s32 0, %v511
        %v513 = vrot.slane %v302, %v512
        %v514 = vlaneseq
        %v515 = vshrl.u32 %v514, 7
        %v516 = vsub.s32 4, %v515
        %v517 = vrot.slane %v302, %v516
        %v518 = vlaneseq
        %v519 = vshrl.u32 %v518, 7
        %v520 = vsub.s32 0, %v519
        %v521 = vrot.slane %v303, %v520
        %v522 = vlaneseq
        %v523 = vshrl.u32 %v522, 7
        %v524 = vsub.s32 4, %v523
        %v525 = vrot.slane %v303, %v524
        %v526 = vlaneseq
        %v527 = vshrl.u32 %v526, 7
        %v528 = vsub.s32 0, %v527
        %v529 = vrot.slane %v304, %v528
        %v530 = vlaneseq
        %v531 = vshrl.u32 %v530, 7
        %v532 = vsub.s32 4, %v531
        %v533 = vrot.slane %v304, %v532
        %v534 = vlaneseq
        %v535 = vshrl.u32 %v534, 7
        %v536 = vsub.s32 0, %v535
        %v537 = vrot.slane %v305, %v536
        %v538 = vlaneseq
        %v539 = vshrl.u32 %v538, 7
        %v540 = vsub.s32 4, %v539
        %v541 = vrot.slane %v305, %v540
        %v542 = vlaneseq
        %v543 = vshrl.u32 %v542, 7
        %v544 = vsub.s32 0, %v543
        %v545 = vrot.slane %v306, %v544
        %v546 = vlaneseq
        %v547 = vshrl.u32 %v546, 7
        %v548 = vsub.s32 4, %v547
        %v549 = vrot.slane %v306, %v548
        %v550 = vlaneseq
        %v551 = vshrl.u32 %v550, 7
        %v552 = vsub.s32 0, %v551
        %v553 = vrot.slane %v307, %v552
        %v554 = vlaneseq
        %v555 = vshrl.u32 %v554, 7
        %v556 = vsub.s32 4, %v555
        %v557 = vrot.slane %v307, %v556
        %v558 = vlaneseq
        %v559 = vshrl.u32 %v558, 7
        %v560 = vsub.s32 0, %v559
        %v561 = vrot.slane %v308, %v560
        %v562 = vlaneseq
        %v563 = vshrl.u32 %v562, 7
        %v564 = vsub.s32 4, %v563
        %v565 = vrot.slane %v308, %v564
        %v566 = vlaneseq
        %v567 = vshrl.u32 %v566, 7
        %v568 = vsub.s32 0, %v567
        %v569 = vrot.slane %v309, %v568
        %v570 = vlaneseq
        %v571 = vshrl.u32 %v570, 7
        %v572 = vsub.s32 4, %v571
        %v573 = vrot.slane %v309, %v572
        %v590 = vlaneseq
        %v591 = vshrl.u32 %v590, 7
        %v592 = vsub.s32 0, %v591
        %v593 = vrot.slane %v513, %v592
        %v594 = vlaneseq
        %v595 = vshrl.u32 %v594, 7
        %v596 = vsub.s32 0, %v595
        %v597 = vrot.slane %v517, %v596
        %v598 = vlaneseq
        %v599 = vshrl.u32 %v598, 7
        %v600 = vsub.s32 0, %v599
        %v601 = vrot.slane %v521, %v600
        %v602 = vlaneseq
        %v603 = vshrl.u32 %v602, 7
        %v604 = vsub.s32 0, %v603
        %v605 = vrot.slane %v525, %v604
        %v606 = vlaneseq
        %v607 = vshrl.u32 %v606, 7
        %v608 = vsub.s32 0, %v607
        %v609 = vrot.slane %v529, %v608
        %v610 = vlaneseq
        %v611 = vshrl.u32 %v610, 7
        %v612 = vsub.s32 0, %v611
        %v613 = vrot.slane %v533, %v612
        %v614 = vlaneseq
        %v615 = vshrl.u32 %v614, 7
        %v616 = vsub.s32 0, %v615
        %v617 = vrot.slane %v537, %v616
        %v618 = vlaneseq
        %v619 = vshrl.u32 %v618, 7
        %v620 = vsub.s32 0, %v619
        %v621 = vrot.slane %v541, %v620
        %v622 = vlaneseq
        %v623 = vshrl.u32 %v622, 7
        %v624 = vsub.s32 0, %v623
        %v625 = vrot.slane %v545, %v624
        %v626 = vlaneseq
        %v627 = vshrl.u32 %v626, 7
        %v628 = vsub.s32 0, %v627
        %v629 = vrot.slane %v549, %v628
        %v630 = vlaneseq
        %v631 = vshrl.u32 %v630, 7
        %v632 = vsub.s32 0, %v631
        %v633 = vrot.slane %v553, %v632
        %v634 = vlaneseq
        %v635 = vshrl.u32 %v634, 7
        %v636 = vsub.s32 0, %v635
        %v637 = vrot.slane %v557, %v636
        %v638 = vlaneseq
        %v639 = vshrl.u32 %v638, 7
        %v640 = vsub.s32 0, %v639
        %v641 = vrot.slane %v561, %v640
        %v642 = vlaneseq
        %v643 = vshrl.u32 %v642, 7
        %v644 = vsub.s32 0, %v643
        %v645 = vrot.slane %v565, %v644
        %v646 = vlaneseq
        %v647 = vshrl.u32 %v646, 7
        %v648 = vsub.s32 0, %v647
        %v649 = vrot.slane %v569, %v648
        %v650 = vlaneseq
        %v651 = vshrl.u32 %v650, 7
        %v652 = vsub.s32 0, %v651
        %v653 = vrot.slane %v573, %v652
        %v654 = vmul.f32 %v425, %v593
        %v655 = vmul.f32 %v425, %v597
        %v656 = vmul.f32 %v425, %v601
        %v657 = vmul.f32 %v425, %v605
        %v658 = vmul.f32 %v425, %v609
        %v659 = vmul.f32 %v425, %v613
        %v660 = vmul.f32 %v425, %v617
        %v661 = vmul.f32 %v425, %v621
        %v662 = vmul.f32 %v425, %v625
        %v663 = vmul.f32 %v425, %v629
        %v664 = vmul.f32 %v425, %v633
        %v665 = vmul.f32 %v425, %v637
        %v666 = vmul.f32 %v425, %v641
        %v667 = vmul.f32 %v425, %v645
        %v668 = vmul.f32 %v425, %v649
        %v669 = vmul.f32 %v425, %v653
        %v670 = vmul.f32 %v430, %v593
        %v671 = vmul.f32 %v430, %v597
        %v672 = vmul.f32 %v430, %v601
        %v673 = vmul.f32 %v430, %v605
        %v674 = vmul.f32 %v430, %v609
        %v675 = vmul.f32 %v430, %v613
        %v676 = vmul.f32 %v430, %v617
        %v677 = vmul.f32 %v430, %v621
        %v678 = vmul.f32 %v430, %v625
        %v679 = vmul.f32 %v430, %v629
        %v680 = vmul.f32 %v430, %v633
        %v681 = vmul.f32 %v430, %v637
        %v682 = vmul.f32 %v430, %v641
        %v683 = vmul.f32 %v430, %v645
        %v684 = vmul.f32 %v430, %v649
        %v685 = vmul.f32 %v430, %v653
        %v686 = vmul.f32 %v435, %v593
        %v687 = vmul.f32 %v435, %v597
        %v688 = vmul.f32 %v435, %v601
        %v689 = vmul.f32 %v435, %v605
        %v690 = vmul.f32 %v435, %v609
        %v691 = vmul.f32 %v435, %v613
        %v692 = vmul.f32 %v435, %v617
        %v693 = vmul.f32 %v435, %v621
        %v694 = vmul.f32 %v435, %v625
        %v695 = vmul.f32 %v435, %v629
        %v696 = vmul.f32 %v435, %v633
        %v697 = vmul.f32 %v435, %v637
        %v698 = vmul.f32 %v435, %v641
        %v699 = vmul.f32 %v435, %v645
        %v700 = vmul.f32 %v435, %v649
        %v701 = vmul.f32 %v435, %v653
        %v702 = vmul.f32 %v440, %v593
        %v703 = vmul.f32 %v440, %v597
        %v704 = vmul.f32 %v440, %v601
        %v705 = vmul.f32 %v440, %v605
        %v706 = vmul.f32 %v440, %v609
        %v707 = vmul.f32 %v440, %v613
        %v708 = vmul.f32 %v440, %v617
        %v709 = vmul.f32 %v440, %v621
        %v710 = vmul.f32 %v440, %v625
        %v711 = vmul.f32 %v440, %v629
        %v712 = vmul.f32 %v440, %v633
        %v713 = vmul.f32 %v440, %v637
        %v714 = vmul.f32 %v440, %v641
        %v715 = vmul.f32 %v440, %v645
        %v716 = vmul.f32 %v440, %v649
        %v717 = vmul.f32 %v440, %v653
        %v718 = vmul.f32 %v445, %v593
        %v719 = vmul.f32 %v445, %v597
        %v720 = vmul.f32 %v445, %v601
        %v721 = vmul.f32 %v445, %v605
        %v722 = vmul.f32 %v445, %v609
        %v723 = vmul.f32 %v445, %v613
        %v724 = vmul.f32 %v445, %v617
        %v725 = vmul.f32 %v445, %v621
        %v726 = vmul.f32 %v445, %v625
        %v727 = vmul.f32 %v445, %v629
        %v728 = vmul.f32 %v445, %v633
        %v729 = vmul.f32 %v445, %v637
        %v730 = vmul.f32 %v445, %v641
        %v731 = vmul.f32 %v445, %v645
        %v732 = vmul.f32 %v445, %v649
        %v733 = vmul.f32 %v445, %v653
        %v734 = vmul.f32 %v450, %v593
        %v735 = vmul.f32 %v450, %v597
        %v736 = vmul.f32 %v450, %v601
        %v737 = vmul.f32 %v450, %v605
        %v738 = vmul.f32 %v450, %v609
        %v739 = vmul.f32 %v450, %v613
        %v740 = vmul.f32 %v450, %v617
        %v741 = vmul.f32 %v450, %v621
        %v742 = vmul.f32 %v450, %v625
        %v743 = vmul.f32 %v450, %v629
        %v744 = vmul.f32 %v450, %v633
        %v745 = vmul.f32 %v450, %v637
        %v746 = vmul.f32 %v450, %v641
        %v747 = vmul.f32 %v450, %v645
        %v748 = vmul.f32 %v450, %v649
        %v749 = vmul.f32 %v450, %v653
        %v750 = vmul.f32 %v455, %v593
        %v751 = vmul.f32 %v455, %v597
        %v752 = vmul.f32 %v455, %v601
        %v753 = vmul.f32 %v455, %v605
        %v754 = vmul.f32 %v455, %v609
        %v755 = vmul.f32 %v455, %v613
        %v756 = vmul.f32 %v455, %v617
        %v757 = vmul.f32 %v455, %v621
        %v758 = vmul.f32 %v455, %v625
        %v759 = vmul.f32 %v455, %v629
        %v760 = vmul.f32 %v455, %v633
        %v761 = vmul.f32 %v455, %v637
        %v762 = vmul.f32 %v455, %v641
        %v763 = vmul.f32 %v455, %v645
        %v764 = vmul.f32 %v455, %v649
        %v765 = vmul.f32 %v455, %v653
        %v766 = vmul.f32 %v460, %v593
        %v767 = vmul.f32 %v460, %v597
        %v768 = vmul.f32 %v460, %v601
        %v769 = vmul.f32 %v460, %v605
        %v770 = vmul.f32 %v460, %v609
        %v771 = vmul.f32 %v460, %v613
        %v772 = vmul.f32 %v460, %v617
        %v773 = vmul.f32 %v460, %v621
        %v774 = vmul.f32 %v460, %v625
        %v775 = vmul.f32 %v460, %v629
        %v776 = vmul.f32 %v460, %v633
        %v777 = vmul.f32 %v460, %v637
        %v778 = vmul.f32 %v460, %v641
        %v779 = vmul.f32 %v460, %v645
        %v780 = vmul.f32 %v460, %v649
        %v781 = vmul.f32 %v460, %v653
        %v782 = vmul.f32 %v465, %v593
        %v783 = vmul.f32 %v465, %v597
        %v784 = vmul.f32 %v465, %v601
        %v785 = vmul.f32 %v465, %v605
        %v786 = vmul.f32 %v465, %v609
        %v787 = vmul.f32 %v465, %v613
        %v788 = vmul.f32 %v465, %v617
        %v789 = vmul.f32 %v465, %v621
        %v790 = vmul.f32 %v465, %v625
        %v791 = vmul.f32 %v465, %v629
        %v792 = vmul.f32 %v465, %v633
        %v793 = vmul.f32 %v465, %v637
        %v794 = vmul.f32 %v465, %v641
        %v795 = vmul.f32 %v465, %v645
        %v796 = vmul.f32 %v465, %v649
        %v797 = vmul.f32 %v465, %v653
        %v798 = vmul.f32 %v470, %v593
        %v799 = vmul.f32 %v470, %v597
        %v800 = vmul.f32 %v470, %v601
        %v801 = vmul.f32 %v470, %v605
        %v802 = vmul.f32 %v470, %v609
        %v803 = vmul.f32 %v470, %v613
        %v804 = vmul.f32 %v470, %v617
        %v805 = vmul.f32 %v470, %v621
        %v806 = vmul.f32 %v470, %v625
        %v807 = vmul.f32 %v470, %v629
        %v808 = vmul.f32 %v470, %v633
        %v809 = vmul.f32 %v470, %v637
        %v810 = vmul.f32 %v470, %v641
        %v811 = vmul.f32 %v470, %v645
        %v812 = vmul.f32 %v470, %v649
        %v813 = vmul.f32 %v470, %v653
        %v814 = vmul.f32 %v475, %v593
        %v815 = vmul.f32 %v475, %v597
        %v816 = vmul.f32 %v475, %v601
        %v817 = vmul.f32 %v475, %v605
        %v818 = vmul.f32 %v475, %v609
        %v819 = vmul.f32 %v475, %v613
        %v820 = vmul.f32 %v475, %v617
        %v821 = vmul.f32 %v475, %v621
        %v822 = vmul.f32 %v475, %v625
        %v823 = vmul.f32 %v475, %v629
        %v824 = vmul.f32 %v475, %v633
        %v825 = vmul.f32 %v475, %v637
        %v826 = vmul.f32 %v475, %v641
        %v827 = vmul.f32 %v475, %v645
        %v828 = vmul.f32 %v475, %v649
        %v829 = vmul.f32 %v475, %v653
        %v830 = vmul.f32 %v480, %v593
        %v831 = vmul.f32 %v480, %v597
        %v832 = vmul.f32 %v480, %v601
        %v833 = vmul.f32 %v480, %v605
        %v834 = vmul.f32 %v480, %v609
        %v835 = vmul.f32 %v480, %v613
        %v836 = vmul.f32 %v480, %v617
        %v837 = vmul.f32 %v480, %v621
        %v838 = vmul.f32 %v480, %v625
        %v839 = vmul.f32 %v480, %v629
        %v840 = vmul.f32 %v480, %v633
        %v841 = vmul.f32 %v480, %v637
        %v842 = vmul.f32 %v480, %v641
        %v843 = vmul.f32 %v480, %v645
        %v844 = vmul.f32 %v480, %v649
        %v845 = vmul.f32 %v480, %v653
        %v846 = vmul.f32 %v485, %v593
        %v847 = vmul.f32 %v485, %v597
        %v848 = vmul.f32 %v485, %v601
        %v849 = vmul.f32 %v485, %v605
        %v850 = vmul.f32 %v485, %v609
        %v851 = vmul.f32 %v485, %v613
        %v852 = vmul.f32 %v485, %v617
        %v853 = vmul.f32 %v485, %v621
        %v854 = vmul.f32 %v485, %v625
        %v855 = vmul.f32 %v485, %v629
        %v856 = vmul.f32 %v485, %v633
        %v857 = vmul.f32 %v485, %v637
        %v858 = vmul.f32 %v485, %v641
        %v859 = vmul.f32 %v485, %v645
        %v860 = vmul.f32 %v485, %v649
        %v861 = vmul.f32 %v485, %v653
        %v862 = vmul.f32 %v490, %v593
        %v863 = vmul.f32 %v490, %v597
        %v864 = vmul.f32 %v490, %v601
        %v865 = vmul.f32 %v490, %v605
        %v866 = vmul.f32 %v490, %v609
        %v867 = vmul.f32 %v490, %v613
        %v868 = vmul.f32 %v490, %v617
        %v869 = vmul.f32 %v490, %v621
        %v870 = vmul.f32 %v490, %v625
        %v871 = vmul.f32 %v490, %v629
        %v872 = vmul.f32 %v490, %v633
        %v873 = vmul.f32 %v490, %v637
        %v874 = vmul.f32 %v490, %v641
        %v875 = vmul.f32 %v490, %v645
        %v876 = vmul.f32 %v490, %v649
        %v877 = vmul.f32 %v490, %v653
        %v878 = vmul.f32 %v495, %v593
        %v879 = vmul.f32 %v495, %v597
        %v880 = vmul.f32 %v495, %v601
        %v881 = vmul.f32 %v495, %v605
        %v882 = vmul.f32 %v495, %v609
        %v883 = vmul.f32 %v495, %v613
        %v884 = vmul.f32 %v495, %v617
        %v885 = vmul.f32 %v495, %v621
        %v886 = vmul.f32 %v495, %v625
        %v887 = vmul.f32 %v495, %v629
        %v888 = vmul.f32 %v495, %v633
        %v889 = vmul.f32 %v495, %v637
        %v890 = vmul.f32 %v495, %v641
        %v891 = vmul.f32 %v495, %v645
        %v892 = vmul.f32 %v495, %v649
        %v893 = vmul.f32 %v495, %v653
        %v894 = vmul.f32 %v500, %v593
        %v895 = vmul.f32 %v500, %v597
        %v896 = vmul.f32 %v500, %v601
        %v897 = vmul.f32 %v500, %v605
        %v898 = vmul.f32 %v500, %v609
        %v899 = vmul.f32 %v500, %v613
        %v900 = vmul.f32 %v500, %v617
        %v901 = vmul.f32 %v500, %v621
        %v902 = vmul.f32 %v500, %v625
        %v903 = vmul.f32 %v500, %v629
        %v904 = vmul.f32 %v500, %v633
        %v905 = vmul.f32 %v500, %v637
        %v906 = vmul.f32 %v500, %v641
        %v907 = vmul.f32 %v500, %v645
        %v908 = vmul.f32 %v500, %v649
        %v909 = vmul.f32 %v500, %v653
        %v910 = vadd.f32 %v345, %v654
        %v911 = vadd.f32 %v345, %v655
        %v912 = vadd.f32 %v345, %v656
        %v913 = vadd.f32 %v345, %v657
        %v914 = vadd.f32 %v345, %v658
        %v915 = vadd.f32 %v345, %v659
        %v916 = vadd.f32 %v345, %v660
        %v917 = vadd.f32 %v345, %v661
        %v918 = vadd.f32 %v345, %v662
        %v919 = vadd.f32 %v345, %v663
        %v920 = vadd.f32 %v345, %v664
        %v921 = vadd.f32 %v345, %v665
        %v922 = vadd.f32 %v345, %v666
        %v923 = vadd.f32 %v345, %v667
        %v924 = vadd.f32 %v345, %v668
        %v925 = vadd.f32 %v345, %v669
        %v926 = vadd.f32 %v350, %v670
        %v927 = vadd.f32 %v350, %v671
        %v928 = vadd.f32 %v350, %v672
        %v929 = vadd.f32 %v350, %v673
        %v930 = vadd.f32 %v350, %v674
        %v931 = vadd.f32 %v350, %v675
        %v932 = vadd.f32 %v350, %v676
        %v933 = vadd.f32 %v350, %v677
        %v934 = vadd.f32 %v350, %v678
        %v935 = vadd.f32 %v350, %v679
        %v936 = vadd.f32 %v350, %v680
        %v937 = vadd.f32 %v350, %v681
        %v938 = vadd.f32 %v350, %v682
        %v939 = vadd.f32 %v350, %v683
        %v940 = vadd.f32 %v350, %v684
        %v941 = vadd.f32 %v350, %v685
        %v942 = vadd.f32 %v355, %v686
        %v943 = vadd.f32 %v355, %v687
        %v944 = vadd.f32 %v355, %v688
        %v945 = vadd.f32 %v355, %v689
        %v946 = vadd.f32 %v355, %v690
        %v947 = vadd.f32 %v355, %v691
        %v948 = vadd.f32 %v355, %v692
        %v949 = vadd.f32 %v355, %v693
        %v950 = vadd.f32 %v355, %v694
        %v951 = vadd.f32 %v355, %v695
        %v952 = vadd.f32 %v355, %v696
        %v953 = vadd.f32 %v355, %v697
        %v954 = vadd.f32 %v355, %v698
        %v955 = vadd.f32 %v355, %v699
        %v956 = vadd.f32 %v355, %v700
        %v957 = vadd.f32 %v355, %v701
        %v958 = vadd.f32 %v360, %v702
        %v959 = vadd.f32 %v360, %v703
        %v960 = vadd.f32 %v360, %v704
        %v961 = vadd.f32 %v360, %v705
        %v962 = vadd.f32 %v360, %v706
        %v963 = vadd.f32 %v360, %v707
        %v964 = vadd.f32 %v360, %v708
        %v965 = vadd.f32 %v360, %v709
        %v966 = vadd.f32 %v360, %v710
        %v967 = vadd.f32 %v360, %v711
        %v968 = vadd.f32 %v360, %v712
        %v969 = vadd.f32 %v360, %v713
        %v970 = vadd.f32 %v360, %v714
        %v971 = vadd.f32 %v360, %v715
        %v972 = vadd.f32 %v360, %v716
        %v973 = vadd.f32 %v360, %v717
        %v974 = vadd.f32 %v365, %v718
        %v975 = vadd.f32 %v365, %v719
        %v976 = vadd.f32 %v365, %v720
        %v977 = vadd.f32 %v365, %v721
        %v978 = vadd.f32 %v365, %v722
        %v979 = vadd.f32 %v365, %v723
        %v980 = vadd.f32 %v365, %v724
        %v981 = vadd.f32 %v365, %v725
        %v982 = vadd.f32 %v365, %v726
        %v983 = vadd.f32 %v365, %v727
        %v984 = vadd.f32 %v365, %v728
        %v985 = vadd.f32 %v365, %v729
        %v986 = vadd.f32 %v365, %v730
        %v987 = vadd.f32 %v365, %v731
        %v988 = vadd.f32 %v365, %v732
        %v989 = vadd.f32 %v365, %v733
        %v990 = vadd.f32 %v370, %v734
        %v991 = vadd.f32 %v370, %v735
        %v992 = vadd.f32 %v370, %v736
        %v993 = vadd.f32 %v370, %v737
        %v994 = vadd.f32 %v370, %v738
        %v995 = vadd.f32 %v370, %v739
        %v996 = vadd.f32 %v370, %v740
        %v997 = vadd.f32 %v370, %v741
        %v998 = vadd.f32 %v370, %v742
        %v999 = vadd.f32 %v370, %v743
        %v1000 = vadd.f32 %v370, %v744
        %v1001 = vadd.f32 %v370, %v745
        %v1002 = vadd.f32 %v370, %v746
        %v1003 = vadd.f32 %v370, %v747
        %v1004 = vadd.f32 %v370, %v748
        %v1005 = vadd.f32 %v370, %v749
        %v1006 = vadd.f32 %v375, %v750
        %v1007 = vadd.f32 %v375, %v751
        %v1008 = vadd.f32 %v375, %v752
        %v1009 = vadd.f32 %v375, %v753
        %v1010 = vadd.f32 %v375, %v754
        %v1011 = vadd.f32 %v375, %v755
        %v1012 = vadd.f32 %v375, %v756
        %v1013 = vadd.f32 %v375, %v757
        %v1014 = vadd.f32 %v375, %v758
        %v1015 = vadd.f32 %v375, %v759
        %v1016 = vadd.f32 %v375, %v760
        %v1017 = vadd.f32 %v375, %v761
        %v1018 = vadd.f32 %v375, %v762
        %v1019 = vadd.f32 %v375, %v763
        %v1020 = vadd.f32 %v375, %v764
        %v1021 = vadd.f32 %v375, %v765
        %v1022 = vadd.f32 %v380, %v766
        %v1023 = vadd.f32 %v380, %v767
        %v1024 = vadd.f32 %v380, %v768
        %v1025 = vadd.f32 %v380, %v769
        %v1026 = vadd.f32 %v380, %v770
        %v1027 = vadd.f32 %v380, %v771
        %v1028 = vadd.f32 %v380, %v772
        %v1029 = vadd.f32 %v380, %v773
        %v1030 = vadd.f32 %v380, %v774
        %v1031 = vadd.f32 %v380, %v775
        %v1032 = vadd.f32 %v380, %v776
        %v1033 = vadd.f32 %v380, %v777
        %v1034 = vadd.f32 %v380, %v778
        %v1035 = vadd.f32 %v380, %v779
        %v1036 = vadd.f32 %v380, %v780
        %v1037 = vadd.f32 %v380, %v781
        %v1038 = vadd.f32 %v385, %v782
        %v1039 = vadd.f32 %v385, %v783
        %v1040 = vadd.f32 %v385, %v784
        %v1041 = vadd.f32 %v385, %v785
        %v1042 = vadd.f32 %v385, %v786
        %v1043 = vadd.f32 %v385, %v787
        %v1044 = vadd.f32 %v385, %v788
        %v1045 = vadd.f32 %v385, %v789
        %v1046 = vadd.f32 %v385, %v790
        %v1047 = vadd.f32 %v385, %v791
        %v1048 = vadd.f32 %v385, %v792
        %v1049 = vadd.f32 %v385, %v793
        %v1050 = vadd.f32 %v385, %v794
        %v1051 = vadd.f32 %v385, %v795
        %v1052 = vadd.f32 %v385, %v796
        %v1053 = vadd.f32 %v385, %v797
        %v1054 = vadd.f32 %v390, %v798
        %v1055 = vadd.f32 %v390, %v799
        %v1056 = vadd.f32 %v390, %v800
        %v1057 = vadd.f32 %v390, %v801
        %v1058 = vadd.f32 %v390, %v802
        %v1059 = vadd.f32 %v390, %v803
        %v1060 = vadd.f32 %v390, %v804
        %v1061 = vadd.f32 %v390, %v805
        %v1062 = vadd.f32 %v390, %v806
        %v1063 = vadd.f32 %v390, %v807
        %v1064 = vadd.f32 %v390, %v808
        %v1065 = vadd.f32 %v390, %v809
        %v1066 = vadd.f32 %v390, %v810
        %v1067 = vadd.f32 %v390, %v811
        %v1068 = vadd.f32 %v390, %v812
        %v1069 = vadd.f32 %v390, %v813
        %v1070 = vadd.f32 %v395, %v814
        %v1071 = vadd.f32 %v395, %v815
        %v1072 = vadd.f32 %v395, %v816
        %v1073 = vadd.f32 %v395, %v817
        %v1074 = vadd.f32 %v395, %v818
        %v1075 = vadd.f32 %v395, %v819
        %v1076 = vadd.f32 %v395, %v820
        %v1077 = vadd.f32 %v395, %v821
        %v1078 = vadd.f32 %v395, %v822
        %v1079 = vadd.f32 %v395, %v823
        %v1080 = vadd.f32 %v395, %v824
        %v1081 = vadd.f32 %v395, %v825
        %v1082 = vadd.f32 %v395, %v826
        %v1083 = vadd.f32 %v395, %v827
        %v1084 = vadd.f32 %v395, %v828
        %v1085 = vadd.f32 %v395, %v829
        %v1086 = vadd.f32 %v400, %v830
        %v1087 = vadd.f32 %v400, %v831
        %v1088 = vadd.f32 %v400, %v832
        %v1089 = vadd.f32 %v400, %v833
        %v1090 = vadd.f32 %v400, %v834
        %v1091 = vadd.f32 %v400, %v835
        %v1092 = vadd.f32 %v400, %v836
        %v1093 = vadd.f32 %v400, %v837
        %v1094 = vadd.f32 %v400, %v838
        %v1095 = vadd.f32 %v400, %v839
        %v1096 = vadd.f32 %v400, %v840
        %v1097 = vadd.f32 %v400, %v841
        %v1098 = vadd.f32 %v400, %v842
        %v1099 = vadd.f32 %v400, %v843
        %v1100 = vadd.f32 %v400, %v844
        %v1101 = vadd.f32 %v400, %v845
        %v1102 = vadd.f32 %v405, %v846
        %v1103 = vadd.f32 %v405, %v847
        %v1104 = vadd.f32 %v405, %v848
        %v1105 = vadd.f32 %v405, %v849
        %v1106 = vadd.f32 %v405, %v850
        %v1107 = vadd.f32 %v405, %v851
        %v1108 = vadd.f32 %v405, %v852
        %v1109 = vadd.f32 %v405, %v853
        %v1110 = vadd.f32 %v405, %v854
        %v1111 = vadd.f32 %v405, %v855
        %v1112 = vadd.f32 %v405, %v856
        %v1113 = vadd.f32 %v405, %v857
        %v1114 = vadd.f32 %v405, %v858
        %v1115 = vadd.f32 %v405, %v859
        %v1116 = vadd.f32 %v405, %v860
        %v1117 = vadd.f32 %v405, %v861
        %v1118 = vadd.f32 %v410, %v862
        %v1119 = vadd.f32 %v410, %v863
        %v1120 = vadd.f32 %v410, %v864
        %v1121 = vadd.f32 %v410, %v865
        %v1122 = vadd.f32 %v410, %v866
        %v1123 = vadd.f32 %v410, %v867
        %v1124 = vadd.f32 %v410, %v868
        %v1125 = vadd.f32 %v410, %v869
        %v1126 = vadd.f32 %v410, %v870
        %v1127 = vadd.f32 %v410, %v871
        %v1128 = vadd.f32 %v410, %v872
        %v1129 = vadd.f32 %v410, %v873
        %v1130 = vadd.f32 %v410, %v874
        %v1131 = vadd.f32 %v410, %v875
        %v1132 = vadd.f32 %v410, %v876
        %v1133 = vadd.f32 %v410, %v877
        %v1134 = vadd.f32 %v415, %v878
        %v1135 = vadd.f32 %v415, %v879
        %v1136 = vadd.f32 %v415, %v880
        %v1137 = vadd.f32 %v415, %v881
        %v1138 = vadd.f32 %v415, %v882
        %v1139 = vadd.f32 %v415, %v883
        %v1140 = vadd.f32 %v415, %v884
        %v1141 = vadd.f32 %v415, %v885
        %v1142 = vadd.f32 %v415, %v886
        %v1143 = vadd.f32 %v415, %v887
        %v1144 = vadd.f32 %v415, %v888
        %v1145 = vadd.f32 %v415, %v889
        %v1146 = vadd.f32 %v415, %v890
        %v1147 = vadd.f32 %v415, %v891
        %v1148 = vadd.f32 %v415, %v892
        %v1149 = vadd.f32 %v415, %v893
        %v1150 = vadd.f32 %v420, %v894
        %v1151 = vadd.f32 %v420, %v895
        %v1152 = vadd.f32 %v420, %v896
        %v1153 = vadd.f32 %v420, %v897
        %v1154 = vadd.f32 %v420, %v898
        %v1155 = vadd.f32 %v420, %v899
        %v1156 = vadd.f32 %v420, %v900
        %v1157 = vadd.f32 %v420, %v901
        %v1158 = vadd.f32 %v420, %v902
        %v1159 = vadd.f32 %v420, %v903
        %v1160 = vadd.f32 %v420, %v904
        %v1161 = vadd.f32 %v420, %v905
        %v1162 = vadd.f32 %v420, %v906
        %v1163 = vadd.f32 %v420, %v907
        %v1164 = vadd.f32 %v420, %v908
        %v1165 = vadd.f32 %v420, %v909
        %1166 = vset.pattern.permute.xlu0 1
        %1167 = vperm.xlu0 %1166, %v310
        %v1168 = vpop.permute.xlu0 %1167
        %1170 = vset.pattern.permute.xlu0 1
        %1171 = vperm.xlu0 %1170, %v311
        %v1172 = vpop.permute.xlu0 %1171
        %1174 = vset.pattern.permute.xlu0 1
        %1175 = vperm.xlu0 %1174, %v312
        %v1176 = vpop.permute.xlu0 %1175
        %1178 = vset.pattern.permute.xlu0 1
        %1179 = vperm.xlu0 %1178, %v313
        %v1180 = vpop.permute.xlu0 %1179
        %1182 = vset.pattern.permute.xlu0 1
        %1183 = vperm.xlu0 %1182, %v314
        %v1184 = vpop.permute.xlu0 %1183
        %1186 = vset.pattern.permute.xlu0 1
        %1187 = vperm.xlu0 %1186, %v315
        %v1188 = vpop.permute.xlu0 %1187
        %1190 = vset.pattern.permute.xlu0 1
        %1191 = vperm.xlu0 %1190, %v316
        %v1192 = vpop.permute.xlu0 %1191
        %1194 = vset.pattern.permute.xlu0 1
        %1195 = vperm.xlu0 %1194, %v317
        %v1196 = vpop.permute.xlu0 %1195
        %1198 = vset.pattern.permute.xlu0 1
        %1199 = vperm.xlu0 %1198, %v318
        %v1200 = vpop.permute.xlu0 %1199
        %1202 = vset.pattern.permute.xlu0 1
        %1203 = vperm.xlu0 %1202, %v319
        %v1204 = vpop.permute.xlu0 %1203
        %1206 = vset.pattern.permute.xlu0 1
        %1207 = vperm.xlu0 %1206, %v320
        %v1208 = vpop.permute.xlu0 %1207
        %1210 = vset.pattern.permute.xlu0 1
        %1211 = vperm.xlu0 %1210, %v321
        %v1212 = vpop.permute.xlu0 %1211
        %1214 = vset.pattern.permute.xlu0 1
        %1215 = vperm.xlu0 %1214, %v322
        %v1216 = vpop.permute.xlu0 %1215
        %1218 = vset.pattern.permute.xlu0 1
        %1219 = vperm.xlu0 %1218, %v323
        %v1220 = vpop.permute.xlu0 %1219
        %1222 = vset.pattern.permute.xlu0 1
        %1223 = vperm.xlu0 %1222, %v324
        %v1224 = vpop.permute.xlu0 %1223
        %1226 = vset.pattern.permute.xlu0 1
        %1227 = vperm.xlu0 %1226, %v325
        %v1228 = vpop.permute.xlu0 %1227
        %v1230 = vlaneseq
        %v1231 = vshrl.u32 %v1230, 7
        %v1232 = vsub.s32 1, %v1231
        %v1233 = vrot.slane %v302, %v1232
        %v1234 = vlaneseq
        %v1235 = vshrl.u32 %v1234, 7
        %v1236 = vsub.s32 5, %v1235
        %v1237 = vrot.slane %v302, %v1236
        %v1238 = vlaneseq
        %v1239 = vshrl.u32 %v1238, 7
        %v1240 = vsub.s32 1, %v1239
        %v1241 = vrot.slane %v303, %v1240
        %v1242 = vlaneseq
        %v1243 = vshrl.u32 %v1242, 7
        %v1244 = vsub.s32 5, %v1243
        %v1245 = vrot.slane %v303, %v1244
        %v1246 = vlaneseq
        %v1247 = vshrl.u32 %v1246, 7
        %v1248 = vsub.s32 1, %v1247
        %v1249 = vrot.slane %v304, %v1248
        %v1250 = vlaneseq
        %v1251 = vshrl.u32 %v1250, 7
        %v1252 = vsub.s32 5, %v1251
        %v1253 = vrot.slane %v304, %v1252
        %v1254 = vlaneseq
        %v1255 = vshrl.u32 %v1254, 7
        %v1256 = vsub.s32 1, %v1255
        %v1257 = vrot.slane %v305, %v1256
        %v1258 = vlaneseq
        %v1259 = vshrl.u32 %v1258, 7
        %v1260 = vsub.s32 5, %v1259
        %v1261 = vrot.slane %v305, %v1260
        %v1262 = vlaneseq
        %v1263 = vshrl.u32 %v1262, 7
        %v1264 = vsub.s32 1, %v1263
        %v1265 = vrot.slane %v306, %v1264
        %v1266 = vlaneseq
        %v1267 = vshrl.u32 %v1266, 7
        %v1268 = vsub.s32 5, %v1267
        %v1269 = vrot.slane %v306, %v1268
        %v1270 = vlaneseq
        %v1271 = vshrl.u32 %v1270, 7
        %v1272 = vsub.s32 1, %v1271
        %v1273 = vrot.slane %v307, %v1272
        %v1274 = vlaneseq
        %v1275 = vshrl.u32 %v1274, 7
        %v1276 = vsub.s32 5, %v1275
        %v1277 = vrot.slane %v307, %v1276
        %v1278 = vlaneseq
        %v1279 = vshrl.u32 %v1278, 7
        %v1280 = vsub.s32 1, %v1279
        %v1281 = vrot.slane %v308, %v1280
        %v1282 = vlaneseq
        %v1283 = vshrl.u32 %v1282, 7
        %v1284 = vsub.s32 5, %v1283
        %v1285 = vrot.slane %v308, %v1284
        %v1286 = vlaneseq
        %v1287 = vshrl.u32 %v1286, 7
        %v1288 = vsub.s32 1, %v1287
        %v1289 = vrot.slane %v309, %v1288
        %v1290 = vlaneseq
        %v1291 = vshrl.u32 %v1290, 7
        %v1292 = vsub.s32 5, %v1291
        %v1293 = vrot.slane %v309, %v1292
        %v1310 = vlaneseq
        %v1311 = vshrl.u32 %v1310, 7
        %v1312 = vsub.s32 1, %v1311
        %v1313 = vrot.slane %v1233, %v1312
        %v1314 = vlaneseq
        %v1315 = vshrl.u32 %v1314, 7
        %v1316 = vsub.s32 1, %v1315
        %v1317 = vrot.slane %v1237, %v1316
        %v1318 = vlaneseq
        %v1319 = vshrl.u32 %v1318, 7
        %v1320 = vsub.s32 1, %v1319
        %v1321 = vrot.slane %v1241, %v1320
        %v1322 = vlaneseq
        %v1323 = vshrl.u32 %v1322, 7
        %v1324 = vsub.s32 1, %v1323
        %v1325 = vrot.slane %v1245, %v1324
        %v1326 = vlaneseq
        %v1327 = vshrl.u32 %v1326, 7
        %v1328 = vsub.s32 1, %v1327
        %v1329 = vrot.slane %v1249, %v1328
        %v1330 = vlaneseq
        %v1331 = vshrl.u32 %v1330, 7
        %v1332 = vsub.s32 1, %v1331
        %v1333 = vrot.slane %v1253, %v1332
        %v1334 = vlaneseq
        %v1335 = vshrl.u32 %v1334, 7
        %v1336 = vsub.s32 1, %v1335
        %v1337 = vrot.slane %v1257, %v1336
        %v1338 = vlaneseq
        %v1339 = vshrl.u32 %v1338, 7
        %v1340 = vsub.s32 1, %v1339
        %v1341 = vrot.slane %v1261, %v1340
        %v1342 = vlaneseq
        %v1343 = vshrl.u32 %v1342, 7
        %v1344 = vsub.s32 1, %v1343
        %v1345 = vrot.slane %v1265, %v1344
        %v1346 = vlaneseq
        %v1347 = vshrl.u32 %v1346, 7
        %v1348 = vsub.s32 1, %v1347
        %v1349 = vrot.slane %v1269, %v1348
        %v1350 = vlaneseq
        %v1351 = vshrl.u32 %v1350, 7
        %v1352 = vsub.s32 1, %v1351
        %v1353 = vrot.slane %v1273, %v1352
        %v1354 = vlaneseq
        %v1355 = vshrl.u32 %v1354, 7
        %v1356 = vsub.s32 1, %v1355
        %v1357 = vrot.slane %v1277, %v1356
        %v1358 = vlaneseq
        %v1359 = vshrl.u32 %v1358, 7
        %v1360 = vsub.s32 1, %v1359
        %v1361 = vrot.slane %v1281, %v1360
        %v1362 = vlaneseq
        %v1363 = vshrl.u32 %v1362, 7
        %v1364 = vsub.s32 1, %v1363
        %v1365 = vrot.slane %v1285, %v1364
        %v1366 = vlaneseq
        %v1367 = vshrl.u32 %v1366, 7
        %v1368 = vsub.s32 1, %v1367
        %v1369 = vrot.slane %v1289, %v1368
        %v1370 = vlaneseq
        %v1371 = vshrl.u32 %v1370, 7
        %v1372 = vsub.s32 1, %v1371
        %v1373 = vrot.slane %v1293, %v1372
        %v1374 = vmul.f32 %v1168, %v1313
        %v1375 = vmul.f32 %v1168, %v1317
        %v1376 = vmul.f32 %v1168, %v1321
        %v1377 = vmul.f32 %v1168, %v1325
        %v1378 = vmul.f32 %v1168, %v1329
        %v1379 = vmul.f32 %v1168, %v1333
        %v1380 = vmul.f32 %v1168, %v1337
        %v1381 = vmul.f32 %v1168, %v1341
        %v1382 = vmul.f32 %v1168, %v1345
        %v1383 = vmul.f32 %v1168, %v1349
        %v1384 = vmul.f32 %v1168, %v1353
        %v1385 = vmul.f32 %v1168, %v1357
        %v1386 = vmul.f32 %v1168, %v1361
        %v1387 = vmul.f32 %v1168, %v1365
        %v1388 = vmul.f32 %v1168, %v1369
        %v1389 = vmul.f32 %v1168, %v1373
        %v1390 = vmul.f32 %v1172, %v1313
        %v1391 = vmul.f32 %v1172, %v1317
        %v1392 = vmul.f32 %v1172, %v1321
        %v1393 = vmul.f32 %v1172, %v1325
        %v1394 = vmul.f32 %v1172, %v1329
        %v1395 = vmul.f32 %v1172, %v1333
        %v1396 = vmul.f32 %v1172, %v1337
        %v1397 = vmul.f32 %v1172, %v1341
        %v1398 = vmul.f32 %v1172, %v1345
        %v1399 = vmul.f32 %v1172, %v1349
        %v1400 = vmul.f32 %v1172, %v1353
        %v1401 = vmul.f32 %v1172, %v1357
        %v1402 = vmul.f32 %v1172, %v1361
        %v1403 = vmul.f32 %v1172, %v1365
        %v1404 = vmul.f32 %v1172, %v1369
        %v1405 = vmul.f32 %v1172, %v1373
        %v1406 = vmul.f32 %v1176, %v1313
        %v1407 = vmul.f32 %v1176, %v1317
        %v1408 = vmul.f32 %v1176, %v1321
        %v1409 = vmul.f32 %v1176, %v1325
        %v1410 = vmul.f32 %v1176, %v1329
        %v1411 = vmul.f32 %v1176, %v1333
        %v1412 = vmul.f32 %v1176, %v1337
        %v1413 = vmul.f32 %v1176, %v1341
        %v1414 = vmul.f32 %v1176, %v1345
        %v1415 = vmul.f32 %v1176, %v1349
        %v1416 = vmul.f32 %v1176, %v1353
        %v1417 = vmul.f32 %v1176, %v1357
        %v1418 = vmul.f32 %v1176, %v1361
        %v1419 = vmul.f32 %v1176, %v1365
        %v1420 = vmul.f32 %v1176, %v1369
        %v1421 = vmul.f32 %v1176, %v1373
        %v1422 = vmul.f32 %v1180, %v1313
        %v1423 = vmul.f32 %v1180, %v1317
        %v1424 = vmul.f32 %v1180, %v1321
        %v1425 = vmul.f32 %v1180, %v1325
        %v1426 = vmul.f32 %v1180, %v1329
        %v1427 = vmul.f32 %v1180, %v1333
        %v1428 = vmul.f32 %v1180, %v1337
        %v1429 = vmul.f32 %v1180, %v1341
        %v1430 = vmul.f32 %v1180, %v1345
        %v1431 = vmul.f32 %v1180, %v1349
        %v1432 = vmul.f32 %v1180, %v1353
        %v1433 = vmul.f32 %v1180, %v1357
        %v1434 = vmul.f32 %v1180, %v1361
        %v1435 = vmul.f32 %v1180, %v1365
        %v1436 = vmul.f32 %v1180, %v1369
        %v1437 = vmul.f32 %v1180, %v1373
        %v1438 = vmul.f32 %v1184, %v1313
        %v1439 = vmul.f32 %v1184, %v1317
        %v1440 = vmul.f32 %v1184, %v1321
        %v1441 = vmul.f32 %v1184, %v1325
        %v1442 = vmul.f32 %v1184, %v1329
        %v1443 = vmul.f32 %v1184, %v1333
        %v1444 = vmul.f32 %v1184, %v1337
        %v1445 = vmul.f32 %v1184, %v1341
        %v1446 = vmul.f32 %v1184, %v1345
        %v1447 = vmul.f32 %v1184, %v1349
        %v1448 = vmul.f32 %v1184, %v1353
        %v1449 = vmul.f32 %v1184, %v1357
        %v1450 = vmul.f32 %v1184, %v1361
        %v1451 = vmul.f32 %v1184, %v1365
        %v1452 = vmul.f32 %v1184, %v1369
        %v1453 = vmul.f32 %v1184, %v1373
        %v1454 = vmul.f32 %v1188, %v1313
        %v1455 = vmul.f32 %v1188, %v1317
        %v1456 = vmul.f32 %v1188, %v1321
        %v1457 = vmul.f32 %v1188, %v1325
        %v1458 = vmul.f32 %v1188, %v1329
        %v1459 = vmul.f32 %v1188, %v1333
        %v1460 = vmul.f32 %v1188, %v1337
        %v1461 = vmul.f32 %v1188, %v1341
        %v1462 = vmul.f32 %v1188, %v1345
        %v1463 = vmul.f32 %v1188, %v1349
        %v1464 = vmul.f32 %v1188, %v1353
        %v1465 = vmul.f32 %v1188, %v1357
        %v1466 = vmul.f32 %v1188, %v1361
        %v1467 = vmul.f32 %v1188, %v1365
        %v1468 = vmul.f32 %v1188, %v1369
        %v1469 = vmul.f32 %v1188, %v1373
        %v1470 = vmul.f32 %v1192, %v1313
        %v1471 = vmul.f32 %v1192, %v1317
        %v1472 = vmul.f32 %v1192, %v1321
        %v1473 = vmul.f32 %v1192, %v1325
        %v1474 = vmul.f32 %v1192, %v1329
        %v1475 = vmul.f32 %v1192, %v1333
        %v1476 = vmul.f32 %v1192, %v1337
        %v1477 = vmul.f32 %v1192, %v1341
        %v1478 = vmul.f32 %v1192, %v1345
        %v1479 = vmul.f32 %v1192, %v1349
        %v1480 = vmul.f32 %v1192, %v1353
        %v1481 = vmul.f32 %v1192, %v1357
        %v1482 = vmul.f32 %v1192, %v1361
        %v1483 = vmul.f32 %v1192, %v1365
        %v1484 = vmul.f32 %v1192, %v1369
        %v1485 = vmul.f32 %v1192, %v1373
        %v1486 = vmul.f32 %v1196, %v1313
        %v1487 = vmul.f32 %v1196, %v1317
        %v1488 = vmul.f32 %v1196, %v1321
        %v1489 = vmul.f32 %v1196, %v1325
        %v1490 = vmul.f32 %v1196, %v1329
        %v1491 = vmul.f32 %v1196, %v1333
        %v1492 = vmul.f32 %v1196, %v1337
        %v1493 = vmul.f32 %v1196, %v1341
        %v1494 = vmul.f32 %v1196, %v1345
        %v1495 = vmul.f32 %v1196, %v1349
        %v1496 = vmul.f32 %v1196, %v1353
        %v1497 = vmul.f32 %v1196, %v1357
        %v1498 = vmul.f32 %v1196, %v1361
        %v1499 = vmul.f32 %v1196, %v1365
        %v1500 = vmul.f32 %v1196, %v1369
        %v1501 = vmul.f32 %v1196, %v1373
        %v1502 = vmul.f32 %v1200, %v1313
        %v1503 = vmul.f32 %v1200, %v1317
        %v1504 = vmul.f32 %v1200, %v1321
        %v1505 = vmul.f32 %v1200, %v1325
        %v1506 = vmul.f32 %v1200, %v1329
        %v1507 = vmul.f32 %v1200, %v1333
        %v1508 = vmul.f32 %v1200, %v1337
        %v1509 = vmul.f32 %v1200, %v1341
        %v1510 = vmul.f32 %v1200, %v1345
        %v1511 = vmul.f32 %v1200, %v1349
        %v1512 = vmul.f32 %v1200, %v1353
        %v1513 = vmul.f32 %v1200, %v1357
        %v1514 = vmul.f32 %v1200, %v1361
        %v1515 = vmul.f32 %v1200, %v1365
        %v1516 = vmul.f32 %v1200, %v1369
        %v1517 = vmul.f32 %v1200, %v1373
        %v1518 = vmul.f32 %v1204, %v1313
        %v1519 = vmul.f32 %v1204, %v1317
        %v1520 = vmul.f32 %v1204, %v1321
        %v1521 = vmul.f32 %v1204, %v1325
        %v1522 = vmul.f32 %v1204, %v1329
        %v1523 = vmul.f32 %v1204, %v1333
        %v1524 = vmul.f32 %v1204, %v1337
        %v1525 = vmul.f32 %v1204, %v1341
        %v1526 = vmul.f32 %v1204, %v1345
        %v1527 = vmul.f32 %v1204, %v1349
        %v1528 = vmul.f32 %v1204, %v1353
        %v1529 = vmul.f32 %v1204, %v1357
        %v1530 = vmul.f32 %v1204, %v1361
        %v1531 = vmul.f32 %v1204, %v1365
        %v1532 = vmul.f32 %v1204, %v1369
        %v1533 = vmul.f32 %v1204, %v1373
        %v1534 = vmul.f32 %v1208, %v1313
        %v1535 = vmul.f32 %v1208, %v1317
        %v1536 = vmul.f32 %v1208, %v1321
        %v1537 = vmul.f32 %v1208, %v1325
        %v1538 = vmul.f32 %v1208, %v1329
        %v1539 = vmul.f32 %v1208, %v1333
        %v1540 = vmul.f32 %v1208, %v1337
        %v1541 = vmul.f32 %v1208, %v1341
        %v1542 = vmul.f32 %v1208, %v1345
        %v1543 = vmul.f32 %v1208, %v1349
        %v1544 = vmul.f32 %v1208, %v1353
        %v1545 = vmul.f32 %v1208, %v1357
        %v1546 = vmul.f32 %v1208, %v1361
        %v1547 = vmul.f32 %v1208, %v1365
        %v1548 = vmul.f32 %v1208, %v1369
        %v1549 = vmul.f32 %v1208, %v1373
        %v1550 = vmul.f32 %v1212, %v1313
        %v1551 = vmul.f32 %v1212, %v1317
        %v1552 = vmul.f32 %v1212, %v1321
        %v1553 = vmul.f32 %v1212, %v1325
        %v1554 = vmul.f32 %v1212, %v1329
        %v1555 = vmul.f32 %v1212, %v1333
        %v1556 = vmul.f32 %v1212, %v1337
        %v1557 = vmul.f32 %v1212, %v1341
        %v1558 = vmul.f32 %v1212, %v1345
        %v1559 = vmul.f32 %v1212, %v1349
        %v1560 = vmul.f32 %v1212, %v1353
        %v1561 = vmul.f32 %v1212, %v1357
        %v1562 = vmul.f32 %v1212, %v1361
        %v1563 = vmul.f32 %v1212, %v1365
        %v1564 = vmul.f32 %v1212, %v1369
        %v1565 = vmul.f32 %v1212, %v1373
        %v1566 = vmul.f32 %v1216, %v1313
        %v1567 = vmul.f32 %v1216, %v1317
        %v1568 = vmul.f32 %v1216, %v1321
        %v1569 = vmul.f32 %v1216, %v1325
        %v1570 = vmul.f32 %v1216, %v1329
        %v1571 = vmul.f32 %v1216, %v1333
        %v1572 = vmul.f32 %v1216, %v1337
        %v1573 = vmul.f32 %v1216, %v1341
        %v1574 = vmul.f32 %v1216, %v1345
        %v1575 = vmul.f32 %v1216, %v1349
        %v1576 = vmul.f32 %v1216, %v1353
        %v1577 = vmul.f32 %v1216, %v1357
        %v1578 = vmul.f32 %v1216, %v1361
        %v1579 = vmul.f32 %v1216, %v1365
        %v1580 = vmul.f32 %v1216, %v1369
        %v1581 = vmul.f32 %v1216, %v1373
        %v1582 = vmul.f32 %v1220, %v1313
        %v1583 = vmul.f32 %v1220, %v1317
        %v1584 = vmul.f32 %v1220, %v1321
        %v1585 = vmul.f32 %v1220, %v1325
        %v1586 = vmul.f32 %v1220, %v1329
        %v1587 = vmul.f32 %v1220, %v1333
        %v1588 = vmul.f32 %v1220, %v1337
        %v1589 = vmul.f32 %v1220, %v1341
        %v1590 = vmul.f32 %v1220, %v1345
        %v1591 = vmul.f32 %v1220, %v1349
        %v1592 = vmul.f32 %v1220, %v1353
        %v1593 = vmul.f32 %v1220, %v1357
        %v1594 = vmul.f32 %v1220, %v1361
        %v1595 = vmul.f32 %v1220, %v1365
        %v1596 = vmul.f32 %v1220, %v1369
        %v1597 = vmul.f32 %v1220, %v1373
        %v1598 = vmul.f32 %v1224, %v1313
        %v1599 = vmul.f32 %v1224, %v1317
        %v1600 = vmul.f32 %v1224, %v1321
        %v1601 = vmul.f32 %v1224, %v1325
        %v1602 = vmul.f32 %v1224, %v1329
        %v1603 = vmul.f32 %v1224, %v1333
        %v1604 = vmul.f32 %v1224, %v1337
        %v1605 = vmul.f32 %v1224, %v1341
        %v1606 = vmul.f32 %v1224, %v1345
        %v1607 = vmul.f32 %v1224, %v1349
        %v1608 = vmul.f32 %v1224, %v1353
        %v1609 = vmul.f32 %v1224, %v1357
        %v1610 = vmul.f32 %v1224, %v1361
        %v1611 = vmul.f32 %v1224, %v1365
        %v1612 = vmul.f32 %v1224, %v1369
        %v1613 = vmul.f32 %v1224, %v1373
        %v1614 = vmul.f32 %v1228, %v1313
        %v1615 = vmul.f32 %v1228, %v1317
        %v1616 = vmul.f32 %v1228, %v1321
        %v1617 = vmul.f32 %v1228, %v1325
        %v1618 = vmul.f32 %v1228, %v1329
        %v1619 = vmul.f32 %v1228, %v1333
        %v1620 = vmul.f32 %v1228, %v1337
        %v1621 = vmul.f32 %v1228, %v1341
        %v1622 = vmul.f32 %v1228, %v1345
        %v1623 = vmul.f32 %v1228, %v1349
        %v1624 = vmul.f32 %v1228, %v1353
        %v1625 = vmul.f32 %v1228, %v1357
        %v1626 = vmul.f32 %v1228, %v1361
        %v1627 = vmul.f32 %v1228, %v1365
        %v1628 = vmul.f32 %v1228, %v1369
        %v1629 = vmul.f32 %v1228, %v1373
        %v1630 = vadd.f32 %v910, %v1374
        %v1631 = vadd.f32 %v911, %v1375
        %v1632 = vadd.f32 %v912, %v1376
        %v1633 = vadd.f32 %v913, %v1377
        %v1634 = vadd.f32 %v914, %v1378
        %v1635 = vadd.f32 %v915, %v1379
        %v1636 = vadd.f32 %v916, %v1380
        %v1637 = vadd.f32 %v917, %v1381
        %v1638 = vadd.f32 %v918, %v1382
        %v1639 = vadd.f32 %v919, %v1383
        %v1640 = vadd.f32 %v920, %v1384
        %v1641 = vadd.f32 %v921, %v1385
        %v1642 = vadd.f32 %v922, %v1386
        %v1643 = vadd.f32 %v923, %v1387
        %v1644 = vadd.f32 %v924, %v1388
        %v1645 = vadd.f32 %v925, %v1389
        %v1646 = vadd.f32 %v926, %v1390
        %v1647 = vadd.f32 %v927, %v1391
        %v1648 = vadd.f32 %v928, %v1392
        %v1649 = vadd.f32 %v929, %v1393
        %v1650 = vadd.f32 %v930, %v1394
        %v1651 = vadd.f32 %v931, %v1395
        %v1652 = vadd.f32 %v932, %v1396
        %v1653 = vadd.f32 %v933, %v1397
        %v1654 = vadd.f32 %v934, %v1398
        %v1655 = vadd.f32 %v935, %v1399
        %v1656 = vadd.f32 %v936, %v1400
        %v1657 = vadd.f32 %v937, %v1401
        %v1658 = vadd.f32 %v938, %v1402
        %v1659 = vadd.f32 %v939, %v1403
        %v1660 = vadd.f32 %v940, %v1404
        %v1661 = vadd.f32 %v941, %v1405
        %v1662 = vadd.f32 %v942, %v1406
        %v1663 = vadd.f32 %v943, %v1407
        %v1664 = vadd.f32 %v944, %v1408
        %v1665 = vadd.f32 %v945, %v1409
        %v1666 = vadd.f32 %v946, %v1410
        %v1667 = vadd.f32 %v947, %v1411
        %v1668 = vadd.f32 %v948, %v1412
        %v1669 = vadd.f32 %v949, %v1413
        %v1670 = vadd.f32 %v950, %v1414
        %v1671 = vadd.f32 %v951, %v1415
        %v1672 = vadd.f32 %v952, %v1416
        %v1673 = vadd.f32 %v953, %v1417
        %v1674 = vadd.f32 %v954, %v1418
        %v1675 = vadd.f32 %v955, %v1419
        %v1676 = vadd.f32 %v956, %v1420
        %v1677 = vadd.f32 %v957, %v1421
        %v1678 = vadd.f32 %v958, %v1422
        %v1679 = vadd.f32 %v959, %v1423
        %v1680 = vadd.f32 %v960, %v1424
        %v1681 = vadd.f32 %v961, %v1425
        %v1682 = vadd.f32 %v962, %v1426
        %v1683 = vadd.f32 %v963, %v1427
        %v1684 = vadd.f32 %v964, %v1428
        %v1685 = vadd.f32 %v965, %v1429
        %v1686 = vadd.f32 %v966, %v1430
        %v1687 = vadd.f32 %v967, %v1431
        %v1688 = vadd.f32 %v968, %v1432
        %v1689 = vadd.f32 %v969, %v1433
        %v1690 = vadd.f32 %v970, %v1434
        %v1691 = vadd.f32 %v971, %v1435
        %v1692 = vadd.f32 %v972, %v1436
        %v1693 = vadd.f32 %v973, %v1437
        %v1694 = vadd.f32 %v974, %v1438
        %v1695 = vadd.f32 %v975, %v1439
        %v1696 = vadd.f32 %v976, %v1440
        %v1697 = vadd.f32 %v977, %v1441
        %v1698 = vadd.f32 %v978, %v1442
        %v1699 = vadd.f32 %v979, %v1443
        %v1700 = vadd.f32 %v980, %v1444
        %v1701 = vadd.f32 %v981, %v1445
        %v1702 = vadd.f32 %v982, %v1446
        %v1703 = vadd.f32 %v983, %v1447
        %v1704 = vadd.f32 %v984, %v1448
        %v1705 = vadd.f32 %v985, %v1449
        %v1706 = vadd.f32 %v986, %v1450
        %v1707 = vadd.f32 %v987, %v1451
        %v1708 = vadd.f32 %v988, %v1452
        %v1709 = vadd.f32 %v989, %v1453
        %v1710 = vadd.f32 %v990, %v1454
        %v1711 = vadd.f32 %v991, %v1455
        %v1712 = vadd.f32 %v992, %v1456
        %v1713 = vadd.f32 %v993, %v1457
        %v1714 = vadd.f32 %v994, %v1458
        %v1715 = vadd.f32 %v995, %v1459
        %v1716 = vadd.f32 %v996, %v1460
        %v1717 = vadd.f32 %v997, %v1461
        %v1718 = vadd.f32 %v998, %v1462
        %v1719 = vadd.f32 %v999, %v1463
        %v1720 = vadd.f32 %v1000, %v1464
        %v1721 = vadd.f32 %v1001, %v1465
        %v1722 = vadd.f32 %v1002, %v1466
        %v1723 = vadd.f32 %v1003, %v1467
        %v1724 = vadd.f32 %v1004, %v1468
        %v1725 = vadd.f32 %v1005, %v1469
        %v1726 = vadd.f32 %v1006, %v1470
        %v1727 = vadd.f32 %v1007, %v1471
        %v1728 = vadd.f32 %v1008, %v1472
        %v1729 = vadd.f32 %v1009, %v1473
        %v1730 = vadd.f32 %v1010, %v1474
        %v1731 = vadd.f32 %v1011, %v1475
        %v1732 = vadd.f32 %v1012, %v1476
        %v1733 = vadd.f32 %v1013, %v1477
        %v1734 = vadd.f32 %v1014, %v1478
        %v1735 = vadd.f32 %v1015, %v1479
        %v1736 = vadd.f32 %v1016, %v1480
        %v1737 = vadd.f32 %v1017, %v1481
        %v1738 = vadd.f32 %v1018, %v1482
        %v1739 = vadd.f32 %v1019, %v1483
        %v1740 = vadd.f32 %v1020, %v1484
        %v1741 = vadd.f32 %v1021, %v1485
        %v1742 = vadd.f32 %v1022, %v1486
        %v1743 = vadd.f32 %v1023, %v1487
        %v1744 = vadd.f32 %v1024, %v1488
        %v1745 = vadd.f32 %v1025, %v1489
        %v1746 = vadd.f32 %v1026, %v1490
        %v1747 = vadd.f32 %v1027, %v1491
        %v1748 = vadd.f32 %v1028, %v1492
        %v1749 = vadd.f32 %v1029, %v1493
        %v1750 = vadd.f32 %v1030, %v1494
        %v1751 = vadd.f32 %v1031, %v1495
        %v1752 = vadd.f32 %v1032, %v1496
        %v1753 = vadd.f32 %v1033, %v1497
        %v1754 = vadd.f32 %v1034, %v1498
        %v1755 = vadd.f32 %v1035, %v1499
        %v1756 = vadd.f32 %v1036, %v1500
        %v1757 = vadd.f32 %v1037, %v1501
        %v1758 = vadd.f32 %v1038, %v1502
        %v1759 = vadd.f32 %v1039, %v1503
        %v1760 = vadd.f32 %v1040, %v1504
        %v1761 = vadd.f32 %v1041, %v1505
        %v1762 = vadd.f32 %v1042, %v1506
        %v1763 = vadd.f32 %v1043, %v1507
        %v1764 = vadd.f32 %v1044, %v1508
        %v1765 = vadd.f32 %v1045, %v1509
        %v1766 = vadd.f32 %v1046, %v1510
        %v1767 = vadd.f32 %v1047, %v1511
        %v1768 = vadd.f32 %v1048, %v1512
        %v1769 = vadd.f32 %v1049, %v1513
        %v1770 = vadd.f32 %v1050, %v1514
        %v1771 = vadd.f32 %v1051, %v1515
        %v1772 = vadd.f32 %v1052, %v1516
        %v1773 = vadd.f32 %v1053, %v1517
        %v1774 = vadd.f32 %v1054, %v1518
        %v1775 = vadd.f32 %v1055, %v1519
        %v1776 = vadd.f32 %v1056, %v1520
        %v1777 = vadd.f32 %v1057, %v1521
        %v1778 = vadd.f32 %v1058, %v1522
        %v1779 = vadd.f32 %v1059, %v1523
        %v1780 = vadd.f32 %v1060, %v1524
        %v1781 = vadd.f32 %v1061, %v1525
        %v1782 = vadd.f32 %v1062, %v1526
        %v1783 = vadd.f32 %v1063, %v1527
        %v1784 = vadd.f32 %v1064, %v1528
        %v1785 = vadd.f32 %v1065, %v1529
        %v1786 = vadd.f32 %v1066, %v1530
        %v1787 = vadd.f32 %v1067, %v1531
        %v1788 = vadd.f32 %v1068, %v1532
        %v1789 = vadd.f32 %v1069, %v1533
        %v1790 = vadd.f32 %v1070, %v1534
        %v1791 = vadd.f32 %v1071, %v1535
        %v1792 = vadd.f32 %v1072, %v1536
        %v1793 = vadd.f32 %v1073, %v1537
        %v1794 = vadd.f32 %v1074, %v1538
        %v1795 = vadd.f32 %v1075, %v1539
        %v1796 = vadd.f32 %v1076, %v1540
        %v1797 = vadd.f32 %v1077, %v1541
        %v1798 = vadd.f32 %v1078, %v1542
        %v1799 = vadd.f32 %v1079, %v1543
        %v1800 = vadd.f32 %v1080, %v1544
        %v1801 = vadd.f32 %v1081, %v1545
        %v1802 = vadd.f32 %v1082, %v1546
        %v1803 = vadd.f32 %v1083, %v1547
        %v1804 = vadd.f32 %v1084, %v1548
        %v1805 = vadd.f32 %v1085, %v1549
        %v1806 = vadd.f32 %v1086, %v1550
        %v1807 = vadd.f32 %v1087, %v1551
        %v1808 = vadd.f32 %v1088, %v1552
        %v1809 = vadd.f32 %v1089, %v1553
        %v1810 = vadd.f32 %v1090, %v1554
        %v1811 = vadd.f32 %v1091, %v1555
        %v1812 = vadd.f32 %v1092, %v1556
        %v1813 = vadd.f32 %v1093, %v1557
        %v1814 = vadd.f32 %v1094, %v1558
        %v1815 = vadd.f32 %v1095, %v1559
        %v1816 = vadd.f32 %v1096, %v1560
        %v1817 = vadd.f32 %v1097, %v1561
        %v1818 = vadd.f32 %v1098, %v1562
        %v1819 = vadd.f32 %v1099, %v1563
        %v1820 = vadd.f32 %v1100, %v1564
        %v1821 = vadd.f32 %v1101, %v1565
        %v1822 = vadd.f32 %v1102, %v1566
        %v1823 = vadd.f32 %v1103, %v1567
        %v1824 = vadd.f32 %v1104, %v1568
        %v1825 = vadd.f32 %v1105, %v1569
        %v1826 = vadd.f32 %v1106, %v1570
        %v1827 = vadd.f32 %v1107, %v1571
        %v1828 = vadd.f32 %v1108, %v1572
        %v1829 = vadd.f32 %v1109, %v1573
        %v1830 = vadd.f32 %v1110, %v1574
        %v1831 = vadd.f32 %v1111, %v1575
        %v1832 = vadd.f32 %v1112, %v1576
        %v1833 = vadd.f32 %v1113, %v1577
        %v1834 = vadd.f32 %v1114, %v1578
        %v1835 = vadd.f32 %v1115, %v1579
        %v1836 = vadd.f32 %v1116, %v1580
        %v1837 = vadd.f32 %v1117, %v1581
        %v1838 = vadd.f32 %v1118, %v1582
        %v1839 = vadd.f32 %v1119, %v1583
        %v1840 = vadd.f32 %v1120, %v1584
        %v1841 = vadd.f32 %v1121, %v1585
        %v1842 = vadd.f32 %v1122, %v1586
        %v1843 = vadd.f32 %v1123, %v1587
        %v1844 = vadd.f32 %v1124, %v1588
        %v1845 = vadd.f32 %v1125, %v1589
        %v1846 = vadd.f32 %v1126, %v1590
        %v1847 = vadd.f32 %v1127, %v1591
        %v1848 = vadd.f32 %v1128, %v1592
        %v1849 = vadd.f32 %v1129, %v1593
        %v1850 = vadd.f32 %v1130, %v1594
        %v1851 = vadd.f32 %v1131, %v1595
        %v1852 = vadd.f32 %v1132, %v1596
        %v1853 = vadd.f32 %v1133, %v1597
        %v1854 = vadd.f32 %v1134, %v1598
        %v1855 = vadd.f32 %v1135, %v1599
        %v1856 = vadd.f32 %v1136, %v1600
        %v1857 = vadd.f32 %v1137, %v1601
        %v1858 = vadd.f32 %v1138, %v1602
        %v1859 = vadd.f32 %v1139, %v1603
        %v1860 = vadd.f32 %v1140, %v1604
        %v1861 = vadd.f32 %v1141, %v1605
        %v1862 = vadd.f32 %v1142, %v1606
        %v1863 = vadd.f32 %v1143, %v1607
        %v1864 = vadd.f32 %v1144, %v1608
        %v1865 = vadd.f32 %v1145, %v1609
        %v1866 = vadd.f32 %v1146, %v1610
        %v1867 = vadd.f32 %v1147, %v1611
        %v1868 = vadd.f32 %v1148, %v1612
        %v1869 = vadd.f32 %v1149, %v1613
        %v1870 = vadd.f32 %v1150, %v1614
        %v1871 = vadd.f32 %v1151, %v1615
        %v1872 = vadd.f32 %v1152, %v1616
        %v1873 = vadd.f32 %v1153, %v1617
        %v1874 = vadd.f32 %v1154, %v1618
        %v1875 = vadd.f32 %v1155, %v1619
        %v1876 = vadd.f32 %v1156, %v1620
        %v1877 = vadd.f32 %v1157, %v1621
        %v1878 = vadd.f32 %v1158, %v1622
        %v1879 = vadd.f32 %v1159, %v1623
        %v1880 = vadd.f32 %v1160, %v1624
        %v1881 = vadd.f32 %v1161, %v1625
        %v1882 = vadd.f32 %v1162, %v1626
        %v1883 = vadd.f32 %v1163, %v1627
        %v1884 = vadd.f32 %v1164, %v1628
        %v1885 = vadd.f32 %v1165, %v1629
        %1886 = vset.pattern.permute.xlu0 2
        %1887 = vperm.xlu0 %1886, %v310
        %v1888 = vpop.permute.xlu0 %1887
        %1890 = vset.pattern.permute.xlu0 2
        %1891 = vperm.xlu0 %1890, %v311
        %v1892 = vpop.permute.xlu0 %1891
        %1894 = vset.pattern.permute.xlu0 2
        %1895 = vperm.xlu0 %1894, %v312
        %v1896 = vpop.permute.xlu0 %1895
        %1898 = vset.pattern.permute.xlu0 2
        %1899 = vperm.xlu0 %1898, %v313
        %v1900 = vpop.permute.xlu0 %1899
        %1902 = vset.pattern.permute.xlu0 2
        %1903 = vperm.xlu0 %1902, %v314
        %v1904 = vpop.permute.xlu0 %1903
        %1906 = vset.pattern.permute.xlu0 2
        %1907 = vperm.xlu0 %1906, %v315
        %v1908 = vpop.permute.xlu0 %1907
        %1910 = vset.pattern.permute.xlu0 2
        %1911 = vperm.xlu0 %1910, %v316
        %v1912 = vpop.permute.xlu0 %1911
        %1914 = vset.pattern.permute.xlu0 2
        %1915 = vperm.xlu0 %1914, %v317
        %v1916 = vpop.permute.xlu0 %1915
        %1918 = vset.pattern.permute.xlu0 2
        %1919 = vperm.xlu0 %1918, %v318
        %v1920 = vpop.permute.xlu0 %1919
        %1922 = vset.pattern.permute.xlu0 2
        %1923 = vperm.xlu0 %1922, %v319
        %v1924 = vpop.permute.xlu0 %1923
        %1926 = vset.pattern.permute.xlu0 2
        %1927 = vperm.xlu0 %1926, %v320
        %v1928 = vpop.permute.xlu0 %1927
        %1930 = vset.pattern.permute.xlu0 2
        %1931 = vperm.xlu0 %1930, %v321
        %v1932 = vpop.permute.xlu0 %1931
        %1934 = vset.pattern.permute.xlu0 2
        %1935 = vperm.xlu0 %1934, %v322
        %v1936 = vpop.permute.xlu0 %1935
        %1938 = vset.pattern.permute.xlu0 2
        %1939 = vperm.xlu0 %1938, %v323
        %v1940 = vpop.permute.xlu0 %1939
        %1942 = vset.pattern.permute.xlu0 2
        %1943 = vperm.xlu0 %1942, %v324
        %v1944 = vpop.permute.xlu0 %1943
        %1946 = vset.pattern.permute.xlu0 2
        %1947 = vperm.xlu0 %1946, %v325
        %v1948 = vpop.permute.xlu0 %1947
        %v1950 = vlaneseq
        %v1951 = vshrl.u32 %v1950, 7
        %v1952 = vsub.s32 2, %v1951
        %v1953 = vrot.slane %v302, %v1952
        %v1954 = vlaneseq
        %v1955 = vshrl.u32 %v1954, 7
        %v1956 = vsub.s32 6, %v1955
        %v1957 = vrot.slane %v302, %v1956
        %v1958 = vlaneseq
        %v1959 = vshrl.u32 %v1958, 7
        %v1960 = vsub.s32 2, %v1959
        %v1961 = vrot.slane %v303, %v1960
        %v1962 = vlaneseq
        %v1963 = vshrl.u32 %v1962, 7
        %v1964 = vsub.s32 6, %v1963
        %v1965 = vrot.slane %v303, %v1964
        %v1966 = vlaneseq
        %v1967 = vshrl.u32 %v1966, 7
        %v1968 = vsub.s32 2, %v1967
        %v1969 = vrot.slane %v304, %v1968
        %v1970 = vlaneseq
        %v1971 = vshrl.u32 %v1970, 7
        %v1972 = vsub.s32 6, %v1971
        %v1973 = vrot.slane %v304, %v1972
        %v1974 = vlaneseq
        %v1975 = vshrl.u32 %v1974, 7
        %v1976 = vsub.s32 2, %v1975
        %v1977 = vrot.slane %v305, %v1976
        %v1978 = vlaneseq
        %v1979 = vshrl.u32 %v1978, 7
        %v1980 = vsub.s32 6, %v1979
        %v1981 = vrot.slane %v305, %v1980
        %v1982 = vlaneseq
        %v1983 = vshrl.u32 %v1982, 7
        %v1984 = vsub.s32 2, %v1983
        %v1985 = vrot.slane %v306, %v1984
        %v1986 = vlaneseq
        %v1987 = vshrl.u32 %v1986, 7
        %v1988 = vsub.s32 6, %v1987
        %v1989 = vrot.slane %v306, %v1988
        %v1990 = vlaneseq
        %v1991 = vshrl.u32 %v1990, 7
        %v1992 = vsub.s32 2, %v1991
        %v1993 = vrot.slane %v307, %v1992
        %v1994 = vlaneseq
        %v1995 = vshrl.u32 %v1994, 7
        %v1996 = vsub.s32 6, %v1995
        %v1997 = vrot.slane %v307, %v1996
        %v1998 = vlaneseq
        %v1999 = vshrl.u32 %v1998, 7
        %v2000 = vsub.s32 2, %v1999
        %v2001 = vrot.slane %v308, %v2000
        %v2002 = vlaneseq
        %v2003 = vshrl.u32 %v2002, 7
        %v2004 = vsub.s32 6, %v2003
        %v2005 = vrot.slane %v308, %v2004
        %v2006 = vlaneseq
        %v2007 = vshrl.u32 %v2006, 7
        %v2008 = vsub.s32 2, %v2007
        %v2009 = vrot.slane %v309, %v2008
        %v2010 = vlaneseq
        %v2011 = vshrl.u32 %v2010, 7
        %v2012 = vsub.s32 6, %v2011
        %v2013 = vrot.slane %v309, %v2012
        %v2030 = vlaneseq
        %v2031 = vshrl.u32 %v2030, 7
        %v2032 = vsub.s32 2, %v2031
        %v2033 = vrot.slane %v1953, %v2032
        %v2034 = vlaneseq
        %v2035 = vshrl.u32 %v2034, 7
        %v2036 = vsub.s32 2, %v2035
        %v2037 = vrot.slane %v1957, %v2036
        %v2038 = vlaneseq
        %v2039 = vshrl.u32 %v2038, 7
        %v2040 = vsub.s32 2, %v2039
        %v2041 = vrot.slane %v1961, %v2040
        %v2042 = vlaneseq
        %v2043 = vshrl.u32 %v2042, 7
        %v2044 = vsub.s32 2, %v2043
        %v2045 = vrot.slane %v1965, %v2044
        %v2046 = vlaneseq
        %v2047 = vshrl.u32 %v2046, 7
        %v2048 = vsub.s32 2, %v2047
        %v2049 = vrot.slane %v1969, %v2048
        %v2050 = vlaneseq
        %v2051 = vshrl.u32 %v2050, 7
        %v2052 = vsub.s32 2, %v2051
        %v2053 = vrot.slane %v1973, %v2052
        %v2054 = vlaneseq
        %v2055 = vshrl.u32 %v2054, 7
        %v2056 = vsub.s32 2, %v2055
        %v2057 = vrot.slane %v1977, %v2056
        %v2058 = vlaneseq
        %v2059 = vshrl.u32 %v2058, 7
        %v2060 = vsub.s32 2, %v2059
        %v2061 = vrot.slane %v1981, %v2060
        %v2062 = vlaneseq
        %v2063 = vshrl.u32 %v2062, 7
        %v2064 = vsub.s32 2, %v2063
        %v2065 = vrot.slane %v1985, %v2064
        %v2066 = vlaneseq
        %v2067 = vshrl.u32 %v2066, 7
        %v2068 = vsub.s32 2, %v2067
        %v2069 = vrot.slane %v1989, %v2068
        %v2070 = vlaneseq
        %v2071 = vshrl.u32 %v2070, 7
        %v2072 = vsub.s32 2, %v2071
        %v2073 = vrot.slane %v1993, %v2072
        %v2074 = vlaneseq
        %v2075 = vshrl.u32 %v2074, 7
        %v2076 = vsub.s32 2, %v2075
        %v2077 = vrot.slane %v1997, %v2076
        %v2078 = vlaneseq
        %v2079 = vshrl.u32 %v2078, 7
        %v2080 = vsub.s32 2, %v2079
        %v2081 = vrot.slane %v2001, %v2080
        %v2082 = vlaneseq
        %v2083 = vshrl.u32 %v2082, 7
        %v2084 = vsub.s32 2, %v2083
        %v2085 = vrot.slane %v2005, %v2084
        %v2086 = vlaneseq
        %v2087 = vshrl.u32 %v2086, 7
        %v2088 = vsub.s32 2, %v2087
        %v2089 = vrot.slane %v2009, %v2088
        %v2090 = vlaneseq
        %v2091 = vshrl.u32 %v2090, 7
        %v2092 = vsub.s32 2, %v2091
        %v2093 = vrot.slane %v2013, %v2092
        %v2094 = vmul.f32 %v1888, %v2033
        %v2095 = vmul.f32 %v1888, %v2037
        %v2096 = vmul.f32 %v1888, %v2041
        %v2097 = vmul.f32 %v1888, %v2045
        %v2098 = vmul.f32 %v1888, %v2049
        %v2099 = vmul.f32 %v1888, %v2053
        %v2100 = vmul.f32 %v1888, %v2057
        %v2101 = vmul.f32 %v1888, %v2061
        %v2102 = vmul.f32 %v1888, %v2065
        %v2103 = vmul.f32 %v1888, %v2069
        %v2104 = vmul.f32 %v1888, %v2073
        %v2105 = vmul.f32 %v1888, %v2077
        %v2106 = vmul.f32 %v1888, %v2081
        %v2107 = vmul.f32 %v1888, %v2085
        %v2108 = vmul.f32 %v1888, %v2089
        %v2109 = vmul.f32 %v1888, %v2093
        %v2110 = vmul.f32 %v1892, %v2033
        %v2111 = vmul.f32 %v1892, %v2037
        %v2112 = vmul.f32 %v1892, %v2041
        %v2113 = vmul.f32 %v1892, %v2045
        %v2114 = vmul.f32 %v1892, %v2049
        %v2115 = vmul.f32 %v1892, %v2053
        %v2116 = vmul.f32 %v1892, %v2057
        %v2117 = vmul.f32 %v1892, %v2061
        %v2118 = vmul.f32 %v1892, %v2065
        %v2119 = vmul.f32 %v1892, %v2069
        %v2120 = vmul.f32 %v1892, %v2073
        %v2121 = vmul.f32 %v1892, %v2077
        %v2122 = vmul.f32 %v1892, %v2081
        %v2123 = vmul.f32 %v1892, %v2085
        %v2124 = vmul.f32 %v1892, %v2089
        %v2125 = vmul.f32 %v1892, %v2093
        %v2126 = vmul.f32 %v1896, %v2033
        %v2127 = vmul.f32 %v1896, %v2037
        %v2128 = vmul.f32 %v1896, %v2041
        %v2129 = vmul.f32 %v1896, %v2045
        %v2130 = vmul.f32 %v1896, %v2049
        %v2131 = vmul.f32 %v1896, %v2053
        %v2132 = vmul.f32 %v1896, %v2057
        %v2133 = vmul.f32 %v1896, %v2061
        %v2134 = vmul.f32 %v1896, %v2065
        %v2135 = vmul.f32 %v1896, %v2069
        %v2136 = vmul.f32 %v1896, %v2073
        %v2137 = vmul.f32 %v1896, %v2077
        %v2138 = vmul.f32 %v1896, %v2081
        %v2139 = vmul.f32 %v1896, %v2085
        %v2140 = vmul.f32 %v1896, %v2089
        %v2141 = vmul.f32 %v1896, %v2093
        %v2142 = vmul.f32 %v1900, %v2033
        %v2143 = vmul.f32 %v1900, %v2037
        %v2144 = vmul.f32 %v1900, %v2041
        %v2145 = vmul.f32 %v1900, %v2045
        %v2146 = vmul.f32 %v1900, %v2049
        %v2147 = vmul.f32 %v1900, %v2053
        %v2148 = vmul.f32 %v1900, %v2057
        %v2149 = vmul.f32 %v1900, %v2061
        %v2150 = vmul.f32 %v1900, %v2065
        %v2151 = vmul.f32 %v1900, %v2069
        %v2152 = vmul.f32 %v1900, %v2073
        %v2153 = vmul.f32 %v1900, %v2077
        %v2154 = vmul.f32 %v1900, %v2081
        %v2155 = vmul.f32 %v1900, %v2085
        %v2156 = vmul.f32 %v1900, %v2089
        %v2157 = vmul.f32 %v1900, %v2093
        %v2158 = vmul.f32 %v1904, %v2033
        %v2159 = vmul.f32 %v1904, %v2037
        %v2160 = vmul.f32 %v1904, %v2041
        %v2161 = vmul.f32 %v1904, %v2045
        %v2162 = vmul.f32 %v1904, %v2049
        %v2163 = vmul.f32 %v1904, %v2053
        %v2164 = vmul.f32 %v1904, %v2057
        %v2165 = vmul.f32 %v1904, %v2061
        %v2166 = vmul.f32 %v1904, %v2065
        %v2167 = vmul.f32 %v1904, %v2069
        %v2168 = vmul.f32 %v1904, %v2073
        %v2169 = vmul.f32 %v1904, %v2077
        %v2170 = vmul.f32 %v1904, %v2081
        %v2171 = vmul.f32 %v1904, %v2085
        %v2172 = vmul.f32 %v1904, %v2089
        %v2173 = vmul.f32 %v1904, %v2093
        %v2174 = vmul.f32 %v1908, %v2033
        %v2175 = vmul.f32 %v1908, %v2037
        %v2176 = vmul.f32 %v1908, %v2041
        %v2177 = vmul.f32 %v1908, %v2045
        %v2178 = vmul.f32 %v1908, %v2049
        %v2179 = vmul.f32 %v1908, %v2053
        %v2180 = vmul.f32 %v1908, %v2057
        %v2181 = vmul.f32 %v1908, %v2061
        %v2182 = vmul.f32 %v1908, %v2065
        %v2183 = vmul.f32 %v1908, %v2069
        %v2184 = vmul.f32 %v1908, %v2073
        %v2185 = vmul.f32 %v1908, %v2077
        %v2186 = vmul.f32 %v1908, %v2081
        %v2187 = vmul.f32 %v1908, %v2085
        %v2188 = vmul.f32 %v1908, %v2089
        %v2189 = vmul.f32 %v1908, %v2093
        %v2190 = vmul.f32 %v1912, %v2033
        %v2191 = vmul.f32 %v1912, %v2037
        %v2192 = vmul.f32 %v1912, %v2041
        %v2193 = vmul.f32 %v1912, %v2045
        %v2194 = vmul.f32 %v1912, %v2049
        %v2195 = vmul.f32 %v1912, %v2053
        %v2196 = vmul.f32 %v1912, %v2057
        %v2197 = vmul.f32 %v1912, %v2061
        %v2198 = vmul.f32 %v1912, %v2065
        %v2199 = vmul.f32 %v1912, %v2069
        %v2200 = vmul.f32 %v1912, %v2073
        %v2201 = vmul.f32 %v1912, %v2077
        %v2202 = vmul.f32 %v1912, %v2081
        %v2203 = vmul.f32 %v1912, %v2085
        %v2204 = vmul.f32 %v1912, %v2089
        %v2205 = vmul.f32 %v1912, %v2093
        %v2206 = vmul.f32 %v1916, %v2033
        %v2207 = vmul.f32 %v1916, %v2037
        %v2208 = vmul.f32 %v1916, %v2041
        %v2209 = vmul.f32 %v1916, %v2045
        %v2210 = vmul.f32 %v1916, %v2049
        %v2211 = vmul.f32 %v1916, %v2053
        %v2212 = vmul.f32 %v1916, %v2057
        %v2213 = vmul.f32 %v1916, %v2061
        %v2214 = vmul.f32 %v1916, %v2065
        %v2215 = vmul.f32 %v1916, %v2069
        %v2216 = vmul.f32 %v1916, %v2073
        %v2217 = vmul.f32 %v1916, %v2077
        %v2218 = vmul.f32 %v1916, %v2081
        %v2219 = vmul.f32 %v1916, %v2085
        %v2220 = vmul.f32 %v1916, %v2089
        %v2221 = vmul.f32 %v1916, %v2093
        %v2222 = vmul.f32 %v1920, %v2033
        %v2223 = vmul.f32 %v1920, %v2037
        %v2224 = vmul.f32 %v1920, %v2041
        %v2225 = vmul.f32 %v1920, %v2045
        %v2226 = vmul.f32 %v1920, %v2049
        %v2227 = vmul.f32 %v1920, %v2053
        %v2228 = vmul.f32 %v1920, %v2057
        %v2229 = vmul.f32 %v1920, %v2061
        %v2230 = vmul.f32 %v1920, %v2065
        %v2231 = vmul.f32 %v1920, %v2069
        %v2232 = vmul.f32 %v1920, %v2073
        %v2233 = vmul.f32 %v1920, %v2077
        %v2234 = vmul.f32 %v1920, %v2081
        %v2235 = vmul.f32 %v1920, %v2085
        %v2236 = vmul.f32 %v1920, %v2089
        %v2237 = vmul.f32 %v1920, %v2093
        %v2238 = vmul.f32 %v1924, %v2033
        %v2239 = vmul.f32 %v1924, %v2037
        %v2240 = vmul.f32 %v1924, %v2041
        %v2241 = vmul.f32 %v1924, %v2045
        %v2242 = vmul.f32 %v1924, %v2049
        %v2243 = vmul.f32 %v1924, %v2053
        %v2244 = vmul.f32 %v1924, %v2057
        %v2245 = vmul.f32 %v1924, %v2061
        %v2246 = vmul.f32 %v1924, %v2065
        %v2247 = vmul.f32 %v1924, %v2069
        %v2248 = vmul.f32 %v1924, %v2073
        %v2249 = vmul.f32 %v1924, %v2077
        %v2250 = vmul.f32 %v1924, %v2081
        %v2251 = vmul.f32 %v1924, %v2085
        %v2252 = vmul.f32 %v1924, %v2089
        %v2253 = vmul.f32 %v1924, %v2093
        %v2254 = vmul.f32 %v1928, %v2033
        %v2255 = vmul.f32 %v1928, %v2037
        %v2256 = vmul.f32 %v1928, %v2041
        %v2257 = vmul.f32 %v1928, %v2045
        %v2258 = vmul.f32 %v1928, %v2049
        %v2259 = vmul.f32 %v1928, %v2053
        %v2260 = vmul.f32 %v1928, %v2057
        %v2261 = vmul.f32 %v1928, %v2061
        %v2262 = vmul.f32 %v1928, %v2065
        %v2263 = vmul.f32 %v1928, %v2069
        %v2264 = vmul.f32 %v1928, %v2073
        %v2265 = vmul.f32 %v1928, %v2077
        %v2266 = vmul.f32 %v1928, %v2081
        %v2267 = vmul.f32 %v1928, %v2085
        %v2268 = vmul.f32 %v1928, %v2089
        %v2269 = vmul.f32 %v1928, %v2093
        %v2270 = vmul.f32 %v1932, %v2033
        %v2271 = vmul.f32 %v1932, %v2037
        %v2272 = vmul.f32 %v1932, %v2041
        %v2273 = vmul.f32 %v1932, %v2045
        %v2274 = vmul.f32 %v1932, %v2049
        %v2275 = vmul.f32 %v1932, %v2053
        %v2276 = vmul.f32 %v1932, %v2057
        %v2277 = vmul.f32 %v1932, %v2061
        %v2278 = vmul.f32 %v1932, %v2065
        %v2279 = vmul.f32 %v1932, %v2069
        %v2280 = vmul.f32 %v1932, %v2073
        %v2281 = vmul.f32 %v1932, %v2077
        %v2282 = vmul.f32 %v1932, %v2081
        %v2283 = vmul.f32 %v1932, %v2085
        %v2284 = vmul.f32 %v1932, %v2089
        %v2285 = vmul.f32 %v1932, %v2093
        %v2286 = vmul.f32 %v1936, %v2033
        %v2287 = vmul.f32 %v1936, %v2037
        %v2288 = vmul.f32 %v1936, %v2041
        %v2289 = vmul.f32 %v1936, %v2045
        %v2290 = vmul.f32 %v1936, %v2049
        %v2291 = vmul.f32 %v1936, %v2053
        %v2292 = vmul.f32 %v1936, %v2057
        %v2293 = vmul.f32 %v1936, %v2061
        %v2294 = vmul.f32 %v1936, %v2065
        %v2295 = vmul.f32 %v1936, %v2069
        %v2296 = vmul.f32 %v1936, %v2073
        %v2297 = vmul.f32 %v1936, %v2077
        %v2298 = vmul.f32 %v1936, %v2081
        %v2299 = vmul.f32 %v1936, %v2085
        %v2300 = vmul.f32 %v1936, %v2089
        %v2301 = vmul.f32 %v1936, %v2093
        %v2302 = vmul.f32 %v1940, %v2033
        %v2303 = vmul.f32 %v1940, %v2037
        %v2304 = vmul.f32 %v1940, %v2041
        %v2305 = vmul.f32 %v1940, %v2045
        %v2306 = vmul.f32 %v1940, %v2049
        %v2307 = vmul.f32 %v1940, %v2053
        %v2308 = vmul.f32 %v1940, %v2057
        %v2309 = vmul.f32 %v1940, %v2061
        %v2310 = vmul.f32 %v1940, %v2065
        %v2311 = vmul.f32 %v1940, %v2069
        %v2312 = vmul.f32 %v1940, %v2073
        %v2313 = vmul.f32 %v1940, %v2077
        %v2314 = vmul.f32 %v1940, %v2081
        %v2315 = vmul.f32 %v1940, %v2085
        %v2316 = vmul.f32 %v1940, %v2089
        %v2317 = vmul.f32 %v1940, %v2093
        %v2318 = vmul.f32 %v1944, %v2033
        %v2319 = vmul.f32 %v1944, %v2037
        %v2320 = vmul.f32 %v1944, %v2041
        %v2321 = vmul.f32 %v1944, %v2045
        %v2322 = vmul.f32 %v1944, %v2049
        %v2323 = vmul.f32 %v1944, %v2053
        %v2324 = vmul.f32 %v1944, %v2057
        %v2325 = vmul.f32 %v1944, %v2061
        %v2326 = vmul.f32 %v1944, %v2065
        %v2327 = vmul.f32 %v1944, %v2069
        %v2328 = vmul.f32 %v1944, %v2073
        %v2329 = vmul.f32 %v1944, %v2077
        %v2330 = vmul.f32 %v1944, %v2081
        %v2331 = vmul.f32 %v1944, %v2085
        %v2332 = vmul.f32 %v1944, %v2089
        %v2333 = vmul.f32 %v1944, %v2093
        %v2334 = vmul.f32 %v1948, %v2033
        %v2335 = vmul.f32 %v1948, %v2037
        %v2336 = vmul.f32 %v1948, %v2041
        %v2337 = vmul.f32 %v1948, %v2045
        %v2338 = vmul.f32 %v1948, %v2049
        %v2339 = vmul.f32 %v1948, %v2053
        %v2340 = vmul.f32 %v1948, %v2057
        %v2341 = vmul.f32 %v1948, %v2061
        %v2342 = vmul.f32 %v1948, %v2065
        %v2343 = vmul.f32 %v1948, %v2069
        %v2344 = vmul.f32 %v1948, %v2073
        %v2345 = vmul.f32 %v1948, %v2077
        %v2346 = vmul.f32 %v1948, %v2081
        %v2347 = vmul.f32 %v1948, %v2085
        %v2348 = vmul.f32 %v1948, %v2089
        %v2349 = vmul.f32 %v1948, %v2093
        %v2350 = vadd.f32 %v1630, %v2094
        %v2351 = vadd.f32 %v1631, %v2095
        %v2352 = vadd.f32 %v1632, %v2096
        %v2353 = vadd.f32 %v1633, %v2097
        %v2354 = vadd.f32 %v1634, %v2098
        %v2355 = vadd.f32 %v1635, %v2099
        %v2356 = vadd.f32 %v1636, %v2100
        %v2357 = vadd.f32 %v1637, %v2101
        %v2358 = vadd.f32 %v1638, %v2102
        %v2359 = vadd.f32 %v1639, %v2103
        %v2360 = vadd.f32 %v1640, %v2104
        %v2361 = vadd.f32 %v1641, %v2105
        %v2362 = vadd.f32 %v1642, %v2106
        %v2363 = vadd.f32 %v1643, %v2107
        %v2364 = vadd.f32 %v1644, %v2108
        %v2365 = vadd.f32 %v1645, %v2109
        %v2366 = vadd.f32 %v1646, %v2110
        %v2367 = vadd.f32 %v1647, %v2111
        %v2368 = vadd.f32 %v1648, %v2112
        %v2369 = vadd.f32 %v1649, %v2113
        %v2370 = vadd.f32 %v1650, %v2114
        %v2371 = vadd.f32 %v1651, %v2115
        %v2372 = vadd.f32 %v1652, %v2116
        %v2373 = vadd.f32 %v1653, %v2117
        %v2374 = vadd.f32 %v1654, %v2118
        %v2375 = vadd.f32 %v1655, %v2119
        %v2376 = vadd.f32 %v1656, %v2120
        %v2377 = vadd.f32 %v1657, %v2121
        %v2378 = vadd.f32 %v1658, %v2122
        %v2379 = vadd.f32 %v1659, %v2123
        %v2380 = vadd.f32 %v1660, %v2124
        %v2381 = vadd.f32 %v1661, %v2125
        %v2382 = vadd.f32 %v1662, %v2126
        %v2383 = vadd.f32 %v1663, %v2127
        %v2384 = vadd.f32 %v1664, %v2128
        %v2385 = vadd.f32 %v1665, %v2129
        %v2386 = vadd.f32 %v1666, %v2130
        %v2387 = vadd.f32 %v1667, %v2131
        %v2388 = vadd.f32 %v1668, %v2132
        %v2389 = vadd.f32 %v1669, %v2133
        %v2390 = vadd.f32 %v1670, %v2134
        %v2391 = vadd.f32 %v1671, %v2135
        %v2392 = vadd.f32 %v1672, %v2136
        %v2393 = vadd.f32 %v1673, %v2137
        %v2394 = vadd.f32 %v1674, %v2138
        %v2395 = vadd.f32 %v1675, %v2139
        %v2396 = vadd.f32 %v1676, %v2140
        %v2397 = vadd.f32 %v1677, %v2141
        %v2398 = vadd.f32 %v1678, %v2142
        %v2399 = vadd.f32 %v1679, %v2143
        %v2400 = vadd.f32 %v1680, %v2144
        %v2401 = vadd.f32 %v1681, %v2145
        %v2402 = vadd.f32 %v1682, %v2146
        %v2403 = vadd.f32 %v1683, %v2147
        %v2404 = vadd.f32 %v1684, %v2148
        %v2405 = vadd.f32 %v1685, %v2149
        %v2406 = vadd.f32 %v1686, %v2150
        %v2407 = vadd.f32 %v1687, %v2151
        %v2408 = vadd.f32 %v1688, %v2152
        %v2409 = vadd.f32 %v1689, %v2153
        %v2410 = vadd.f32 %v1690, %v2154
        %v2411 = vadd.f32 %v1691, %v2155
        %v2412 = vadd.f32 %v1692, %v2156
        %v2413 = vadd.f32 %v1693, %v2157
        %v2414 = vadd.f32 %v1694, %v2158
        %v2415 = vadd.f32 %v1695, %v2159
        %v2416 = vadd.f32 %v1696, %v2160
        %v2417 = vadd.f32 %v1697, %v2161
        %v2418 = vadd.f32 %v1698, %v2162
        %v2419 = vadd.f32 %v1699, %v2163
        %v2420 = vadd.f32 %v1700, %v2164
        %v2421 = vadd.f32 %v1701, %v2165
        %v2422 = vadd.f32 %v1702, %v2166
        %v2423 = vadd.f32 %v1703, %v2167
        %v2424 = vadd.f32 %v1704, %v2168
        %v2425 = vadd.f32 %v1705, %v2169
        %v2426 = vadd.f32 %v1706, %v2170
        %v2427 = vadd.f32 %v1707, %v2171
        %v2428 = vadd.f32 %v1708, %v2172
        %v2429 = vadd.f32 %v1709, %v2173
        %v2430 = vadd.f32 %v1710, %v2174
        %v2431 = vadd.f32 %v1711, %v2175
        %v2432 = vadd.f32 %v1712, %v2176
        %v2433 = vadd.f32 %v1713, %v2177
        %v2434 = vadd.f32 %v1714, %v2178
        %v2435 = vadd.f32 %v1715, %v2179
        %v2436 = vadd.f32 %v1716, %v2180
        %v2437 = vadd.f32 %v1717, %v2181
        %v2438 = vadd.f32 %v1718, %v2182
        %v2439 = vadd.f32 %v1719, %v2183
        %v2440 = vadd.f32 %v1720, %v2184
        %v2441 = vadd.f32 %v1721, %v2185
        %v2442 = vadd.f32 %v1722, %v2186
        %v2443 = vadd.f32 %v1723, %v2187
        %v2444 = vadd.f32 %v1724, %v2188
        %v2445 = vadd.f32 %v1725, %v2189
        %v2446 = vadd.f32 %v1726, %v2190
        %v2447 = vadd.f32 %v1727, %v2191
        %v2448 = vadd.f32 %v1728, %v2192
        %v2449 = vadd.f32 %v1729, %v2193
        %v2450 = vadd.f32 %v1730, %v2194
        %v2451 = vadd.f32 %v1731, %v2195
        %v2452 = vadd.f32 %v1732, %v2196
        %v2453 = vadd.f32 %v1733, %v2197
        %v2454 = vadd.f32 %v1734, %v2198
        %v2455 = vadd.f32 %v1735, %v2199
        %v2456 = vadd.f32 %v1736, %v2200
        %v2457 = vadd.f32 %v1737, %v2201
        %v2458 = vadd.f32 %v1738, %v2202
        %v2459 = vadd.f32 %v1739, %v2203
        %v2460 = vadd.f32 %v1740, %v2204
        %v2461 = vadd.f32 %v1741, %v2205
        %v2462 = vadd.f32 %v1742, %v2206
        %v2463 = vadd.f32 %v1743, %v2207
        %v2464 = vadd.f32 %v1744, %v2208
        %v2465 = vadd.f32 %v1745, %v2209
        %v2466 = vadd.f32 %v1746, %v2210
        %v2467 = vadd.f32 %v1747, %v2211
        %v2468 = vadd.f32 %v1748, %v2212
        %v2469 = vadd.f32 %v1749, %v2213
        %v2470 = vadd.f32 %v1750, %v2214
        %v2471 = vadd.f32 %v1751, %v2215
        %v2472 = vadd.f32 %v1752, %v2216
        %v2473 = vadd.f32 %v1753, %v2217
        %v2474 = vadd.f32 %v1754, %v2218
        %v2475 = vadd.f32 %v1755, %v2219
        %v2476 = vadd.f32 %v1756, %v2220
        %v2477 = vadd.f32 %v1757, %v2221
        %v2478 = vadd.f32 %v1758, %v2222
        %v2479 = vadd.f32 %v1759, %v2223
        %v2480 = vadd.f32 %v1760, %v2224
        %v2481 = vadd.f32 %v1761, %v2225
        %v2482 = vadd.f32 %v1762, %v2226
        %v2483 = vadd.f32 %v1763, %v2227
        %v2484 = vadd.f32 %v1764, %v2228
        %v2485 = vadd.f32 %v1765, %v2229
        %v2486 = vadd.f32 %v1766, %v2230
        %v2487 = vadd.f32 %v1767, %v2231
        %v2488 = vadd.f32 %v1768, %v2232
        %v2489 = vadd.f32 %v1769, %v2233
        %v2490 = vadd.f32 %v1770, %v2234
        %v2491 = vadd.f32 %v1771, %v2235
        %v2492 = vadd.f32 %v1772, %v2236
        %v2493 = vadd.f32 %v1773, %v2237
        %v2494 = vadd.f32 %v1774, %v2238
        %v2495 = vadd.f32 %v1775, %v2239
        %v2496 = vadd.f32 %v1776, %v2240
        %v2497 = vadd.f32 %v1777, %v2241
        %v2498 = vadd.f32 %v1778, %v2242
        %v2499 = vadd.f32 %v1779, %v2243
        %v2500 = vadd.f32 %v1780, %v2244
        %v2501 = vadd.f32 %v1781, %v2245
        %v2502 = vadd.f32 %v1782, %v2246
        %v2503 = vadd.f32 %v1783, %v2247
        %v2504 = vadd.f32 %v1784, %v2248
        %v2505 = vadd.f32 %v1785, %v2249
        %v2506 = vadd.f32 %v1786, %v2250
        %v2507 = vadd.f32 %v1787, %v2251
        %v2508 = vadd.f32 %v1788, %v2252
        %v2509 = vadd.f32 %v1789, %v2253
        %v2510 = vadd.f32 %v1790, %v2254
        %v2511 = vadd.f32 %v1791, %v2255
        %v2512 = vadd.f32 %v1792, %v2256
        %v2513 = vadd.f32 %v1793, %v2257
        %v2514 = vadd.f32 %v1794, %v2258
        %v2515 = vadd.f32 %v1795, %v2259
        %v2516 = vadd.f32 %v1796, %v2260
        %v2517 = vadd.f32 %v1797, %v2261
        %v2518 = vadd.f32 %v1798, %v2262
        %v2519 = vadd.f32 %v1799, %v2263
        %v2520 = vadd.f32 %v1800, %v2264
        %v2521 = vadd.f32 %v1801, %v2265
        %v2522 = vadd.f32 %v1802, %v2266
        %v2523 = vadd.f32 %v1803, %v2267
        %v2524 = vadd.f32 %v1804, %v2268
        %v2525 = vadd.f32 %v1805, %v2269
        %v2526 = vadd.f32 %v1806, %v2270
        %v2527 = vadd.f32 %v1807, %v2271
        %v2528 = vadd.f32 %v1808, %v2272
        %v2529 = vadd.f32 %v1809, %v2273
        %v2530 = vadd.f32 %v1810, %v2274
        %v2531 = vadd.f32 %v1811, %v2275
        %v2532 = vadd.f32 %v1812, %v2276
        %v2533 = vadd.f32 %v1813, %v2277
        %v2534 = vadd.f32 %v1814, %v2278
        %v2535 = vadd.f32 %v1815, %v2279
        %v2536 = vadd.f32 %v1816, %v2280
        %v2537 = vadd.f32 %v1817, %v2281
        %v2538 = vadd.f32 %v1818, %v2282
        %v2539 = vadd.f32 %v1819, %v2283
        %v2540 = vadd.f32 %v1820, %v2284
        %v2541 = vadd.f32 %v1821, %v2285
        %v2542 = vadd.f32 %v1822, %v2286
        %v2543 = vadd.f32 %v1823, %v2287
        %v2544 = vadd.f32 %v1824, %v2288
        %v2545 = vadd.f32 %v1825, %v2289
        %v2546 = vadd.f32 %v1826, %v2290
        %v2547 = vadd.f32 %v1827, %v2291
        %v2548 = vadd.f32 %v1828, %v2292
        %v2549 = vadd.f32 %v1829, %v2293
        %v2550 = vadd.f32 %v1830, %v2294
        %v2551 = vadd.f32 %v1831, %v2295
        %v2552 = vadd.f32 %v1832, %v2296
        %v2553 = vadd.f32 %v1833, %v2297
        %v2554 = vadd.f32 %v1834, %v2298
        %v2555 = vadd.f32 %v1835, %v2299
        %v2556 = vadd.f32 %v1836, %v2300
        %v2557 = vadd.f32 %v1837, %v2301
        %v2558 = vadd.f32 %v1838, %v2302
        %v2559 = vadd.f32 %v1839, %v2303
        %v2560 = vadd.f32 %v1840, %v2304
        %v2561 = vadd.f32 %v1841, %v2305
        %v2562 = vadd.f32 %v1842, %v2306
        %v2563 = vadd.f32 %v1843, %v2307
        %v2564 = vadd.f32 %v1844, %v2308
        %v2565 = vadd.f32 %v1845, %v2309
        %v2566 = vadd.f32 %v1846, %v2310
        %v2567 = vadd.f32 %v1847, %v2311
        %v2568 = vadd.f32 %v1848, %v2312
        %v2569 = vadd.f32 %v1849, %v2313
        %v2570 = vadd.f32 %v1850, %v2314
        %v2571 = vadd.f32 %v1851, %v2315
        %v2572 = vadd.f32 %v1852, %v2316
        %v2573 = vadd.f32 %v1853, %v2317
        %v2574 = vadd.f32 %v1854, %v2318
        %v2575 = vadd.f32 %v1855, %v2319
        %v2576 = vadd.f32 %v1856, %v2320
        %v2577 = vadd.f32 %v1857, %v2321
        %v2578 = vadd.f32 %v1858, %v2322
        %v2579 = vadd.f32 %v1859, %v2323
        %v2580 = vadd.f32 %v1860, %v2324
        %v2581 = vadd.f32 %v1861, %v2325
        %v2582 = vadd.f32 %v1862, %v2326
        %v2583 = vadd.f32 %v1863, %v2327
        %v2584 = vadd.f32 %v1864, %v2328
        %v2585 = vadd.f32 %v1865, %v2329
        %v2586 = vadd.f32 %v1866, %v2330
        %v2587 = vadd.f32 %v1867, %v2331
        %v2588 = vadd.f32 %v1868, %v2332
        %v2589 = vadd.f32 %v1869, %v2333
        %v2590 = vadd.f32 %v1870, %v2334
        %v2591 = vadd.f32 %v1871, %v2335
        %v2592 = vadd.f32 %v1872, %v2336
        %v2593 = vadd.f32 %v1873, %v2337
        %v2594 = vadd.f32 %v1874, %v2338
        %v2595 = vadd.f32 %v1875, %v2339
        %v2596 = vadd.f32 %v1876, %v2340
        %v2597 = vadd.f32 %v1877, %v2341
        %v2598 = vadd.f32 %v1878, %v2342
        %v2599 = vadd.f32 %v1879, %v2343
        %v2600 = vadd.f32 %v1880, %v2344
        %v2601 = vadd.f32 %v1881, %v2345
        %v2602 = vadd.f32 %v1882, %v2346
        %v2603 = vadd.f32 %v1883, %v2347
        %v2604 = vadd.f32 %v1884, %v2348
        %v2605 = vadd.f32 %v1885, %v2349
        %2606 = vset.pattern.permute.xlu0 3
        %2607 = vperm.xlu0 %2606, %v310
        %v2608 = vpop.permute.xlu0 %2607
        %2610 = vset.pattern.permute.xlu0 3
        %2611 = vperm.xlu0 %2610, %v311
        %v2612 = vpop.permute.xlu0 %2611
        %2614 = vset.pattern.permute.xlu0 3
        %2615 = vperm.xlu0 %2614, %v312
        %v2616 = vpop.permute.xlu0 %2615
        %2618 = vset.pattern.permute.xlu0 3
        %2619 = vperm.xlu0 %2618, %v313
        %v2620 = vpop.permute.xlu0 %2619
        %2622 = vset.pattern.permute.xlu0 3
        %2623 = vperm.xlu0 %2622, %v314
        %v2624 = vpop.permute.xlu0 %2623
        %2626 = vset.pattern.permute.xlu0 3
        %2627 = vperm.xlu0 %2626, %v315
        %v2628 = vpop.permute.xlu0 %2627
        %2630 = vset.pattern.permute.xlu0 3
        %2631 = vperm.xlu0 %2630, %v316
        %v2632 = vpop.permute.xlu0 %2631
        %2634 = vset.pattern.permute.xlu0 3
        %2635 = vperm.xlu0 %2634, %v317
        %v2636 = vpop.permute.xlu0 %2635
        %2638 = vset.pattern.permute.xlu0 3
        %2639 = vperm.xlu0 %2638, %v318
        %v2640 = vpop.permute.xlu0 %2639
        %2642 = vset.pattern.permute.xlu0 3
        %2643 = vperm.xlu0 %2642, %v319
        %v2644 = vpop.permute.xlu0 %2643
        %2646 = vset.pattern.permute.xlu0 3
        %2647 = vperm.xlu0 %2646, %v320
        %v2648 = vpop.permute.xlu0 %2647
        %2650 = vset.pattern.permute.xlu0 3
        %2651 = vperm.xlu0 %2650, %v321
        %v2652 = vpop.permute.xlu0 %2651
        %2654 = vset.pattern.permute.xlu0 3
        %2655 = vperm.xlu0 %2654, %v322
        %v2656 = vpop.permute.xlu0 %2655
        %2658 = vset.pattern.permute.xlu0 3
        %2659 = vperm.xlu0 %2658, %v323
        %v2660 = vpop.permute.xlu0 %2659
        %2662 = vset.pattern.permute.xlu0 3
        %2663 = vperm.xlu0 %2662, %v324
        %v2664 = vpop.permute.xlu0 %2663
        %2666 = vset.pattern.permute.xlu0 3
        %2667 = vperm.xlu0 %2666, %v325
        %v2668 = vpop.permute.xlu0 %2667
        %v2670 = vlaneseq
        %v2671 = vshrl.u32 %v2670, 7
        %v2672 = vsub.s32 3, %v2671
        %v2673 = vrot.slane %v302, %v2672
        %v2674 = vlaneseq
        %v2675 = vshrl.u32 %v2674, 7
        %v2676 = vsub.s32 7, %v2675
        %v2677 = vrot.slane %v302, %v2676
        %v2678 = vlaneseq
        %v2679 = vshrl.u32 %v2678, 7
        %v2680 = vsub.s32 3, %v2679
        %v2681 = vrot.slane %v303, %v2680
        %v2682 = vlaneseq
        %v2683 = vshrl.u32 %v2682, 7
        %v2684 = vsub.s32 7, %v2683
        %v2685 = vrot.slane %v303, %v2684
        %v2686 = vlaneseq
        %v2687 = vshrl.u32 %v2686, 7
        %v2688 = vsub.s32 3, %v2687
        %v2689 = vrot.slane %v304, %v2688
        %v2690 = vlaneseq
        %v2691 = vshrl.u32 %v2690, 7
        %v2692 = vsub.s32 7, %v2691
        %v2693 = vrot.slane %v304, %v2692
        %v2694 = vlaneseq
        %v2695 = vshrl.u32 %v2694, 7
        %v2696 = vsub.s32 3, %v2695
        %v2697 = vrot.slane %v305, %v2696
        %v2698 = vlaneseq
        %v2699 = vshrl.u32 %v2698, 7
        %v2700 = vsub.s32 7, %v2699
        %v2701 = vrot.slane %v305, %v2700
        %v2702 = vlaneseq
        %v2703 = vshrl.u32 %v2702, 7
        %v2704 = vsub.s32 3, %v2703
        %v2705 = vrot.slane %v306, %v2704
        %v2706 = vlaneseq
        %v2707 = vshrl.u32 %v2706, 7
        %v2708 = vsub.s32 7, %v2707
        %v2709 = vrot.slane %v306, %v2708
        %v2710 = vlaneseq
        %v2711 = vshrl.u32 %v2710, 7
        %v2712 = vsub.s32 3, %v2711
        %v2713 = vrot.slane %v307, %v2712
        %v2714 = vlaneseq
        %v2715 = vshrl.u32 %v2714, 7
        %v2716 = vsub.s32 7, %v2715
        %v2717 = vrot.slane %v307, %v2716
        %v2718 = vlaneseq
        %v2719 = vshrl.u32 %v2718, 7
        %v2720 = vsub.s32 3, %v2719
        %v2721 = vrot.slane %v308, %v2720
        %v2722 = vlaneseq
        %v2723 = vshrl.u32 %v2722, 7
        %v2724 = vsub.s32 7, %v2723
        %v2725 = vrot.slane %v308, %v2724
        %v2726 = vlaneseq
        %v2727 = vshrl.u32 %v2726, 7
        %v2728 = vsub.s32 3, %v2727
        %v2729 = vrot.slane %v309, %v2728
        %v2730 = vlaneseq
        %v2731 = vshrl.u32 %v2730, 7
        %v2732 = vsub.s32 7, %v2731
        %v2733 = vrot.slane %v309, %v2732
        %v2750 = vlaneseq
        %v2751 = vshrl.u32 %v2750, 7
        %v2752 = vsub.s32 3, %v2751
        %v2753 = vrot.slane %v2673, %v2752
        %v2754 = vlaneseq
        %v2755 = vshrl.u32 %v2754, 7
        %v2756 = vsub.s32 3, %v2755
        %v2757 = vrot.slane %v2677, %v2756
        %v2758 = vlaneseq
        %v2759 = vshrl.u32 %v2758, 7
        %v2760 = vsub.s32 3, %v2759
        %v2761 = vrot.slane %v2681, %v2760
        %v2762 = vlaneseq
        %v2763 = vshrl.u32 %v2762, 7
        %v2764 = vsub.s32 3, %v2763
        %v2765 = vrot.slane %v2685, %v2764
        %v2766 = vlaneseq
        %v2767 = vshrl.u32 %v2766, 7
        %v2768 = vsub.s32 3, %v2767
        %v2769 = vrot.slane %v2689, %v2768
        %v2770 = vlaneseq
        %v2771 = vshrl.u32 %v2770, 7
        %v2772 = vsub.s32 3, %v2771
        %v2773 = vrot.slane %v2693, %v2772
        %v2774 = vlaneseq
        %v2775 = vshrl.u32 %v2774, 7
        %v2776 = vsub.s32 3, %v2775
        %v2777 = vrot.slane %v2697, %v2776
        %v2778 = vlaneseq
        %v2779 = vshrl.u32 %v2778, 7
        %v2780 = vsub.s32 3, %v2779
        %v2781 = vrot.slane %v2701, %v2780
        %v2782 = vlaneseq
        %v2783 = vshrl.u32 %v2782, 7
        %v2784 = vsub.s32 3, %v2783
        %v2785 = vrot.slane %v2705, %v2784
        %v2786 = vlaneseq
        %v2787 = vshrl.u32 %v2786, 7
        %v2788 = vsub.s32 3, %v2787
        %v2789 = vrot.slane %v2709, %v2788
        %v2790 = vlaneseq
        %v2791 = vshrl.u32 %v2790, 7
        %v2792 = vsub.s32 3, %v2791
        %v2793 = vrot.slane %v2713, %v2792
        %v2794 = vlaneseq
        %v2795 = vshrl.u32 %v2794, 7
        %v2796 = vsub.s32 3, %v2795
        %v2797 = vrot.slane %v2717, %v2796
        %v2798 = vlaneseq
        %v2799 = vshrl.u32 %v2798, 7
        %v2800 = vsub.s32 3, %v2799
        %v2801 = vrot.slane %v2721, %v2800
        %v2802 = vlaneseq
        %v2803 = vshrl.u32 %v2802, 7
        %v2804 = vsub.s32 3, %v2803
        %v2805 = vrot.slane %v2725, %v2804
        %v2806 = vlaneseq
        %v2807 = vshrl.u32 %v2806, 7
        %v2808 = vsub.s32 3, %v2807
        %v2809 = vrot.slane %v2729, %v2808
        %v2810 = vlaneseq
        %v2811 = vshrl.u32 %v2810, 7
        %v2812 = vsub.s32 3, %v2811
        %v2813 = vrot.slane %v2733, %v2812
        %v2814 = vmul.f32 %v2608, %v2753
        %v2815 = vmul.f32 %v2608, %v2757
        %v2816 = vmul.f32 %v2608, %v2761
        %v2817 = vmul.f32 %v2608, %v2765
        %v2818 = vmul.f32 %v2608, %v2769
        %v2819 = vmul.f32 %v2608, %v2773
        %v2820 = vmul.f32 %v2608, %v2777
        %v2821 = vmul.f32 %v2608, %v2781
        %v2822 = vmul.f32 %v2608, %v2785
        %v2823 = vmul.f32 %v2608, %v2789
        %v2824 = vmul.f32 %v2608, %v2793
        %v2825 = vmul.f32 %v2608, %v2797
        %v2826 = vmul.f32 %v2608, %v2801
        %v2827 = vmul.f32 %v2608, %v2805
        %v2828 = vmul.f32 %v2608, %v2809
        %v2829 = vmul.f32 %v2608, %v2813
        %v2830 = vmul.f32 %v2612, %v2753
        %v2831 = vmul.f32 %v2612, %v2757
        %v2832 = vmul.f32 %v2612, %v2761
        %v2833 = vmul.f32 %v2612, %v2765
        %v2834 = vmul.f32 %v2612, %v2769
        %v2835 = vmul.f32 %v2612, %v2773
        %v2836 = vmul.f32 %v2612, %v2777
        %v2837 = vmul.f32 %v2612, %v2781
        %v2838 = vmul.f32 %v2612, %v2785
        %v2839 = vmul.f32 %v2612, %v2789
        %v2840 = vmul.f32 %v2612, %v2793
        %v2841 = vmul.f32 %v2612, %v2797
        %v2842 = vmul.f32 %v2612, %v2801
        %v2843 = vmul.f32 %v2612, %v2805
        %v2844 = vmul.f32 %v2612, %v2809
        %v2845 = vmul.f32 %v2612, %v2813
        %v2846 = vmul.f32 %v2616, %v2753
        %v2847 = vmul.f32 %v2616, %v2757
        %v2848 = vmul.f32 %v2616, %v2761
        %v2849 = vmul.f32 %v2616, %v2765
        %v2850 = vmul.f32 %v2616, %v2769
        %v2851 = vmul.f32 %v2616, %v2773
        %v2852 = vmul.f32 %v2616, %v2777
        %v2853 = vmul.f32 %v2616, %v2781
        %v2854 = vmul.f32 %v2616, %v2785
        %v2855 = vmul.f32 %v2616, %v2789
        %v2856 = vmul.f32 %v2616, %v2793
        %v2857 = vmul.f32 %v2616, %v2797
        %v2858 = vmul.f32 %v2616, %v2801
        %v2859 = vmul.f32 %v2616, %v2805
        %v2860 = vmul.f32 %v2616, %v2809
        %v2861 = vmul.f32 %v2616, %v2813
        %v2862 = vmul.f32 %v2620, %v2753
        %v2863 = vmul.f32 %v2620, %v2757
        %v2864 = vmul.f32 %v2620, %v2761
        %v2865 = vmul.f32 %v2620, %v2765
        %v2866 = vmul.f32 %v2620, %v2769
        %v2867 = vmul.f32 %v2620, %v2773
        %v2868 = vmul.f32 %v2620, %v2777
        %v2869 = vmul.f32 %v2620, %v2781
        %v2870 = vmul.f32 %v2620, %v2785
        %v2871 = vmul.f32 %v2620, %v2789
        %v2872 = vmul.f32 %v2620, %v2793
        %v2873 = vmul.f32 %v2620, %v2797
        %v2874 = vmul.f32 %v2620, %v2801
        %v2875 = vmul.f32 %v2620, %v2805
        %v2876 = vmul.f32 %v2620, %v2809
        %v2877 = vmul.f32 %v2620, %v2813
        %v2878 = vmul.f32 %v2624, %v2753
        %v2879 = vmul.f32 %v2624, %v2757
        %v2880 = vmul.f32 %v2624, %v2761
        %v2881 = vmul.f32 %v2624, %v2765
        %v2882 = vmul.f32 %v2624, %v2769
        %v2883 = vmul.f32 %v2624, %v2773
        %v2884 = vmul.f32 %v2624, %v2777
        %v2885 = vmul.f32 %v2624, %v2781
        %v2886 = vmul.f32 %v2624, %v2785
        %v2887 = vmul.f32 %v2624, %v2789
        %v2888 = vmul.f32 %v2624, %v2793
        %v2889 = vmul.f32 %v2624, %v2797
        %v2890 = vmul.f32 %v2624, %v2801
        %v2891 = vmul.f32 %v2624, %v2805
        %v2892 = vmul.f32 %v2624, %v2809
        %v2893 = vmul.f32 %v2624, %v2813
        %v2894 = vmul.f32 %v2628, %v2753
        %v2895 = vmul.f32 %v2628, %v2757
        %v2896 = vmul.f32 %v2628, %v2761
        %v2897 = vmul.f32 %v2628, %v2765
        %v2898 = vmul.f32 %v2628, %v2769
        %v2899 = vmul.f32 %v2628, %v2773
        %v2900 = vmul.f32 %v2628, %v2777
        %v2901 = vmul.f32 %v2628, %v2781
        %v2902 = vmul.f32 %v2628, %v2785
        %v2903 = vmul.f32 %v2628, %v2789
        %v2904 = vmul.f32 %v2628, %v2793
        %v2905 = vmul.f32 %v2628, %v2797
        %v2906 = vmul.f32 %v2628, %v2801
        %v2907 = vmul.f32 %v2628, %v2805
        %v2908 = vmul.f32 %v2628, %v2809
        %v2909 = vmul.f32 %v2628, %v2813
        %v2910 = vmul.f32 %v2632, %v2753
        %v2911 = vmul.f32 %v2632, %v2757
        %v2912 = vmul.f32 %v2632, %v2761
        %v2913 = vmul.f32 %v2632, %v2765
        %v2914 = vmul.f32 %v2632, %v2769
        %v2915 = vmul.f32 %v2632, %v2773
        %v2916 = vmul.f32 %v2632, %v2777
        %v2917 = vmul.f32 %v2632, %v2781
        %v2918 = vmul.f32 %v2632, %v2785
        %v2919 = vmul.f32 %v2632, %v2789
        %v2920 = vmul.f32 %v2632, %v2793
        %v2921 = vmul.f32 %v2632, %v2797
        %v2922 = vmul.f32 %v2632, %v2801
        %v2923 = vmul.f32 %v2632, %v2805
        %v2924 = vmul.f32 %v2632, %v2809
        %v2925 = vmul.f32 %v2632, %v2813
        %v2926 = vmul.f32 %v2636, %v2753
        %v2927 = vmul.f32 %v2636, %v2757
        %v2928 = vmul.f32 %v2636, %v2761
        %v2929 = vmul.f32 %v2636, %v2765
        %v2930 = vmul.f32 %v2636, %v2769
        %v2931 = vmul.f32 %v2636, %v2773
        %v2932 = vmul.f32 %v2636, %v2777
        %v2933 = vmul.f32 %v2636, %v2781
        %v2934 = vmul.f32 %v2636, %v2785
        %v2935 = vmul.f32 %v2636, %v2789
        %v2936 = vmul.f32 %v2636, %v2793
        %v2937 = vmul.f32 %v2636, %v2797
        %v2938 = vmul.f32 %v2636, %v2801
        %v2939 = vmul.f32 %v2636, %v2805
        %v2940 = vmul.f32 %v2636, %v2809
        %v2941 = vmul.f32 %v2636, %v2813
        %v2942 = vmul.f32 %v2640, %v2753
        %v2943 = vmul.f32 %v2640, %v2757
        %v2944 = vmul.f32 %v2640, %v2761
        %v2945 = vmul.f32 %v2640, %v2765
        %v2946 = vmul.f32 %v2640, %v2769
        %v2947 = vmul.f32 %v2640, %v2773
        %v2948 = vmul.f32 %v2640, %v2777
        %v2949 = vmul.f32 %v2640, %v2781
        %v2950 = vmul.f32 %v2640, %v2785
        %v2951 = vmul.f32 %v2640, %v2789
        %v2952 = vmul.f32 %v2640, %v2793
        %v2953 = vmul.f32 %v2640, %v2797
        %v2954 = vmul.f32 %v2640, %v2801
        %v2955 = vmul.f32 %v2640, %v2805
        %v2956 = vmul.f32 %v2640, %v2809
        %v2957 = vmul.f32 %v2640, %v2813
        %v2958 = vmul.f32 %v2644, %v2753
        %v2959 = vmul.f32 %v2644, %v2757
        %v2960 = vmul.f32 %v2644, %v2761
        %v2961 = vmul.f32 %v2644, %v2765
        %v2962 = vmul.f32 %v2644, %v2769
        %v2963 = vmul.f32 %v2644, %v2773
        %v2964 = vmul.f32 %v2644, %v2777
        %v2965 = vmul.f32 %v2644, %v2781
        %v2966 = vmul.f32 %v2644, %v2785
        %v2967 = vmul.f32 %v2644, %v2789
        %v2968 = vmul.f32 %v2644, %v2793
        %v2969 = vmul.f32 %v2644, %v2797
        %v2970 = vmul.f32 %v2644, %v2801
        %v2971 = vmul.f32 %v2644, %v2805
        %v2972 = vmul.f32 %v2644, %v2809
        %v2973 = vmul.f32 %v2644, %v2813
        %v2974 = vmul.f32 %v2648, %v2753
        %v2975 = vmul.f32 %v2648, %v2757
        %v2976 = vmul.f32 %v2648, %v2761
        %v2977 = vmul.f32 %v2648, %v2765
        %v2978 = vmul.f32 %v2648, %v2769
        %v2979 = vmul.f32 %v2648, %v2773
        %v2980 = vmul.f32 %v2648, %v2777
        %v2981 = vmul.f32 %v2648, %v2781
        %v2982 = vmul.f32 %v2648, %v2785
        %v2983 = vmul.f32 %v2648, %v2789
        %v2984 = vmul.f32 %v2648, %v2793
        %v2985 = vmul.f32 %v2648, %v2797
        %v2986 = vmul.f32 %v2648, %v2801
        %v2987 = vmul.f32 %v2648, %v2805
        %v2988 = vmul.f32 %v2648, %v2809
        %v2989 = vmul.f32 %v2648, %v2813
        %v2990 = vmul.f32 %v2652, %v2753
        %v2991 = vmul.f32 %v2652, %v2757
        %v2992 = vmul.f32 %v2652, %v2761
        %v2993 = vmul.f32 %v2652, %v2765
        %v2994 = vmul.f32 %v2652, %v2769
        %v2995 = vmul.f32 %v2652, %v2773
        %v2996 = vmul.f32 %v2652, %v2777
        %v2997 = vmul.f32 %v2652, %v2781
        %v2998 = vmul.f32 %v2652, %v2785
        %v2999 = vmul.f32 %v2652, %v2789
        %v3000 = vmul.f32 %v2652, %v2793
        %v3001 = vmul.f32 %v2652, %v2797
        %v3002 = vmul.f32 %v2652, %v2801
        %v3003 = vmul.f32 %v2652, %v2805
        %v3004 = vmul.f32 %v2652, %v2809
        %v3005 = vmul.f32 %v2652, %v2813
        %v3006 = vmul.f32 %v2656, %v2753
        %v3007 = vmul.f32 %v2656, %v2757
        %v3008 = vmul.f32 %v2656, %v2761
        %v3009 = vmul.f32 %v2656, %v2765
        %v3010 = vmul.f32 %v2656, %v2769
        %v3011 = vmul.f32 %v2656, %v2773
        %v3012 = vmul.f32 %v2656, %v2777
        %v3013 = vmul.f32 %v2656, %v2781
        %v3014 = vmul.f32 %v2656, %v2785
        %v3015 = vmul.f32 %v2656, %v2789
        %v3016 = vmul.f32 %v2656, %v2793
        %v3017 = vmul.f32 %v2656, %v2797
        %v3018 = vmul.f32 %v2656, %v2801
        %v3019 = vmul.f32 %v2656, %v2805
        %v3020 = vmul.f32 %v2656, %v2809
        %v3021 = vmul.f32 %v2656, %v2813
        %v3022 = vmul.f32 %v2660, %v2753
        %v3023 = vmul.f32 %v2660, %v2757
        %v3024 = vmul.f32 %v2660, %v2761
        %v3025 = vmul.f32 %v2660, %v2765
        %v3026 = vmul.f32 %v2660, %v2769
        %v3027 = vmul.f32 %v2660, %v2773
        %v3028 = vmul.f32 %v2660, %v2777
        %v3029 = vmul.f32 %v2660, %v2781
        %v3030 = vmul.f32 %v2660, %v2785
        %v3031 = vmul.f32 %v2660, %v2789
        %v3032 = vmul.f32 %v2660, %v2793
        %v3033 = vmul.f32 %v2660, %v2797
        %v3034 = vmul.f32 %v2660, %v2801
        %v3035 = vmul.f32 %v2660, %v2805
        %v3036 = vmul.f32 %v2660, %v2809
        %v3037 = vmul.f32 %v2660, %v2813
        %v3038 = vmul.f32 %v2664, %v2753
        %v3039 = vmul.f32 %v2664, %v2757
        %v3040 = vmul.f32 %v2664, %v2761
        %v3041 = vmul.f32 %v2664, %v2765
        %v3042 = vmul.f32 %v2664, %v2769
        %v3043 = vmul.f32 %v2664, %v2773
        %v3044 = vmul.f32 %v2664, %v2777
        %v3045 = vmul.f32 %v2664, %v2781
        %v3046 = vmul.f32 %v2664, %v2785
        %v3047 = vmul.f32 %v2664, %v2789
        %v3048 = vmul.f32 %v2664, %v2793
        %v3049 = vmul.f32 %v2664, %v2797
        %v3050 = vmul.f32 %v2664, %v2801
        %v3051 = vmul.f32 %v2664, %v2805
        %v3052 = vmul.f32 %v2664, %v2809
        %v3053 = vmul.f32 %v2664, %v2813
        %v3054 = vmul.f32 %v2668, %v2753
        %v3055 = vmul.f32 %v2668, %v2757
        %v3056 = vmul.f32 %v2668, %v2761
        %v3057 = vmul.f32 %v2668, %v2765
        %v3058 = vmul.f32 %v2668, %v2769
        %v3059 = vmul.f32 %v2668, %v2773
        %v3060 = vmul.f32 %v2668, %v2777
        %v3061 = vmul.f32 %v2668, %v2781
        %v3062 = vmul.f32 %v2668, %v2785
        %v3063 = vmul.f32 %v2668, %v2789
        %v3064 = vmul.f32 %v2668, %v2793
        %v3065 = vmul.f32 %v2668, %v2797
        %v3066 = vmul.f32 %v2668, %v2801
        %v3067 = vmul.f32 %v2668, %v2805
        %v3068 = vmul.f32 %v2668, %v2809
        %v3069 = vmul.f32 %v2668, %v2813
        %v3070 = vadd.f32 %v2350, %v2814
        %v3071 = vadd.f32 %v2351, %v2815
        %v3072 = vadd.f32 %v2352, %v2816
        %v3073 = vadd.f32 %v2353, %v2817
        %v3074 = vadd.f32 %v2354, %v2818
        %v3075 = vadd.f32 %v2355, %v2819
        %v3076 = vadd.f32 %v2356, %v2820
        %v3077 = vadd.f32 %v2357, %v2821
        %v3078 = vadd.f32 %v2358, %v2822
        %v3079 = vadd.f32 %v2359, %v2823
        %v3080 = vadd.f32 %v2360, %v2824
        %v3081 = vadd.f32 %v2361, %v2825
        %v3082 = vadd.f32 %v2362, %v2826
        %v3083 = vadd.f32 %v2363, %v2827
        %v3084 = vadd.f32 %v2364, %v2828
        %v3085 = vadd.f32 %v2365, %v2829
        %v3086 = vadd.f32 %v2366, %v2830
        %v3087 = vadd.f32 %v2367, %v2831
        %v3088 = vadd.f32 %v2368, %v2832
        %v3089 = vadd.f32 %v2369, %v2833
        %v3090 = vadd.f32 %v2370, %v2834
        %v3091 = vadd.f32 %v2371, %v2835
        %v3092 = vadd.f32 %v2372, %v2836
        %v3093 = vadd.f32 %v2373, %v2837
        %v3094 = vadd.f32 %v2374, %v2838
        %v3095 = vadd.f32 %v2375, %v2839
        %v3096 = vadd.f32 %v2376, %v2840
        %v3097 = vadd.f32 %v2377, %v2841
        %v3098 = vadd.f32 %v2378, %v2842
        %v3099 = vadd.f32 %v2379, %v2843
        %v3100 = vadd.f32 %v2380, %v2844
        %v3101 = vadd.f32 %v2381, %v2845
        %v3102 = vadd.f32 %v2382, %v2846
        %v3103 = vadd.f32 %v2383, %v2847
        %v3104 = vadd.f32 %v2384, %v2848
        %v3105 = vadd.f32 %v2385, %v2849
        %v3106 = vadd.f32 %v2386, %v2850
        %v3107 = vadd.f32 %v2387, %v2851
        %v3108 = vadd.f32 %v2388, %v2852
        %v3109 = vadd.f32 %v2389, %v2853
        %v3110 = vadd.f32 %v2390, %v2854
        %v3111 = vadd.f32 %v2391, %v2855
        %v3112 = vadd.f32 %v2392, %v2856
        %v3113 = vadd.f32 %v2393, %v2857
        %v3114 = vadd.f32 %v2394, %v2858
        %v3115 = vadd.f32 %v2395, %v2859
        %v3116 = vadd.f32 %v2396, %v2860
        %v3117 = vadd.f32 %v2397, %v2861
        %v3118 = vadd.f32 %v2398, %v2862
        %v3119 = vadd.f32 %v2399, %v2863
        %v3120 = vadd.f32 %v2400, %v2864
        %v3121 = vadd.f32 %v2401, %v2865
        %v3122 = vadd.f32 %v2402, %v2866
        %v3123 = vadd.f32 %v2403, %v2867
        %v3124 = vadd.f32 %v2404, %v2868
        %v3125 = vadd.f32 %v2405, %v2869
        %v3126 = vadd.f32 %v2406, %v2870
        %v3127 = vadd.f32 %v2407, %v2871
        %v3128 = vadd.f32 %v2408, %v2872
        %v3129 = vadd.f32 %v2409, %v2873
        %v3130 = vadd.f32 %v2410, %v2874
        %v3131 = vadd.f32 %v2411, %v2875
        %v3132 = vadd.f32 %v2412, %v2876
        %v3133 = vadd.f32 %v2413, %v2877
        %v3134 = vadd.f32 %v2414, %v2878
        %v3135 = vadd.f32 %v2415, %v2879
        %v3136 = vadd.f32 %v2416, %v2880
        %v3137 = vadd.f32 %v2417, %v2881
        %v3138 = vadd.f32 %v2418, %v2882
        %v3139 = vadd.f32 %v2419, %v2883
        %v3140 = vadd.f32 %v2420, %v2884
        %v3141 = vadd.f32 %v2421, %v2885
        %v3142 = vadd.f32 %v2422, %v2886
        %v3143 = vadd.f32 %v2423, %v2887
        %v3144 = vadd.f32 %v2424, %v2888
        %v3145 = vadd.f32 %v2425, %v2889
        %v3146 = vadd.f32 %v2426, %v2890
        %v3147 = vadd.f32 %v2427, %v2891
        %v3148 = vadd.f32 %v2428, %v2892
        %v3149 = vadd.f32 %v2429, %v2893
        %v3150 = vadd.f32 %v2430, %v2894
        %v3151 = vadd.f32 %v2431, %v2895
        %v3152 = vadd.f32 %v2432, %v2896
        %v3153 = vadd.f32 %v2433, %v2897
        %v3154 = vadd.f32 %v2434, %v2898
        %v3155 = vadd.f32 %v2435, %v2899
        %v3156 = vadd.f32 %v2436, %v2900
        %v3157 = vadd.f32 %v2437, %v2901
        %v3158 = vadd.f32 %v2438, %v2902
        %v3159 = vadd.f32 %v2439, %v2903
        %v3160 = vadd.f32 %v2440, %v2904
        %v3161 = vadd.f32 %v2441, %v2905
        %v3162 = vadd.f32 %v2442, %v2906
        %v3163 = vadd.f32 %v2443, %v2907
        %v3164 = vadd.f32 %v2444, %v2908
        %v3165 = vadd.f32 %v2445, %v2909
        %v3166 = vadd.f32 %v2446, %v2910
        %v3167 = vadd.f32 %v2447, %v2911
        %v3168 = vadd.f32 %v2448, %v2912
        %v3169 = vadd.f32 %v2449, %v2913
        %v3170 = vadd.f32 %v2450, %v2914
        %v3171 = vadd.f32 %v2451, %v2915
        %v3172 = vadd.f32 %v2452, %v2916
        %v3173 = vadd.f32 %v2453, %v2917
        %v3174 = vadd.f32 %v2454, %v2918
        %v3175 = vadd.f32 %v2455, %v2919
        %v3176 = vadd.f32 %v2456, %v2920
        %v3177 = vadd.f32 %v2457, %v2921
        %v3178 = vadd.f32 %v2458, %v2922
        %v3179 = vadd.f32 %v2459, %v2923
        %v3180 = vadd.f32 %v2460, %v2924
        %v3181 = vadd.f32 %v2461, %v2925
        %v3182 = vadd.f32 %v2462, %v2926
        %v3183 = vadd.f32 %v2463, %v2927
        %v3184 = vadd.f32 %v2464, %v2928
        %v3185 = vadd.f32 %v2465, %v2929
        %v3186 = vadd.f32 %v2466, %v2930
        %v3187 = vadd.f32 %v2467, %v2931
        %v3188 = vadd.f32 %v2468, %v2932
        %v3189 = vadd.f32 %v2469, %v2933
        %v3190 = vadd.f32 %v2470, %v2934
        %v3191 = vadd.f32 %v2471, %v2935
        %v3192 = vadd.f32 %v2472, %v2936
        %v3193 = vadd.f32 %v2473, %v2937
        %v3194 = vadd.f32 %v2474, %v2938
        %v3195 = vadd.f32 %v2475, %v2939
        %v3196 = vadd.f32 %v2476, %v2940
        %v3197 = vadd.f32 %v2477, %v2941
        %v3198 = vadd.f32 %v2478, %v2942
        %v3199 = vadd.f32 %v2479, %v2943
        %v3200 = vadd.f32 %v2480, %v2944
        %v3201 = vadd.f32 %v2481, %v2945
        %v3202 = vadd.f32 %v2482, %v2946
        %v3203 = vadd.f32 %v2483, %v2947
        %v3204 = vadd.f32 %v2484, %v2948
        %v3205 = vadd.f32 %v2485, %v2949
        %v3206 = vadd.f32 %v2486, %v2950
        %v3207 = vadd.f32 %v2487, %v2951
        %v3208 = vadd.f32 %v2488, %v2952
        %v3209 = vadd.f32 %v2489, %v2953
        %v3210 = vadd.f32 %v2490, %v2954
        %v3211 = vadd.f32 %v2491, %v2955
        %v3212 = vadd.f32 %v2492, %v2956
        %v3213 = vadd.f32 %v2493, %v2957
        %v3214 = vadd.f32 %v2494, %v2958
        %v3215 = vadd.f32 %v2495, %v2959
        %v3216 = vadd.f32 %v2496, %v2960
        %v3217 = vadd.f32 %v2497, %v2961
        %v3218 = vadd.f32 %v2498, %v2962
        %v3219 = vadd.f32 %v2499, %v2963
        %v3220 = vadd.f32 %v2500, %v2964
        %v3221 = vadd.f32 %v2501, %v2965
        %v3222 = vadd.f32 %v2502, %v2966
        %v3223 = vadd.f32 %v2503, %v2967
        %v3224 = vadd.f32 %v2504, %v2968
        %v3225 = vadd.f32 %v2505, %v2969
        %v3226 = vadd.f32 %v2506, %v2970
        %v3227 = vadd.f32 %v2507, %v2971
        %v3228 = vadd.f32 %v2508, %v2972
        %v3229 = vadd.f32 %v2509, %v2973
        %v3230 = vadd.f32 %v2510, %v2974
        %v3231 = vadd.f32 %v2511, %v2975
        %v3232 = vadd.f32 %v2512, %v2976
        %v3233 = vadd.f32 %v2513, %v2977
        %v3234 = vadd.f32 %v2514, %v2978
        %v3235 = vadd.f32 %v2515, %v2979
        %v3236 = vadd.f32 %v2516, %v2980
        %v3237 = vadd.f32 %v2517, %v2981
        %v3238 = vadd.f32 %v2518, %v2982
        %v3239 = vadd.f32 %v2519, %v2983
        %v3240 = vadd.f32 %v2520, %v2984
        %v3241 = vadd.f32 %v2521, %v2985
        %v3242 = vadd.f32 %v2522, %v2986
        %v3243 = vadd.f32 %v2523, %v2987
        %v3244 = vadd.f32 %v2524, %v2988
        %v3245 = vadd.f32 %v2525, %v2989
        %v3246 = vadd.f32 %v2526, %v2990
        %v3247 = vadd.f32 %v2527, %v2991
        %v3248 = vadd.f32 %v2528, %v2992
        %v3249 = vadd.f32 %v2529, %v2993
        %v3250 = vadd.f32 %v2530, %v2994
        %v3251 = vadd.f32 %v2531, %v2995
        %v3252 = vadd.f32 %v2532, %v2996
        %v3253 = vadd.f32 %v2533, %v2997
        %v3254 = vadd.f32 %v2534, %v2998
        %v3255 = vadd.f32 %v2535, %v2999
        %v3256 = vadd.f32 %v2536, %v3000
        %v3257 = vadd.f32 %v2537, %v3001
        %v3258 = vadd.f32 %v2538, %v3002
        %v3259 = vadd.f32 %v2539, %v3003
        %v3260 = vadd.f32 %v2540, %v3004
        %v3261 = vadd.f32 %v2541, %v3005
        %v3262 = vadd.f32 %v2542, %v3006
        %v3263 = vadd.f32 %v2543, %v3007
        %v3264 = vadd.f32 %v2544, %v3008
        %v3265 = vadd.f32 %v2545, %v3009
        %v3266 = vadd.f32 %v2546, %v3010
        %v3267 = vadd.f32 %v2547, %v3011
        %v3268 = vadd.f32 %v2548, %v3012
        %v3269 = vadd.f32 %v2549, %v3013
        %v3270 = vadd.f32 %v2550, %v3014
        %v3271 = vadd.f32 %v2551, %v3015
        %v3272 = vadd.f32 %v2552, %v3016
        %v3273 = vadd.f32 %v2553, %v3017
        %v3274 = vadd.f32 %v2554, %v3018
        %v3275 = vadd.f32 %v2555, %v3019
        %v3276 = vadd.f32 %v2556, %v3020
        %v3277 = vadd.f32 %v2557, %v3021
        %v3278 = vadd.f32 %v2558, %v3022
        %v3279 = vadd.f32 %v2559, %v3023
        %v3280 = vadd.f32 %v2560, %v3024
        %v3281 = vadd.f32 %v2561, %v3025
        %v3282 = vadd.f32 %v2562, %v3026
        %v3283 = vadd.f32 %v2563, %v3027
        %v3284 = vadd.f32 %v2564, %v3028
        %v3285 = vadd.f32 %v2565, %v3029
        %v3286 = vadd.f32 %v2566, %v3030
        %v3287 = vadd.f32 %v2567, %v3031
        %v3288 = vadd.f32 %v2568, %v3032
        %v3289 = vadd.f32 %v2569, %v3033
        %v3290 = vadd.f32 %v2570, %v3034
        %v3291 = vadd.f32 %v2571, %v3035
        %v3292 = vadd.f32 %v2572, %v3036
        %v3293 = vadd.f32 %v2573, %v3037
        %v3294 = vadd.f32 %v2574, %v3038
        %v3295 = vadd.f32 %v2575, %v3039
        %v3296 = vadd.f32 %v2576, %v3040
        %v3297 = vadd.f32 %v2577, %v3041
        %v3298 = vadd.f32 %v2578, %v3042
        %v3299 = vadd.f32 %v2579, %v3043
        %v3300 = vadd.f32 %v2580, %v3044
        %v3301 = vadd.f32 %v2581, %v3045
        %v3302 = vadd.f32 %v2582, %v3046
        %v3303 = vadd.f32 %v2583, %v3047
        %v3304 = vadd.f32 %v2584, %v3048
        %v3305 = vadd.f32 %v2585, %v3049
        %v3306 = vadd.f32 %v2586, %v3050
        %v3307 = vadd.f32 %v2587, %v3051
        %v3308 = vadd.f32 %v2588, %v3052
        %v3309 = vadd.f32 %v2589, %v3053
        %v3310 = vadd.f32 %v2590, %v3054
        %v3311 = vadd.f32 %v2591, %v3055
        %v3312 = vadd.f32 %v2592, %v3056
        %v3313 = vadd.f32 %v2593, %v3057
        %v3314 = vadd.f32 %v2594, %v3058
        %v3315 = vadd.f32 %v2595, %v3059
        %v3316 = vadd.f32 %v2596, %v3060
        %v3317 = vadd.f32 %v2597, %v3061
        %v3318 = vadd.f32 %v2598, %v3062
        %v3319 = vadd.f32 %v2599, %v3063
        %v3320 = vadd.f32 %v2600, %v3064
        %v3321 = vadd.f32 %v2601, %v3065
        %v3322 = vadd.f32 %v2602, %v3066
        %v3323 = vadd.f32 %v2603, %v3067
        %v3324 = vadd.f32 %v2604, %v3068
        %v3325 = vadd.f32 %v2605, %v3069
        %v3326 = vmax.f32 %v3070, 0.0
        %v3327 = vmax.f32 %v3071, 0.0
        %v3328 = vmax.f32 %v3072, 0.0
        %v3329 = vmax.f32 %v3073, 0.0
        %v3330 = vmax.f32 %v3074, 0.0
        %v3331 = vmax.f32 %v3075, 0.0
        %v3332 = vmax.f32 %v3076, 0.0
        %v3333 = vmax.f32 %v3077, 0.0
        %v3334 = vmax.f32 %v3078, 0.0
        %v3335 = vmax.f32 %v3079, 0.0
        %v3336 = vmax.f32 %v3080, 0.0
        %v3337 = vmax.f32 %v3081, 0.0
        %v3338 = vmax.f32 %v3082, 0.0
        %v3339 = vmax.f32 %v3083, 0.0
        %v3340 = vmax.f32 %v3084, 0.0
        %v3341 = vmax.f32 %v3085, 0.0
        %v3342 = vmax.f32 %v3086, 0.0
        %v3343 = vmax.f32 %v3087, 0.0
        %v3344 = vmax.f32 %v3088, 0.0
        %v3345 = vmax.f32 %v3089, 0.0
        %v3346 = vmax.f32 %v3090, 0.0
        %v3347 = vmax.f32 %v3091, 0.0
        %v3348 = vmax.f32 %v3092, 0.0
        %v3349 = vmax.f32 %v3093, 0.0
        %v3350 = vmax.f32 %v3094, 0.0
        %v3351 = vmax.f32 %v3095, 0.0
        %v3352 = vmax.f32 %v3096, 0.0
        %v3353 = vmax.f32 %v3097, 0.0
        %v3354 = vmax.f32 %v3098, 0.0
        %v3355 = vmax.f32 %v3099, 0.0
        %v3356 = vmax.f32 %v3100, 0.0
        %v3357 = vmax.f32 %v3101, 0.0
        %v3358 = vmax.f32 %v3102, 0.0
        %v3359 = vmax.f32 %v3103, 0.0
        %v3360 = vmax.f32 %v3104, 0.0
        %v3361 = vmax.f32 %v3105, 0.0
        %v3362 = vmax.f32 %v3106, 0.0
        %v3363 = vmax.f32 %v3107, 0.0
        %v3364 = vmax.f32 %v3108, 0.0
        %v3365 = vmax.f32 %v3109, 0.0
        %v3366 = vmax.f32 %v3110, 0.0
        %v3367 = vmax.f32 %v3111, 0.0
        %v3368 = vmax.f32 %v3112, 0.0
        %v3369 = vmax.f32 %v3113, 0.0
        %v3370 = vmax.f32 %v3114, 0.0
        %v3371 = vmax.f32 %v3115, 0.0
        %v3372 = vmax.f32 %v3116, 0.0
        %v3373 = vmax.f32 %v3117, 0.0
        %v3374 = vmax.f32 %v3118, 0.0
        %v3375 = vmax.f32 %v3119, 0.0
        %v3376 = vmax.f32 %v3120, 0.0
        %v3377 = vmax.f32 %v3121, 0.0
        %v3378 = vmax.f32 %v3122, 0.0
        %v3379 = vmax.f32 %v3123, 0.0
        %v3380 = vmax.f32 %v3124, 0.0
        %v3381 = vmax.f32 %v3125, 0.0
        %v3382 = vmax.f32 %v3126, 0.0
        %v3383 = vmax.f32 %v3127, 0.0
        %v3384 = vmax.f32 %v3128, 0.0
        %v3385 = vmax.f32 %v3129, 0.0
        %v3386 = vmax.f32 %v3130, 0.0
        %v3387 = vmax.f32 %v3131, 0.0
        %v3388 = vmax.f32 %v3132, 0.0
        %v3389 = vmax.f32 %v3133, 0.0
        %v3390 = vmax.f32 %v3134, 0.0
        %v3391 = vmax.f32 %v3135, 0.0
        %v3392 = vmax.f32 %v3136, 0.0
        %v3393 = vmax.f32 %v3137, 0.0
        %v3394 = vmax.f32 %v3138, 0.0
        %v3395 = vmax.f32 %v3139, 0.0
        %v3396 = vmax.f32 %v3140, 0.0
        %v3397 = vmax.f32 %v3141, 0.0
        %v3398 = vmax.f32 %v3142, 0.0
        %v3399 = vmax.f32 %v3143, 0.0
        %v3400 = vmax.f32 %v3144, 0.0
        %v3401 = vmax.f32 %v3145, 0.0
        %v3402 = vmax.f32 %v3146, 0.0
        %v3403 = vmax.f32 %v3147, 0.0
        %v3404 = vmax.f32 %v3148, 0.0
        %v3405 = vmax.f32 %v3149, 0.0
        %v3406 = vmax.f32 %v3150, 0.0
        %v3407 = vmax.f32 %v3151, 0.0
        %v3408 = vmax.f32 %v3152, 0.0
        %v3409 = vmax.f32 %v3153, 0.0
        %v3410 = vmax.f32 %v3154, 0.0
        %v3411 = vmax.f32 %v3155, 0.0
        %v3412 = vmax.f32 %v3156, 0.0
        %v3413 = vmax.f32 %v3157, 0.0
        %v3414 = vmax.f32 %v3158, 0.0
        %v3415 = vmax.f32 %v3159, 0.0
        %v3416 = vmax.f32 %v3160, 0.0
        %v3417 = vmax.f32 %v3161, 0.0
        %v3418 = vmax.f32 %v3162, 0.0
        %v3419 = vmax.f32 %v3163, 0.0
        %v3420 = vmax.f32 %v3164, 0.0
        %v3421 = vmax.f32 %v3165, 0.0
        %v3422 = vmax.f32 %v3166, 0.0
        %v3423 = vmax.f32 %v3167, 0.0
        %v3424 = vmax.f32 %v3168, 0.0
        %v3425 = vmax.f32 %v3169, 0.0
        %v3426 = vmax.f32 %v3170, 0.0
        %v3427 = vmax.f32 %v3171, 0.0
        %v3428 = vmax.f32 %v3172, 0.0
        %v3429 = vmax.f32 %v3173, 0.0
        %v3430 = vmax.f32 %v3174, 0.0
        %v3431 = vmax.f32 %v3175, 0.0
        %v3432 = vmax.f32 %v3176, 0.0
        %v3433 = vmax.f32 %v3177, 0.0
        %v3434 = vmax.f32 %v3178, 0.0
        %v3435 = vmax.f32 %v3179, 0.0
        %v3436 = vmax.f32 %v3180, 0.0
        %v3437 = vmax.f32 %v3181, 0.0
        %v3438 = vmax.f32 %v3182, 0.0
        %v3439 = vmax.f32 %v3183, 0.0
        %v3440 = vmax.f32 %v3184, 0.0
        %v3441 = vmax.f32 %v3185, 0.0
        %v3442 = vmax.f32 %v3186, 0.0
        %v3443 = vmax.f32 %v3187, 0.0
        %v3444 = vmax.f32 %v3188, 0.0
        %v3445 = vmax.f32 %v3189, 0.0
        %v3446 = vmax.f32 %v3190, 0.0
        %v3447 = vmax.f32 %v3191, 0.0
        %v3448 = vmax.f32 %v3192, 0.0
        %v3449 = vmax.f32 %v3193, 0.0
        %v3450 = vmax.f32 %v3194, 0.0
        %v3451 = vmax.f32 %v3195, 0.0
        %v3452 = vmax.f32 %v3196, 0.0
        %v3453 = vmax.f32 %v3197, 0.0
        %v3454 = vmax.f32 %v3198, 0.0
        %v3455 = vmax.f32 %v3199, 0.0
        %v3456 = vmax.f32 %v3200, 0.0
        %v3457 = vmax.f32 %v3201, 0.0
        %v3458 = vmax.f32 %v3202, 0.0
        %v3459 = vmax.f32 %v3203, 0.0
        %v3460 = vmax.f32 %v3204, 0.0
        %v3461 = vmax.f32 %v3205, 0.0
        %v3462 = vmax.f32 %v3206, 0.0
        %v3463 = vmax.f32 %v3207, 0.0
        %v3464 = vmax.f32 %v3208, 0.0
        %v3465 = vmax.f32 %v3209, 0.0
        %v3466 = vmax.f32 %v3210, 0.0
        %v3467 = vmax.f32 %v3211, 0.0
        %v3468 = vmax.f32 %v3212, 0.0
        %v3469 = vmax.f32 %v3213, 0.0
        %v3470 = vmax.f32 %v3214, 0.0
        %v3471 = vmax.f32 %v3215, 0.0
        %v3472 = vmax.f32 %v3216, 0.0
        %v3473 = vmax.f32 %v3217, 0.0
        %v3474 = vmax.f32 %v3218, 0.0
        %v3475 = vmax.f32 %v3219, 0.0
        %v3476 = vmax.f32 %v3220, 0.0
        %v3477 = vmax.f32 %v3221, 0.0
        %v3478 = vmax.f32 %v3222, 0.0
        %v3479 = vmax.f32 %v3223, 0.0
        %v3480 = vmax.f32 %v3224, 0.0
        %v3481 = vmax.f32 %v3225, 0.0
        %v3482 = vmax.f32 %v3226, 0.0
        %v3483 = vmax.f32 %v3227, 0.0
        %v3484 = vmax.f32 %v3228, 0.0
        %v3485 = vmax.f32 %v3229, 0.0
        %v3486 = vmax.f32 %v3230, 0.0
        %v3487 = vmax.f32 %v3231, 0.0
        %v3488 = vmax.f32 %v3232, 0.0
        %v3489 = vmax.f32 %v3233, 0.0
        %v3490 = vmax.f32 %v3234, 0.0
        %v3491 = vmax.f32 %v3235, 0.0
        %v3492 = vmax.f32 %v3236, 0.0
        %v3493 = vmax.f32 %v3237, 0.0
        %v3494 = vmax.f32 %v3238, 0.0
        %v3495 = vmax.f32 %v3239, 0.0
        %v3496 = vmax.f32 %v3240, 0.0
        %v3497 = vmax.f32 %v3241, 0.0
        %v3498 = vmax.f32 %v3242, 0.0
        %v3499 = vmax.f32 %v3243, 0.0
        %v3500 = vmax.f32 %v3244, 0.0
        %v3501 = vmax.f32 %v3245, 0.0
        %v3502 = vmax.f32 %v3246, 0.0
        %v3503 = vmax.f32 %v3247, 0.0
        %v3504 = vmax.f32 %v3248, 0.0
        %v3505 = vmax.f32 %v3249, 0.0
        %v3506 = vmax.f32 %v3250, 0.0
        %v3507 = vmax.f32 %v3251, 0.0
        %v3508 = vmax.f32 %v3252, 0.0
        %v3509 = vmax.f32 %v3253, 0.0
        %v3510 = vmax.f32 %v3254, 0.0
        %v3511 = vmax.f32 %v3255, 0.0
        %v3512 = vmax.f32 %v3256, 0.0
        %v3513 = vmax.f32 %v3257, 0.0
        %v3514 = vmax.f32 %v3258, 0.0
        %v3515 = vmax.f32 %v3259, 0.0
        %v3516 = vmax.f32 %v3260, 0.0
        %v3517 = vmax.f32 %v3261, 0.0
        %v3518 = vmax.f32 %v3262, 0.0
        %v3519 = vmax.f32 %v3263, 0.0
        %v3520 = vmax.f32 %v3264, 0.0
        %v3521 = vmax.f32 %v3265, 0.0
        %v3522 = vmax.f32 %v3266, 0.0
        %v3523 = vmax.f32 %v3267, 0.0
        %v3524 = vmax.f32 %v3268, 0.0
        %v3525 = vmax.f32 %v3269, 0.0
        %v3526 = vmax.f32 %v3270, 0.0
        %v3527 = vmax.f32 %v3271, 0.0
        %v3528 = vmax.f32 %v3272, 0.0
        %v3529 = vmax.f32 %v3273, 0.0
        %v3530 = vmax.f32 %v3274, 0.0
        %v3531 = vmax.f32 %v3275, 0.0
        %v3532 = vmax.f32 %v3276, 0.0
        %v3533 = vmax.f32 %v3277, 0.0
        %v3534 = vmax.f32 %v3278, 0.0
        %v3535 = vmax.f32 %v3279, 0.0
        %v3536 = vmax.f32 %v3280, 0.0
        %v3537 = vmax.f32 %v3281, 0.0
        %v3538 = vmax.f32 %v3282, 0.0
        %v3539 = vmax.f32 %v3283, 0.0
        %v3540 = vmax.f32 %v3284, 0.0
        %v3541 = vmax.f32 %v3285, 0.0
        %v3542 = vmax.f32 %v3286, 0.0
        %v3543 = vmax.f32 %v3287, 0.0
        %v3544 = vmax.f32 %v3288, 0.0
        %v3545 = vmax.f32 %v3289, 0.0
        %v3546 = vmax.f32 %v3290, 0.0
        %v3547 = vmax.f32 %v3291, 0.0
        %v3548 = vmax.f32 %v3292, 0.0
        %v3549 = vmax.f32 %v3293, 0.0
        %v3550 = vmax.f32 %v3294, 0.0
        %v3551 = vmax.f32 %v3295, 0.0
        %v3552 = vmax.f32 %v3296, 0.0
        %v3553 = vmax.f32 %v3297, 0.0
        %v3554 = vmax.f32 %v3298, 0.0
        %v3555 = vmax.f32 %v3299, 0.0
        %v3556 = vmax.f32 %v3300, 0.0
        %v3557 = vmax.f32 %v3301, 0.0
        %v3558 = vmax.f32 %v3302, 0.0
        %v3559 = vmax.f32 %v3303, 0.0
        %v3560 = vmax.f32 %v3304, 0.0
        %v3561 = vmax.f32 %v3305, 0.0
        %v3562 = vmax.f32 %v3306, 0.0
        %v3563 = vmax.f32 %v3307, 0.0
        %v3564 = vmax.f32 %v3308, 0.0
        %v3565 = vmax.f32 %v3309, 0.0
        %v3566 = vmax.f32 %v3310, 0.0
        %v3567 = vmax.f32 %v3311, 0.0
        %v3568 = vmax.f32 %v3312, 0.0
        %v3569 = vmax.f32 %v3313, 0.0
        %v3570 = vmax.f32 %v3314, 0.0
        %v3571 = vmax.f32 %v3315, 0.0
        %v3572 = vmax.f32 %v3316, 0.0
        %v3573 = vmax.f32 %v3317, 0.0
        %v3574 = vmax.f32 %v3318, 0.0
        %v3575 = vmax.f32 %v3319, 0.0
        %v3576 = vmax.f32 %v3320, 0.0
        %v3577 = vmax.f32 %v3321, 0.0
        %v3578 = vmax.f32 %v3322, 0.0
        %v3579 = vmax.f32 %v3323, 0.0
        %v3580 = vmax.f32 %v3324, 0.0
        %v3581 = vmax.f32 %v3325, 0.0
        %v3582 = vld [vmem:[%s4] sm:$0xff]
        %v3583 = vld [vmem:[%s4 + $0x8] sm:$0xff]
        %v3584 = vld [vmem:[%s4 + $0x10] sm:$0xff]
        %v3585 = vld [vmem:[%s4 + $0x18] sm:$0xff]
        %v3586 = vld [vmem:[%s4 + $0x20] sm:$0xff]
        %v3587 = vld [vmem:[%s4 + $0x28] sm:$0xff]
        %v3588 = vld [vmem:[%s4 + $0x30] sm:$0xff]
        %v3589 = vld [vmem:[%s4 + $0x38] sm:$0xff]
        %v3590 = vld [vmem:[%s4 + $0x40] sm:$0xff]
        %v3591 = vld [vmem:[%s4 + $0x48] sm:$0xff]
        %v3592 = vld [vmem:[%s4 + $0x50] sm:$0xff]
        %v3593 = vld [vmem:[%s4 + $0x58] sm:$0xff]
        %v3594 = vld [vmem:[%s4 + $0x60] sm:$0xff]
        %v3595 = vld [vmem:[%s4 + $0x68] sm:$0xff]
        %v3596 = vld [vmem:[%s4 + $0x70] sm:$0xff]
        %v3597 = vld [vmem:[%s4 + $0x78] sm:$0xff]
        %v3598 = vld [vmem:[%s5] sm:$0xff]
        %v3599 = vld [vmem:[%s5 + $0x8] sm:$0xff]
        %v3600 = vld [vmem:[%s5 + $0x10] sm:$0xff]
        %v3601 = vld [vmem:[%s5 + $0x18] sm:$0xff]
        %v3602 = vld [vmem:[%s5 + $0x20] sm:$0xff]
        %v3603 = vld [vmem:[%s5 + $0x28] sm:$0xff]
        %v3604 = vld [vmem:[%s5 + $0x30] sm:$0xff]
        %v3605 = vld [vmem:[%s5 + $0x38] sm:$0xff]
        %v3606 = vld [vmem:[%s5 + $0x40] sm:$0xff]
        %v3607 = vld [vmem:[%s5 + $0x48] sm:$0xff]
        %v3608 = vld [vmem:[%s5 + $0x50] sm:$0xff]
        %v3609 = vld [vmem:[%s5 + $0x58] sm:$0xff]
        %v3610 = vld [vmem:[%s5 + $0x60] sm:$0xff]
        %v3611 = vld [vmem:[%s5 + $0x68] sm:$0xff]
        %v3612 = vld [vmem:[%s5 + $0x70] sm:$0xff]
        %v3613 = vld [vmem:[%s5 + $0x78] sm:$0xff]
        %3615 = vset.pattern.permute.xlu0 0
        %3616 = vperm.xlu0 %3615, %v3598
        %v3617 = vpop.permute.xlu0 %3616
        %3620 = vset.pattern.permute.xlu0 0
        %3621 = vperm.xlu0 %3620, %v3599
        %v3622 = vpop.permute.xlu0 %3621
        %3625 = vset.pattern.permute.xlu0 0
        %3626 = vperm.xlu0 %3625, %v3600
        %v3627 = vpop.permute.xlu0 %3626
        %3630 = vset.pattern.permute.xlu0 0
        %3631 = vperm.xlu0 %3630, %v3601
        %v3632 = vpop.permute.xlu0 %3631
        %3635 = vset.pattern.permute.xlu0 0
        %3636 = vperm.xlu0 %3635, %v3602
        %v3637 = vpop.permute.xlu0 %3636
        %3640 = vset.pattern.permute.xlu0 0
        %3641 = vperm.xlu0 %3640, %v3603
        %v3642 = vpop.permute.xlu0 %3641
        %3645 = vset.pattern.permute.xlu0 0
        %3646 = vperm.xlu0 %3645, %v3604
        %v3647 = vpop.permute.xlu0 %3646
        %3650 = vset.pattern.permute.xlu0 0
        %3651 = vperm.xlu0 %3650, %v3605
        %v3652 = vpop.permute.xlu0 %3651
        %3655 = vset.pattern.permute.xlu0 0
        %3656 = vperm.xlu0 %3655, %v3606
        %v3657 = vpop.permute.xlu0 %3656
        %3660 = vset.pattern.permute.xlu0 0
        %3661 = vperm.xlu0 %3660, %v3607
        %v3662 = vpop.permute.xlu0 %3661
        %3665 = vset.pattern.permute.xlu0 0
        %3666 = vperm.xlu0 %3665, %v3608
        %v3667 = vpop.permute.xlu0 %3666
        %3670 = vset.pattern.permute.xlu0 0
        %3671 = vperm.xlu0 %3670, %v3609
        %v3672 = vpop.permute.xlu0 %3671
        %3675 = vset.pattern.permute.xlu0 0
        %3676 = vperm.xlu0 %3675, %v3610
        %v3677 = vpop.permute.xlu0 %3676
        %3680 = vset.pattern.permute.xlu0 0
        %3681 = vperm.xlu0 %3680, %v3611
        %v3682 = vpop.permute.xlu0 %3681
        %3685 = vset.pattern.permute.xlu0 0
        %3686 = vperm.xlu0 %3685, %v3612
        %v3687 = vpop.permute.xlu0 %3686
        %3690 = vset.pattern.permute.xlu0 0
        %3691 = vperm.xlu0 %3690, %v3613
        %v3692 = vpop.permute.xlu0 %3691
        %3694 = vmatprep.subr.mxu0 %v3327
        %3695 = vmatpush1.msra.mxu0 %v3326
        %3696 = vmatprep.subr.mxu0 %v3343
        %3697 = vmatpush1.msra.mxu0 %v3342
        %3698 = vmatprep.subr.mxu0 %v3359
        %3699 = vmatpush1.msra.mxu0 %v3358
        %3700 = vmatprep.subr.mxu0 %v3375
        %3701 = vmatpush1.msra.mxu0 %v3374
        %3702 = vmatprep.subr.mxu0 %v3391
        %3703 = vmatpush1.msra.mxu0 %v3390
        %3704 = vmatprep.subr.mxu0 %v3407
        %3705 = vmatpush1.msra.mxu0 %v3406
        %3706 = vmatprep.subr.mxu0 %v3423
        %3707 = vmatpush1.msra.mxu0 %v3422
        %3708 = vmatprep.subr.mxu0 %v3439
        %3709 = vmatpush1.msra.mxu0 %v3438
        %3710 = vmatprep.subr.mxu0 %v3455
        %3711 = vmatpush1.msra.mxu0 %v3454
        %3712 = vmatprep.subr.mxu0 %v3471
        %3713 = vmatpush1.msra.mxu0 %v3470
        %3714 = vmatprep.subr.mxu0 %v3487
        %3715 = vmatpush1.msra.mxu0 %v3486
        %3716 = vmatprep.subr.mxu0 %v3503
        %3717 = vmatpush1.msra.mxu0 %v3502
        %3718 = vmatprep.subr.mxu0 %v3519
        %3719 = vmatpush1.msra.mxu0 %v3518
        %3720 = vmatprep.subr.mxu0 %v3535
        %3721 = vmatpush1.msra.mxu0 %v3534
        %3722 = vmatprep.subr.mxu0 %v3551
        %3723 = vmatpush1.msra.mxu0 %v3550
        %3724 = vmatprep.subr.mxu0 %v3567
        %3725 = vmatpush1.msra.mxu0 %v3566
        %3726 = vmatprep.subr.mxu0 0.0
        %3727 = vmatpush1.msra.mxu0 0.0
        %3728 = vmatprep.subr.mxu0 0.0
        %3729 = vmatpush1.msra.mxu0 0.0
        %3730 = vmatprep.subr.mxu0 0.0
        %3731 = vmatpush1.msra.mxu0 0.0
        %3732 = vmatprep.subr.mxu0 0.0
        %3733 = vmatpush1.msra.mxu0 0.0
        %3734 = vmatprep.subr.mxu0 0.0
        %3735 = vmatpush1.msra.mxu0 0.0
        %3736 = vmatprep.subr.mxu0 0.0
        %3737 = vmatpush1.msra.mxu0 0.0
        %3738 = vmatprep.subr.mxu0 0.0
        %3739 = vmatpush1.msra.mxu0 0.0
        %3740 = vmatprep.subr.mxu0 0.0
        %3741 = vmatpush1.msra.mxu0 0.0
        %3742 = vmatprep.subr.mxu0 0.0
        %3743 = vmatpush1.msra.mxu0 0.0
        %3744 = vmatprep.subr.mxu0 0.0
        %3745 = vmatpush1.msra.mxu0 0.0
        %3746 = vmatprep.subr.mxu0 0.0
        %3747 = vmatpush1.msra.mxu0 0.0
        %3748 = vmatprep.subr.mxu0 0.0
        %3749 = vmatpush1.msra.mxu0 0.0
        %3750 = vmatprep.subr.mxu0 0.0
        %3751 = vmatpush1.msra.mxu0 0.0
        %3752 = vmatprep.subr.mxu0 0.0
        %3753 = vmatpush1.msra.mxu0 0.0
        %3754 = vmatprep.subr.mxu0 0.0
        %3755 = vmatpush1.msra.mxu0 0.0
        %3756 = vmatprep.subr.mxu0 0.0
        %3757 = vmatpush1.msra.mxu0 0.0
        %3758 = vmatprep.mubr.f32.mxu0 0.0
        %3759 = vmatmul.mubr.f32.gmra.mrb[0].mxu0 %v3582
        %v3760 = vpop.f32.mrb[0].mxu0
        %v3761 = vadd.f32 %v3617, %v3760
        %v3762 = vpop.f32.mrb[0].mxu0
        %v3763 = vadd.f32 %v3617, %v3762
        %3764 = vmatprep.mubr.f32.mxu0 0.0
        %3765 = vmatmul.mubr.f32.gmra.mrb[0].mxu0 %v3583
        %v3766 = vpop.f32.mrb[0].mxu0
        %v3767 = vadd.f32 %v3622, %v3766
        %v3768 = vpop.f32.mrb[0].mxu0
        %v3769 = vadd.f32 %v3622, %v3768
        %3770 = vmatprep.mubr.f32.mxu0 0.0
        %3771 = vmatmul.mubr.f32.gmra.mrb[0].mxu0 %v3584
        %v3772 = vpop.f32.mrb[0].mxu0
        %v3773 = vadd.f32 %v3627, %v3772
        %v3774 = vpop.f32.mrb[0].mxu0
        %v3775 = vadd.f32 %v3627, %v3774
        %3776 = vmatprep.mubr.f32.mxu0 0.0
        %3777 = vmatmul.mubr.f32.gmra.mrb[0].mxu0 %v3585
        %v3778 = vpop.f32.mrb[0].mxu0
        %v3779 = vadd.f32 %v3632, %v3778
        %v3780 = vpop.f32.mrb[0].mxu0
        %v3781 = vadd.f32 %v3632, %v3780
        %3782 = vmatprep.mubr.f32.mxu0 0.0
        %3783 = vmatmul.mubr.f32.gmra.mrb[0].mxu0 %v3586
        %v3784 = vpop.f32.mrb[0].mxu0
        %v3785 = vadd.f32 %v3637, %v3784
        %v3786 = vpop.f32.mrb[0].mxu0
        %v3787 = vadd.f32 %v3637, %v3786
        %3788 = vmatprep.mubr.f32.mxu0 0.0
        %3789 = vmatmul.mubr.f32.gmra.mrb[0].mxu0 %v3587
        %v3790 = vpop.f32.mrb[0].mxu0
        %v3791 = vadd.f32 %v3642, %v3790
        %v3792 = vpop.f32.mrb[0].mxu0
        %v3793 = vadd.f32 %v3642, %v3792
        %3794 = vmatprep.mubr.f32.mxu0 0.0
        %3795 = vmatmul.mubr.f32.gmra.mrb[0].mxu0 %v3588
        %v3796 = vpop.f32.mrb[0].mxu0
        %v3797 = vadd.f32 %v3647, %v3796
        %v3798 = vpop.f32.mrb[0].mxu0
        %v3799 = vadd.f32 %v3647, %v3798
        %3800 = vmatprep.mubr.f32.mxu0 0.0
        %3801 = vmatmul.mubr.f32.gmra.mrb[0].mxu0 %v3589
        %v3802 = vpop.f32.mrb[0].mxu0
        %v3803 = vadd.f32 %v3652, %v3802
        %v3804 = vpop.f32.mrb[0].mxu0
        %v3805 = vadd.f32 %v3652, %v3804
        %3806 = vmatprep.mubr.f32.mxu0 0.0
        %3807 = vmatmul.mubr.f32.gmra.mrb[0].mxu0 %v3590
        %v3808 = vpop.f32.mrb[0].mxu0
        %v3809 = vadd.f32 %v3657, %v3808
        %v3810 = vpop.f32.mrb[0].mxu0
        %v3811 = vadd.f32 %v3657, %v3810
        %3812 = vmatprep.mubr.f32.mxu0 0.0
        %3813 = vmatmul.mubr.f32.gmra.mrb[0].mxu0 %v3591
        %v3814 = vpop.f32.mrb[0].mxu0
        %v3815 = vadd.f32 %v3662, %v3814
        %v3816 = vpop.f32.mrb[0].mxu0
        %v3817 = vadd.f32 %v3662, %v3816
        %3818 = vmatprep.mubr.f32.mxu0 0.0
        %3819 = vmatmul.mubr.f32.gmra.mrb[0].mxu0 %v3592
        %v3820 = vpop.f32.mrb[0].mxu0
        %v3821 = vadd.f32 %v3667, %v3820
        %v3822 = vpop.f32.mrb[0].mxu0
        %v3823 = vadd.f32 %v3667, %v3822
        %3824 = vmatprep.mubr.f32.mxu0 0.0
        %3825 = vmatmul.mubr.f32.gmra.mrb[0].mxu0 %v3593
        %v3826 = vpop.f32.mrb[0].mxu0
        %v3827 = vadd.f32 %v3672, %v3826
        %v3828 = vpop.f32.mrb[0].mxu0
        %v3829 = vadd.f32 %v3672, %v3828
        %3830 = vmatprep.mubr.f32.mxu0 0.0
        %3831 = vmatmul.mubr.f32.gmra.mrb[0].mxu0 %v3594
        %v3832 = vpop.f32.mrb[0].mxu0
        %v3833 = vadd.f32 %v3677, %v3832
        %v3834 = vpop.f32.mrb[0].mxu0
        %v3835 = vadd.f32 %v3677, %v3834
        %3836 = vmatprep.mubr.f32.mxu0 0.0
        %3837 = vmatmul.mubr.f32.gmra.mrb[0].mxu0 %v3595
        %v3838 = vpop.f32.mrb[0].mxu0
        %v3839 = vadd.f32 %v3682, %v3838
        %v3840 = vpop.f32.mrb[0].mxu0
        %v3841 = vadd.f32 %v3682, %v3840
        %3842 = vmatprep.mubr.f32.mxu0 0.0
        %3843 = vmatmul.mubr.f32.gmra.mrb[0].mxu0 %v3596
        %v3844 = vpop.f32.mrb[0].mxu0
        %v3845 = vadd.f32 %v3687, %v3844
        %v3846 = vpop.f32.mrb[0].mxu0
        %v3847 = vadd.f32 %v3687, %v3846
        %3848 = vmatprep.mubr.f32.mxu0 0.0
        %3849 = vmatmul.mubr.f32.gmra.mrb[0].mxu0 %v3597
        %v3850 = vpop.f32.mrb[0].mxu0
        %v3851 = vadd.f32 %v3692, %v3850
        %v3852 = vpop.f32.mrb[0].mxu0
        %v3853 = vadd.f32 %v3692, %v3852
        %3854 = vdwg.mxu0
        %3855 = vmatprep.subr.mxu0 %v3329
        %3856 = vmatpush1.msra.mxu0 %v3328
        %3857 = vmatprep.subr.mxu0 %v3345
        %3858 = vmatpush1.msra.mxu0 %v3344
        %3859 = vmatprep.subr.mxu0 %v3361
        %3860 = vmatpush1.msra.mxu0 %v3360
        %3861 = vmatprep.subr.mxu0 %v3377
        %3862 = vmatpush1.msra.mxu0 %v3376
        %3863 = vmatprep.subr.mxu0 %v3393
        %3864 = vmatpush1.msra.mxu0 %v3392
        %3865 = vmatprep.subr.mxu0 %v3409
        %3866 = vmatpush1.msra.mxu0 %v3408
        %3867 = vmatprep.subr.mxu0 %v3425
        %3868 = vmatpush1.msra.mxu0 %v3424
        %3869 = vmatprep.subr.mxu0 %v3441
        %3870 = vmatpush1.msra.mxu0 %v3440
        %3871 = vmatprep.subr.mxu0 %v3457
        %3872 = vmatpush1.msra.mxu0 %v3456
        %3873 = vmatprep.subr.mxu0 %v3473
        %3874 = vmatpush1.msra.mxu0 %v3472
        %3875 = vmatprep.subr.mxu0 %v3489
        %3876 = vmatpush1.msra.mxu0 %v3488
        %3877 = vmatprep.subr.mxu0 %v3505
        %3878 = vmatpush1.msra.mxu0 %v3504
        %3879 = vmatprep.subr.mxu0 %v3521
        %3880 = vmatpush1.msra.mxu0 %v3520
        %3881 = vmatprep.subr.mxu0 %v3537
        %3882 = vmatpush1.msra.mxu0 %v3536
        %3883 = vmatprep.subr.mxu0 %v3553
        %3884 = vmatpush1.msra.mxu0 %v3552
        %3885 = vmatprep.subr.mxu0 %v3569
        %3886 = vmatpush1.msra.mxu0 %v3568
        %3887 = vmatprep.subr.mxu0 0.0
        %3888 = vmatpush1.msra.mxu0 0.0
        %3889 = vmatprep.subr.mxu0 0.0
        %3890 = vmatpush1.msra.mxu0 0.0
        %3891 = vmatprep.subr.mxu0 0.0
        %3892 = vmatpush1.msra.mxu0 0.0
        %3893 = vmatprep.subr.mxu0 0.0
        %3894 = vmatpush1.msra.mxu0 0.0
        %3895 = vmatprep.subr.mxu0 0.0
        %3896 = vmatpush1.msra.mxu0 0.0
        %3897 = vmatprep.subr.mxu0 0.0
        %3898 = vmatpush1.msra.mxu0 0.0
        %3899 = vmatprep.subr.mxu0 0.0
        %3900 = vmatpush1.msra.mxu0 0.0
        %3901 = vmatprep.subr.mxu0 0.0
        %3902 = vmatpush1.msra.mxu0 0.0
        %3903 = vmatprep.subr.mxu0 0.0
        %3904 = vmatpush1.msra.mxu0 0.0
        %3905 = vmatprep.subr.mxu0 0.0
        %3906 = vmatpush1.msra.mxu0 0.0
        %3907 = vmatprep.subr.mxu0 0.0
        %3908 = vmatpush1.msra.mxu0 0.0
        %3909 = vmatprep.subr.mxu0 0.0
        %3910 = vmatpush1.msra.mxu0 0.0
        %3911 = vmatprep.subr.mxu0 0.0
        %3912 = vmatpush1.msra.mxu0 0.0
        %3913 = vmatprep.subr.mxu0 0.0
        %3914 = vmatpush1.msra.mxu0 0.0
        %3915 = vmatprep.subr.mxu0 0.0
        %3916 = vmatpush1.msra.mxu0 0.0
        %3917 = vmatprep.subr.mxu0 0.0
        %3918 = vmatpush1.msra.mxu0 0.0
        %3919 = vmatprep.mubr.f32.mxu0 0.0
        %3920 = vmatmul.mubr.f32.gmra.mrb[0].mxu0 %v3582
        %v3921 = vpop.f32.mrb[0].mxu0
        %v3922 = vadd.f32 %v3617, %v3921
        %v3923 = vpop.f32.mrb[0].mxu0
        %v3924 = vadd.f32 %v3617, %v3923
        %3925 = vmatprep.mubr.f32.mxu0 0.0
        %3926 = vmatmul.mubr.f32.gmra.mrb[0].mxu0 %v3583
        %v3927 = vpop.f32.mrb[0].mxu0
        %v3928 = vadd.f32 %v3622, %v3927
        %v3929 = vpop.f32.mrb[0].mxu0
        %v3930 = vadd.f32 %v3622, %v3929
        %3931 = vmatprep.mubr.f32.mxu0 0.0
        %3932 = vmatmul.mubr.f32.gmra.mrb[0].mxu0 %v3584
        %v3933 = vpop.f32.mrb[0].mxu0
        %v3934 = vadd.f32 %v3627, %v3933
        %v3935 = vpop.f32.mrb[0].mxu0
        %v3936 = vadd.f32 %v3627, %v3935
        %3937 = vmatprep.mubr.f32.mxu0 0.0
        %3938 = vmatmul.mubr.f32.gmra.mrb[0].mxu0 %v3585
        %v3939 = vpop.f32.mrb[0].mxu0
        %v3940 = vadd.f32 %v3632, %v3939
        %v3941 = vpop.f32.mrb[0].mxu0
        %v3942 = vadd.f32 %v3632, %v3941
        %3943 = vmatprep.mubr.f32.mxu0 0.0
        %3944 = vmatmul.mubr.f32.gmra.mrb[0].mxu0 %v3586
        %v3945 = vpop.f32.mrb[0].mxu0
        %v3946 = vadd.f32 %v3637, %v3945
        %v3947 = vpop.f32.mrb[0].mxu0
        %v3948 = vadd.f32 %v3637, %v3947
        %3949 = vmatprep.mubr.f32.mxu0 0.0
        %3950 = vmatmul.mubr.f32.gmra.mrb[0].mxu0 %v3587
        %v3951 = vpop.f32.mrb[0].mxu0
        %v3952 = vadd.f32 %v3642, %v3951
        %v3953 = vpop.f32.mrb[0].mxu0
        %v3954 = vadd.f32 %v3642, %v3953
        %3955 = vmatprep.mubr.f32.mxu0 0.0
        %3956 = vmatmul.mubr.f32.gmra.mrb[0].mxu0 %v3588
        %v3957 = vpop.f32.mrb[0].mxu0
        %v3958 = vadd.f32 %v3647, %v3957
        %v3959 = vpop.f32.mrb[0].mxu0
        %v3960 = vadd.f32 %v3647, %v3959
        %3961 = vmatprep.mubr.f32.mxu0 0.0
        %3962 = vmatmul.mubr.f32.gmra.mrb[0].mxu0 %v3589
        %v3963 = vpop.f32.mrb[0].mxu0
        %v3964 = vadd.f32 %v3652, %v3963
        %v3965 = vpop.f32.mrb[0].mxu0
        %v3966 = vadd.f32 %v3652, %v3965
        %3967 = vmatprep.mubr.f32.mxu0 0.0
        %3968 = vmatmul.mubr.f32.gmra.mrb[0].mxu0 %v3590
        %v3969 = vpop.f32.mrb[0].mxu0
        %v3970 = vadd.f32 %v3657, %v3969
        %v3971 = vpop.f32.mrb[0].mxu0
        %v3972 = vadd.f32 %v3657, %v3971
        %3973 = vmatprep.mubr.f32.mxu0 0.0
        %3974 = vmatmul.mubr.f32.gmra.mrb[0].mxu0 %v3591
        %v3975 = vpop.f32.mrb[0].mxu0
        %v3976 = vadd.f32 %v3662, %v3975
        %v3977 = vpop.f32.mrb[0].mxu0
        %v3978 = vadd.f32 %v3662, %v3977
        %3979 = vmatprep.mubr.f32.mxu0 0.0
        %3980 = vmatmul.mubr.f32.gmra.mrb[0].mxu0 %v3592
        %v3981 = vpop.f32.mrb[0].mxu0
        %v3982 = vadd.f32 %v3667, %v3981
        %v3983 = vpop.f32.mrb[0].mxu0
        %v3984 = vadd.f32 %v3667, %v3983
        %3985 = vmatprep.mubr.f32.mxu0 0.0
        %3986 = vmatmul.mubr.f32.gmra.mrb[0].mxu0 %v3593
        %v3987 = vpop.f32.mrb[0].mxu0
        %v3988 = vadd.f32 %v3672, %v3987
        %v3989 = vpop.f32.mrb[0].mxu0
        %v3990 = vadd.f32 %v3672, %v3989
        %3991 = vmatprep.mubr.f32.mxu0 0.0
        %3992 = vmatmul.mubr.f32.gmra.mrb[0].mxu0 %v3594
        %v3993 = vpop.f32.mrb[0].mxu0
        %v3994 = vadd.f32 %v3677, %v3993
        %v3995 = vpop.f32.mrb[0].mxu0
        %v3996 = vadd.f32 %v3677, %v3995
        %3997 = vmatprep.mubr.f32.mxu0 0.0
        %3998 = vmatmul.mubr.f32.gmra.mrb[0].mxu0 %v3595
        %v3999 = vpop.f32.mrb[0].mxu0
        %v4000 = vadd.f32 %v3682, %v3999
        %v4001 = vpop.f32.mrb[0].mxu0
        %v4002 = vadd.f32 %v3682, %v4001
        %4003 = vmatprep.mubr.f32.mxu0 0.0
        %4004 = vmatmul.mubr.f32.gmra.mrb[0].mxu0 %v3596
        %v4005 = vpop.f32.mrb[0].mxu0
        %v4006 = vadd.f32 %v3687, %v4005
        %v4007 = vpop.f32.mrb[0].mxu0
        %v4008 = vadd.f32 %v3687, %v4007
        %4009 = vmatprep.mubr.f32.mxu0 0.0
        %4010 = vmatmul.mubr.f32.gmra.mrb[0].mxu0 %v3597
        %v4011 = vpop.f32.mrb[0].mxu0
        %v4012 = vadd.f32 %v3692, %v4011
        %v4013 = vpop.f32.mrb[0].mxu0
        %v4014 = vadd.f32 %v3692, %v4013
        %4015 = vdwg.mxu0
        %4016 = vmatprep.subr.mxu0 %v3331
        %4017 = vmatpush1.msra.mxu0 %v3330
        %4018 = vmatprep.subr.mxu0 %v3347
        %4019 = vmatpush1.msra.mxu0 %v3346
        %4020 = vmatprep.subr.mxu0 %v3363
        %4021 = vmatpush1.msra.mxu0 %v3362
        %4022 = vmatprep.subr.mxu0 %v3379
        %4023 = vmatpush1.msra.mxu0 %v3378
        %4024 = vmatprep.subr.mxu0 %v3395
        %4025 = vmatpush1.msra.mxu0 %v3394
        %4026 = vmatprep.subr.mxu0 %v3411
        %4027 = vmatpush1.msra.mxu0 %v3410
        %4028 = vmatprep.subr.mxu0 %v3427
        %4029 = vmatpush1.msra.mxu0 %v3426
        %4030 = vmatprep.subr.mxu0 %v3443
        %4031 = vmatpush1.msra.mxu0 %v3442
        %4032 = vmatprep.subr.mxu0 %v3459
        %4033 = vmatpush1.msra.mxu0 %v3458
        %4034 = vmatprep.subr.mxu0 %v3475
        %4035 = vmatpush1.msra.mxu0 %v3474
        %4036 = vmatprep.subr.mxu0 %v3491
        %4037 = vmatpush1.msra.mxu0 %v3490
        %4038 = vmatprep.subr.mxu0 %v3507
        %4039 = vmatpush1.msra.mxu0 %v3506
        %4040 = vmatprep.subr.mxu0 %v3523
        %4041 = vmatpush1.msra.mxu0 %v3522
        %4042 = vmatprep.subr.mxu0 %v3539
        %4043 = vmatpush1.msra.mxu0 %v3538
        %4044 = vmatprep.subr.mxu0 %v3555
        %4045 = vmatpush1.msra.mxu0 %v3554
        %4046 = vmatprep.subr.mxu0 %v3571
        %4047 = vmatpush1.msra.mxu0 %v3570
        %4048 = vmatprep.subr.mxu0 0.0
        %4049 = vmatpush1.msra.mxu0 0.0
        %4050 = vmatprep.subr.mxu0 0.0
        %4051 = vmatpush1.msra.mxu0 0.0
        %4052 = vmatprep.subr.mxu0 0.0
        %4053 = vmatpush1.msra.mxu0 0.0
        %4054 = vmatprep.subr.mxu0 0.0
        %4055 = vmatpush1.msra.mxu0 0.0
        %4056 = vmatprep.subr.mxu0 0.0
        %4057 = vmatpush1.msra.mxu0 0.0
        %4058 = vmatprep.subr.mxu0 0.0
        %4059 = vmatpush1.msra.mxu0 0.0
        %4060 = vmatprep.subr.mxu0 0.0
        %4061 = vmatpush1.msra.mxu0 0.0
        %4062 = vmatprep.subr.mxu0 0.0
        %4063 = vmatpush1.msra.mxu0 0.0
        %4064 = vmatprep.subr.mxu0 0.0
        %4065 = vmatpush1.msra.mxu0 0.0
        %4066 = vmatprep.subr.mxu0 0.0
        %4067 = vmatpush1.msra.mxu0 0.0
        %4068 = vmatprep.subr.mxu0 0.0
        %4069 = vmatpush1.msra.mxu0 0.0
        %4070 = vmatprep.subr.mxu0 0.0
        %4071 = vmatpush1.msra.mxu0 0.0
        %4072 = vmatprep.subr.mxu0 0.0
        %4073 = vmatpush1.msra.mxu0 0.0
        %4074 = vmatprep.subr.mxu0 0.0
        %4075 = vmatpush1.msra.mxu0 0.0
        %4076 = vmatprep.subr.mxu0 0.0
        %4077 = vmatpush1.msra.mxu0 0.0
        %4078 = vmatprep.subr.mxu0 0.0
        %4079 = vmatpush1.msra.mxu0 0.0
        %4080 = vmatprep.mubr.f32.mxu0 0.0
        %4081 = vmatmul.mubr.f32.gmra.mrb[0].mxu0 %v3582
        %v4082 = vpop.f32.mrb[0].mxu0
        %v4083 = vadd.f32 %v3617, %v4082
        %v4084 = vpop.f32.mrb[0].mxu0
        %v4085 = vadd.f32 %v3617, %v4084
        %4086 = vmatprep.mubr.f32.mxu0 0.0
        %4087 = vmatmul.mubr.f32.gmra.mrb[0].mxu0 %v3583
        %v4088 = vpop.f32.mrb[0].mxu0
        %v4089 = vadd.f32 %v3622, %v4088
        %v4090 = vpop.f32.mrb[0].mxu0
        %v4091 = vadd.f32 %v3622, %v4090
        %4092 = vmatprep.mubr.f32.mxu0 0.0
        %4093 = vmatmul.mubr.f32.gmra.mrb[0].mxu0 %v3584
        %v4094 = vpop.f32.mrb[0].mxu0
        %v4095 = vadd.f32 %v3627, %v4094
        %v4096 = vpop.f32.mrb[0].mxu0
        %v4097 = vadd.f32 %v3627, %v4096
        %4098 = vmatprep.mubr.f32.mxu0 0.0
        %4099 = vmatmul.mubr.f32.gmra.mrb[0].mxu0 %v3585
        %v4100 = vpop.f32.mrb[0].mxu0
        %v4101 = vadd.f32 %v3632, %v4100
        %v4102 = vpop.f32.mrb[0].mxu0
        %v4103 = vadd.f32 %v3632, %v4102
        %4104 = vmatprep.mubr.f32.mxu0 0.0
        %4105 = vmatmul.mubr.f32.gmra.mrb[0].mxu0 %v3586
        %v4106 = vpop.f32.mrb[0].mxu0
        %v4107 = vadd.f32 %v3637, %v4106
        %v4108 = vpop.f32.mrb[0].mxu0
        %v4109 = vadd.f32 %v3637, %v4108
        %4110 = vmatprep.mubr.f32.mxu0 0.0
        %4111 = vmatmul.mubr.f32.gmra.mrb[0].mxu0 %v3587
        %v4112 = vpop.f32.mrb[0].mxu0
        %v4113 = vadd.f32 %v3642, %v4112
        %v4114 = vpop.f32.mrb[0].mxu0
        %v4115 = vadd.f32 %v3642, %v4114
        %4116 = vmatprep.mubr.f32.mxu0 0.0
        %4117 = vmatmul.mubr.f32.gmra.mrb[0].mxu0 %v3588
        %v4118 = vpop.f32.mrb[0].mxu0
        %v4119 = vadd.f32 %v3647, %v4118
        %v4120 = vpop.f32.mrb[0].mxu0
        %v4121 = vadd.f32 %v3647, %v4120
        %4122 = vmatprep.mubr.f32.mxu0 0.0
        %4123 = vmatmul.mubr.f32.gmra.mrb[0].mxu0 %v3589
        %v4124 = vpop.f32.mrb[0].mxu0
        %v4125 = vadd.f32 %v3652, %v4124
        %v4126 = vpop.f32.mrb[0].mxu0
        %v4127 = vadd.f32 %v3652, %v4126
        %4128 = vmatprep.mubr.f32.mxu0 0.0
        %4129 = vmatmul.mubr.f32.gmra.mrb[0].mxu0 %v3590
        %v4130 = vpop.f32.mrb[0].mxu0
        %v4131 = vadd.f32 %v3657, %v4130
        %v4132 = vpop.f32.mrb[0].mxu0
        %v4133 = vadd.f32 %v3657, %v4132
        %4134 = vmatprep.mubr.f32.mxu0 0.0
        %4135 = vmatmul.mubr.f32.gmra.mrb[0].mxu0 %v3591
        %v4136 = vpop.f32.mrb[0].mxu0
        %v4137 = vadd.f32 %v3662, %v4136
        %v4138 = vpop.f32.mrb[0].mxu0
        %v4139 = vadd.f32 %v3662, %v4138
        %4140 = vmatprep.mubr.f32.mxu0 0.0
        %4141 = vmatmul.mubr.f32.gmra.mrb[0].mxu0 %v3592
        %v4142 = vpop.f32.mrb[0].mxu0
        %v4143 = vadd.f32 %v3667, %v4142
        %v4144 = vpop.f32.mrb[0].mxu0
        %v4145 = vadd.f32 %v3667, %v4144
        %4146 = vmatprep.mubr.f32.mxu0 0.0
        %4147 = vmatmul.mubr.f32.gmra.mrb[0].mxu0 %v3593
        %v4148 = vpop.f32.mrb[0].mxu0
        %v4149 = vadd.f32 %v3672, %v4148
        %v4150 = vpop.f32.mrb[0].mxu0
        %v4151 = vadd.f32 %v3672, %v4150
        %4152 = vmatprep.mubr.f32.mxu0 0.0
        %4153 = vmatmul.mubr.f32.gmra.mrb[0].mxu0 %v3594
        %v4154 = vpop.f32.mrb[0].mxu0
        %v4155 = vadd.f32 %v3677, %v4154
        %v4156 = vpop.f32.mrb[0].mxu0
        %v4157 = vadd.f32 %v3677, %v4156
        %4158 = vmatprep.mubr.f32.mxu0 0.0
        %4159 = vmatmul.mubr.f32.gmra.mrb[0].mxu0 %v3595
        %v4160 = vpop.f32.mrb[0].mxu0
        %v4161 = vadd.f32 %v3682, %v4160
        %v4162 = vpop.f32.mrb[0].mxu0
        %v4163 = vadd.f32 %v3682, %v4162
        %4164 = vmatprep.mubr.f32.mxu0 0.0
        %4165 = vmatmul.mubr.f32.gmra.mrb[0].mxu0 %v3596
        %v4166 = vpop.f32.mrb[0].mxu0
        %v4167 = vadd.f32 %v3687, %v4166
        %v4168 = vpop.f32.mrb[0].mxu0
        %v4169 = vadd.f32 %v3687, %v4168
        %4170 = vmatprep.mubr.f32.mxu0 0.0
        %4171 = vmatmul.mubr.f32.gmra.mrb[0].mxu0 %v3597
        %v4172 = vpop.f32.mrb[0].mxu0
        %v4173 = vadd.f32 %v3692, %v4172
        %v4174 = vpop.f32.mrb[0].mxu0
        %v4175 = vadd.f32 %v3692, %v4174
        %4176 = vdwg.mxu0
        %4177 = vmatprep.subr.mxu0 %v3333
        %4178 = vmatpush1.msra.mxu0 %v3332
        %4179 = vmatprep.subr.mxu0 %v3349
        %4180 = vmatpush1.msra.mxu0 %v3348
        %4181 = vmatprep.subr.mxu0 %v3365
        %4182 = vmatpush1.msra.mxu0 %v3364
        %4183 = vmatprep.subr.mxu0 %v3381
        %4184 = vmatpush1.msra.mxu0 %v3380
        %4185 = vmatprep.subr.mxu0 %v3397
        %4186 = vmatpush1.msra.mxu0 %v3396
        %4187 = vmatprep.subr.mxu0 %v3413
        %4188 = vmatpush1.msra.mxu0 %v3412
        %4189 = vmatprep.subr.mxu0 %v3429
        %4190 = vmatpush1.msra.mxu0 %v3428
        %4191 = vmatprep.subr.mxu0 %v3445
        %4192 = vmatpush1.msra.mxu0 %v3444
        %4193 = vmatprep.subr.mxu0 %v3461
        %4194 = vmatpush1.msra.mxu0 %v3460
        %4195 = vmatprep.subr.mxu0 %v3477
        %4196 = vmatpush1.msra.mxu0 %v3476
        %4197 = vmatprep.subr.mxu0 %v3493
        %4198 = vmatpush1.msra.mxu0 %v3492
        %4199 = vmatprep.subr.mxu0 %v3509
        %4200 = vmatpush1.msra.mxu0 %v3508
        %4201 = vmatprep.subr.mxu0 %v3525
        %4202 = vmatpush1.msra.mxu0 %v3524
        %4203 = vmatprep.subr.mxu0 %v3541
        %4204 = vmatpush1.msra.mxu0 %v3540
        %4205 = vmatprep.subr.mxu0 %v3557
        %4206 = vmatpush1.msra.mxu0 %v3556
        %4207 = vmatprep.subr.mxu0 %v3573
        %4208 = vmatpush1.msra.mxu0 %v3572
        %4209 = vmatprep.subr.mxu0 0.0
        %4210 = vmatpush1.msra.mxu0 0.0
        %4211 = vmatprep.subr.mxu0 0.0
        %4212 = vmatpush1.msra.mxu0 0.0
        %4213 = vmatprep.subr.mxu0 0.0
        %4214 = vmatpush1.msra.mxu0 0.0
        %4215 = vmatprep.subr.mxu0 0.0
        %4216 = vmatpush1.msra.mxu0 0.0
        %4217 = vmatprep.subr.mxu0 0.0
        %4218 = vmatpush1.msra.mxu0 0.0
        %4219 = vmatprep.subr.mxu0 0.0
        %4220 = vmatpush1.msra.mxu0 0.0
        %4221 = vmatprep.subr.mxu0 0.0
        %4222 = vmatpush1.msra.mxu0 0.0
        %4223 = vmatprep.subr.mxu0 0.0
        %4224 = vmatpush1.msra.mxu0 0.0
        %4225 = vmatprep.subr.mxu0 0.0
        %4226 = vmatpush1.msra.mxu0 0.0
        %4227 = vmatprep.subr.mxu0 0.0
        %4228 = vmatpush1.msra.mxu0 0.0
        %4229 = vmatprep.subr.mxu0 0.0
        %4230 = vmatpush1.msra.mxu0 0.0
        %4231 = vmatprep.subr.mxu0 0.0
        %4232 = vmatpush1.msra.mxu0 0.0
        %4233 = vmatprep.subr.mxu0 0.0
        %4234 = vmatpush1.msra.mxu0 0.0
        %4235 = vmatprep.subr.mxu0 0.0
        %4236 = vmatpush1.msra.mxu0 0.0
        %4237 = vmatprep.subr.mxu0 0.0
        %4238 = vmatpush1.msra.mxu0 0.0
        %4239 = vmatprep.subr.mxu0 0.0
        %4240 = vmatpush1.msra.mxu0 0.0
        %4241 = vmatprep.mubr.f32.mxu0 0.0
        %4242 = vmatmul.mubr.f32.gmra.mrb[0].mxu0 %v3582
        %v4243 = vpop.f32.mrb[0].mxu0
        %v4244 = vadd.f32 %v3617, %v4243
        %v4245 = vpop.f32.mrb[0].mxu0
        %v4246 = vadd.f32 %v3617, %v4245
        %4247 = vmatprep.mubr.f32.mxu0 0.0
        %4248 = vmatmul.mubr.f32.gmra.mrb[0].mxu0 %v3583
        %v4249 = vpop.f32.mrb[0].mxu0
        %v4250 = vadd.f32 %v3622, %v4249
        %v4251 = vpop.f32.mrb[0].mxu0
        %v4252 = vadd.f32 %v3622, %v4251
        %4253 = vmatprep.mubr.f32.mxu0 0.0
        %4254 = vmatmul.mubr.f32.gmra.mrb[0].mxu0 %v3584
        %v4255 = vpop.f32.mrb[0].mxu0
        %v4256 = vadd.f32 %v3627, %v4255
        %v4257 = vpop.f32.mrb[0].mxu0
        %v4258 = vadd.f32 %v3627, %v4257
        %4259 = vmatprep.mubr.f32.mxu0 0.0
        %4260 = vmatmul.mubr.f32.gmra.mrb[0].mxu0 %v3585
        %v4261 = vpop.f32.mrb[0].mxu0
        %v4262 = vadd.f32 %v3632, %v4261
        %v4263 = vpop.f32.mrb[0].mxu0
        %v4264 = vadd.f32 %v3632, %v4263
        %4265 = vmatprep.mubr.f32.mxu0 0.0
        %4266 = vmatmul.mubr.f32.gmra.mrb[0].mxu0 %v3586
        %v4267 = vpop.f32.mrb[0].mxu0
        %v4268 = vadd.f32 %v3637, %v4267
        %v4269 = vpop.f32.mrb[0].mxu0
        %v4270 = vadd.f32 %v3637, %v4269
        %4271 = vmatprep.mubr.f32.mxu0 0.0
        %4272 = vmatmul.mubr.f32.gmra.mrb[0].mxu0 %v3587
        %v4273 = vpop.f32.mrb[0].mxu0
        %v4274 = vadd.f32 %v3642, %v4273
        %v4275 = vpop.f32.mrb[0].mxu0
        %v4276 = vadd.f32 %v3642, %v4275
        %4277 = vmatprep.mubr.f32.mxu0 0.0
        %4278 = vmatmul.mubr.f32.gmra.mrb[0].mxu0 %v3588
        %v4279 = vpop.f32.mrb[0].mxu0
        %v4280 = vadd.f32 %v3647, %v4279
        %v4281 = vpop.f32.mrb[0].mxu0
        %v4282 = vadd.f32 %v3647, %v4281
        %4283 = vmatprep.mubr.f32.mxu0 0.0
        %4284 = vmatmul.mubr.f32.gmra.mrb[0].mxu0 %v3589
        %v4285 = vpop.f32.mrb[0].mxu0
        %v4286 = vadd.f32 %v3652, %v4285
        %v4287 = vpop.f32.mrb[0].mxu0
        %v4288 = vadd.f32 %v3652, %v4287
        %4289 = vmatprep.mubr.f32.mxu0 0.0
        %4290 = vmatmul.mubr.f32.gmra.mrb[0].mxu0 %v3590
        %v4291 = vpop.f32.mrb[0].mxu0
        %v4292 = vadd.f32 %v3657, %v4291
        %v4293 = vpop.f32.mrb[0].mxu0
        %v4294 = vadd.f32 %v3657, %v4293
        %4295 = vmatprep.mubr.f32.mxu0 0.0
        %4296 = vmatmul.mubr.f32.gmra.mrb[0].mxu0 %v3591
        %v4297 = vpop.f32.mrb[0].mxu0
        %v4298 = vadd.f32 %v3662, %v4297
        %v4299 = vpop.f32.mrb[0].mxu0
        %v4300 = vadd.f32 %v3662, %v4299
        %4301 = vmatprep.mubr.f32.mxu0 0.0
        %4302 = vmatmul.mubr.f32.gmra.mrb[0].mxu0 %v3592
        %v4303 = vpop.f32.mrb[0].mxu0
        %v4304 = vadd.f32 %v3667, %v4303
        %v4305 = vpop.f32.mrb[0].mxu0
        %v4306 = vadd.f32 %v3667, %v4305
        %4307 = vmatprep.mubr.f32.mxu0 0.0
        %4308 = vmatmul.mubr.f32.gmra.mrb[0].mxu0 %v3593
        %v4309 = vpop.f32.mrb[0].mxu0
        %v4310 = vadd.f32 %v3672, %v4309
        %v4311 = vpop.f32.mrb[0].mxu0
        %v4312 = vadd.f32 %v3672, %v4311
        %4313 = vmatprep.mubr.f32.mxu0 0.0
        %4314 = vmatmul.mubr.f32.gmra.mrb[0].mxu0 %v3594
        %v4315 = vpop.f32.mrb[0].mxu0
        %v4316 = vadd.f32 %v3677, %v4315
        %v4317 = vpop.f32.mrb[0].mxu0
        %v4318 = vadd.f32 %v3677, %v4317
        %4319 = vmatprep.mubr.f32.mxu0 0.0
        %4320 = vmatmul.mubr.f32.gmra.mrb[0].mxu0 %v3595
        %v4321 = vpop.f32.mrb[0].mxu0
        %v4322 = vadd.f32 %v3682, %v4321
        %v4323 = vpop.f32.mrb[0].mxu0
        %v4324 = vadd.f32 %v3682, %v4323
        %4325 = vmatprep.mubr.f32.mxu0 0.0
        %4326 = vmatmul.mubr.f32.gmra.mrb[0].mxu0 %v3596
        %v4327 = vpop.f32.mrb[0].mxu0
        %v4328 = vadd.f32 %v3687, %v4327
        %v4329 = vpop.f32.mrb[0].mxu0
        %v4330 = vadd.f32 %v3687, %v4329
        %4331 = vmatprep.mubr.f32.mxu0 0.0
        %4332 = vmatmul.mubr.f32.gmra.mrb[0].mxu0 %v3597
        %v4333 = vpop.f32.mrb[0].mxu0
        %v4334 = vadd.f32 %v3692, %v4333
        %v4335 = vpop.f32.mrb[0].mxu0
        %v4336 = vadd.f32 %v3692, %v4335
        %4337 = vdwg.mxu0
        %4338 = vmatprep.subr.mxu0 %v3335
        %4339 = vmatpush1.msra.mxu0 %v3334
        %4340 = vmatprep.subr.mxu0 %v3351
        %4341 = vmatpush1.msra.mxu0 %v3350
        %4342 = vmatprep.subr.mxu0 %v3367
        %4343 = vmatpush1.msra.mxu0 %v3366
        %4344 = vmatprep.subr.mxu0 %v3383
        %4345 = vmatpush1.msra.mxu0 %v3382
        %4346 = vmatprep.subr.mxu0 %v3399
        %4347 = vmatpush1.msra.mxu0 %v3398
        %4348 = vmatprep.subr.mxu0 %v3415
        %4349 = vmatpush1.msra.mxu0 %v3414
        %4350 = vmatprep.subr.mxu0 %v3431
        %4351 = vmatpush1.msra.mxu0 %v3430
        %4352 = vmatprep.subr.mxu0 %v3447
        %4353 = vmatpush1.msra.mxu0 %v3446
        %4354 = vmatprep.subr.mxu0 %v3463
        %4355 = vmatpush1.msra.mxu0 %v3462
        %4356 = vmatprep.subr.mxu0 %v3479
        %4357 = vmatpush1.msra.mxu0 %v3478
        %4358 = vmatprep.subr.mxu0 %v3495
        %4359 = vmatpush1.msra.mxu0 %v3494
        %4360 = vmatprep.subr.mxu0 %v3511
        %4361 = vmatpush1.msra.mxu0 %v3510
        %4362 = vmatprep.subr.mxu0 %v3527
        %4363 = vmatpush1.msra.mxu0 %v3526
        %4364 = vmatprep.subr.mxu0 %v3543
        %4365 = vmatpush1.msra.mxu0 %v3542
        %4366 = vmatprep.subr.mxu0 %v3559
        %4367 = vmatpush1.msra.mxu0 %v3558
        %4368 = vmatprep.subr.mxu0 %v3575
        %4369 = vmatpush1.msra.mxu0 %v3574
        %4370 = vmatprep.subr.mxu0 0.0
        %4371 = vmatpush1.msra.mxu0 0.0
        %4372 = vmatprep.subr.mxu0 0.0
        %4373 = vmatpush1.msra.mxu0 0.0
        %4374 = vmatprep.subr.mxu0 0.0
        %4375 = vmatpush1.msra.mxu0 0.0
        %4376 = vmatprep.subr.mxu0 0.0
        %4377 = vmatpush1.msra.mxu0 0.0
        %4378 = vmatprep.subr.mxu0 0.0
        %4379 = vmatpush1.msra.mxu0 0.0
        %4380 = vmatprep.subr.mxu0 0.0
        %4381 = vmatpush1.msra.mxu0 0.0
        %4382 = vmatprep.subr.mxu0 0.0
        %4383 = vmatpush1.msra.mxu0 0.0
        %4384 = vmatprep.subr.mxu0 0.0
        %4385 = vmatpush1.msra.mxu0 0.0
        %4386 = vmatprep.subr.mxu0 0.0
        %4387 = vmatpush1.msra.mxu0 0.0
        %4388 = vmatprep.subr.mxu0 0.0
        %4389 = vmatpush1.msra.mxu0 0.0
        %4390 = vmatprep.subr.mxu0 0.0
        %4391 = vmatpush1.msra.mxu0 0.0
        %4392 = vmatprep.subr.mxu0 0.0
        %4393 = vmatpush1.msra.mxu0 0.0
        %4394 = vmatprep.subr.mxu0 0.0
        %4395 = vmatpush1.msra.mxu0 0.0
        %4396 = vmatprep.subr.mxu0 0.0
        %4397 = vmatpush1.msra.mxu0 0.0
        %4398 = vmatprep.subr.mxu0 0.0
        %4399 = vmatpush1.msra.mxu0 0.0
        %4400 = vmatprep.subr.mxu0 0.0
        %4401 = vmatpush1.msra.mxu0 0.0
        %4402 = vmatprep.mubr.f32.mxu0 0.0
        %4403 = vmatmul.mubr.f32.gmra.mrb[0].mxu0 %v3582
        %v4404 = vpop.f32.mrb[0].mxu0
        %v4405 = vadd.f32 %v3617, %v4404
        %v4406 = vpop.f32.mrb[0].mxu0
        %v4407 = vadd.f32 %v3617, %v4406
        %4408 = vmatprep.mubr.f32.mxu0 0.0
        %4409 = vmatmul.mubr.f32.gmra.mrb[0].mxu0 %v3583
        %v4410 = vpop.f32.mrb[0].mxu0
        %v4411 = vadd.f32 %v3622, %v4410
        %v4412 = vpop.f32.mrb[0].mxu0
        %v4413 = vadd.f32 %v3622, %v4412
        %4414 = vmatprep.mubr.f32.mxu0 0.0
        %4415 = vmatmul.mubr.f32.gmra.mrb[0].mxu0 %v3584
        %v4416 = vpop.f32.mrb[0].mxu0
        %v4417 = vadd.f32 %v3627, %v4416
        %v4418 = vpop.f32.mrb[0].mxu0
        %v4419 = vadd.f32 %v3627, %v4418
        %4420 = vmatprep.mubr.f32.mxu0 0.0
        %4421 = vmatmul.mubr.f32.gmra.mrb[0].mxu0 %v3585
        %v4422 = vpop.f32.mrb[0].mxu0
        %v4423 = vadd.f32 %v3632, %v4422
        %v4424 = vpop.f32.mrb[0].mxu0
        %v4425 = vadd.f32 %v3632, %v4424
        %4426 = vmatprep.mubr.f32.mxu0 0.0
        %4427 = vmatmul.mubr.f32.gmra.mrb[0].mxu0 %v3586
        %v4428 = vpop.f32.mrb[0].mxu0
        %v4429 = vadd.f32 %v3637, %v4428
        %v4430 = vpop.f32.mrb[0].mxu0
        %v4431 = vadd.f32 %v3637, %v4430
        %4432 = vmatprep.mubr.f32.mxu0 0.0
        %4433 = vmatmul.mubr.f32.gmra.mrb[0].mxu0 %v3587
        %v4434 = vpop.f32.mrb[0].mxu0
        %v4435 = vadd.f32 %v3642, %v4434
        %v4436 = vpop.f32.mrb[0].mxu0
        %v4437 = vadd.f32 %v3642, %v4436
        %4438 = vmatprep.mubr.f32.mxu0 0.0
        %4439 = vmatmul.mubr.f32.gmra.mrb[0].mxu0 %v3588
        %v4440 = vpop.f32.mrb[0].mxu0
        %v4441 = vadd.f32 %v3647, %v4440
        %v4442 = vpop.f32.mrb[0].mxu0
        %v4443 = vadd.f32 %v3647, %v4442
        %4444 = vmatprep.mubr.f32.mxu0 0.0
        %4445 = vmatmul.mubr.f32.gmra.mrb[0].mxu0 %v3589
        %v4446 = vpop.f32.mrb[0].mxu0
        %v4447 = vadd.f32 %v3652, %v4446
        %v4448 = vpop.f32.mrb[0].mxu0
        %v4449 = vadd.f32 %v3652, %v4448
        %4450 = vmatprep.mubr.f32.mxu0 0.0
        %4451 = vmatmul.mubr.f32.gmra.mrb[0].mxu0 %v3590
        %v4452 = vpop.f32.mrb[0].mxu0
        %v4453 = vadd.f32 %v3657, %v4452
        %v4454 = vpop.f32.mrb[0].mxu0
        %v4455 = vadd.f32 %v3657, %v4454
        %4456 = vmatprep.mubr.f32.mxu0 0.0
        %4457 = vmatmul.mubr.f32.gmra.mrb[0].mxu0 %v3591
        %v4458 = vpop.f32.mrb[0].mxu0
        %v4459 = vadd.f32 %v3662, %v4458
        %v4460 = vpop.f32.mrb[0].mxu0
        %v4461 = vadd.f32 %v3662, %v4460
        %4462 = vmatprep.mubr.f32.mxu0 0.0
        %4463 = vmatmul.mubr.f32.gmra.mrb[0].mxu0 %v3592
        %v4464 = vpop.f32.mrb[0].mxu0
        %v4465 = vadd.f32 %v3667, %v4464
        %v4466 = vpop.f32.mrb[0].mxu0
        %v4467 = vadd.f32 %v3667, %v4466
        %4468 = vmatprep.mubr.f32.mxu0 0.0
        %4469 = vmatmul.mubr.f32.gmra.mrb[0].mxu0 %v3593
        %v4470 = vpop.f32.mrb[0].mxu0
        %v4471 = vadd.f32 %v3672, %v4470
        %v4472 = vpop.f32.mrb[0].mxu0
        %v4473 = vadd.f32 %v3672, %v4472
        %4474 = vmatprep.mubr.f32.mxu0 0.0
        %4475 = vmatmul.mubr.f32.gmra.mrb[0].mxu0 %v3594
        %v4476 = vpop.f32.mrb[0].mxu0
        %v4477 = vadd.f32 %v3677, %v4476
        %v4478 = vpop.f32.mrb[0].mxu0
        %v4479 = vadd.f32 %v3677, %v4478
        %4480 = vmatprep.mubr.f32.mxu0 0.0
        %4481 = vmatmul.mubr.f32.gmra.mrb[0].mxu0 %v3595
        %v4482 = vpop.f32.mrb[0].mxu0
        %v4483 = vadd.f32 %v3682, %v4482
        %v4484 = vpop.f32.mrb[0].mxu0
        %v4485 = vadd.f32 %v3682, %v4484
        %4486 = vmatprep.mubr.f32.mxu0 0.0
        %4487 = vmatmul.mubr.f32.gmra.mrb[0].mxu0 %v3596
        %v4488 = vpop.f32.mrb[0].mxu0
        %v4489 = vadd.f32 %v3687, %v4488
        %v4490 = vpop.f32.mrb[0].mxu0
        %v4491 = vadd.f32 %v3687, %v4490
        %4492 = vmatprep.mubr.f32.mxu0 0.0
        %4493 = vmatmul.mubr.f32.gmra.mrb[0].mxu0 %v3597
        %v4494 = vpop.f32.mrb[0].mxu0
        %v4495 = vadd.f32 %v3692, %v4494
        %v4496 = vpop.f32.mrb[0].mxu0
        %v4497 = vadd.f32 %v3692, %v4496
        %4498 = vdwg.mxu0
        %4499 = vmatprep.subr.mxu0 %v3337
        %4500 = vmatpush1.msra.mxu0 %v3336
        %4501 = vmatprep.subr.mxu0 %v3353
        %4502 = vmatpush1.msra.mxu0 %v3352
        %4503 = vmatprep.subr.mxu0 %v3369
        %4504 = vmatpush1.msra.mxu0 %v3368
        %4505 = vmatprep.subr.mxu0 %v3385
        %4506 = vmatpush1.msra.mxu0 %v3384
        %4507 = vmatprep.subr.mxu0 %v3401
        %4508 = vmatpush1.msra.mxu0 %v3400
        %4509 = vmatprep.subr.mxu0 %v3417
        %4510 = vmatpush1.msra.mxu0 %v3416
        %4511 = vmatprep.subr.mxu0 %v3433
        %4512 = vmatpush1.msra.mxu0 %v3432
        %4513 = vmatprep.subr.mxu0 %v3449
        %4514 = vmatpush1.msra.mxu0 %v3448
        %4515 = vmatprep.subr.mxu0 %v3465
        %4516 = vmatpush1.msra.mxu0 %v3464
        %4517 = vmatprep.subr.mxu0 %v3481
        %4518 = vmatpush1.msra.mxu0 %v3480
        %4519 = vmatprep.subr.mxu0 %v3497
        %4520 = vmatpush1.msra.mxu0 %v3496
        %4521 = vmatprep.subr.mxu0 %v3513
        %4522 = vmatpush1.msra.mxu0 %v3512
        %4523 = vmatprep.subr.mxu0 %v3529
        %4524 = vmatpush1.msra.mxu0 %v3528
        %4525 = vmatprep.subr.mxu0 %v3545
        %4526 = vmatpush1.msra.mxu0 %v3544
        %4527 = vmatprep.subr.mxu0 %v3561
        %4528 = vmatpush1.msra.mxu0 %v3560
        %4529 = vmatprep.subr.mxu0 %v3577
        %4530 = vmatpush1.msra.mxu0 %v3576
        %4531 = vmatprep.subr.mxu0 0.0
        %4532 = vmatpush1.msra.mxu0 0.0
        %4533 = vmatprep.subr.mxu0 0.0
        %4534 = vmatpush1.msra.mxu0 0.0
        %4535 = vmatprep.subr.mxu0 0.0
        %4536 = vmatpush1.msra.mxu0 0.0
        %4537 = vmatprep.subr.mxu0 0.0
        %4538 = vmatpush1.msra.mxu0 0.0
        %4539 = vmatprep.subr.mxu0 0.0
        %4540 = vmatpush1.msra.mxu0 0.0
        %4541 = vmatprep.subr.mxu0 0.0
        %4542 = vmatpush1.msra.mxu0 0.0
        %4543 = vmatprep.subr.mxu0 0.0
        %4544 = vmatpush1.msra.mxu0 0.0
        %4545 = vmatprep.subr.mxu0 0.0
        %4546 = vmatpush1.msra.mxu0 0.0
        %4547 = vmatprep.subr.mxu0 0.0
        %4548 = vmatpush1.msra.mxu0 0.0
        %4549 = vmatprep.subr.mxu0 0.0
        %4550 = vmatpush1.msra.mxu0 0.0
        %4551 = vmatprep.subr.mxu0 0.0
        %4552 = vmatpush1.msra.mxu0 0.0
        %4553 = vmatprep.subr.mxu0 0.0
        %4554 = vmatpush1.msra.mxu0 0.0
        %4555 = vmatprep.subr.mxu0 0.0
        %4556 = vmatpush1.msra.mxu0 0.0
        %4557 = vmatprep.subr.mxu0 0.0
        %4558 = vmatpush1.msra.mxu0 0.0
        %4559 = vmatprep.subr.mxu0 0.0
        %4560 = vmatpush1.msra.mxu0 0.0
        %4561 = vmatprep.subr.mxu0 0.0
        %4562 = vmatpush1.msra.mxu0 0.0
        %4563 = vmatprep.mubr.f32.mxu0 0.0
        %4564 = vmatmul.mubr.f32.gmra.mrb[0].mxu0 %v3582
        %v4565 = vpop.f32.mrb[0].mxu0
        %v4566 = vadd.f32 %v3617, %v4565
        %v4567 = vpop.f32.mrb[0].mxu0
        %v4568 = vadd.f32 %v3617, %v4567
        %4569 = vmatprep.mubr.f32.mxu0 0.0
        %4570 = vmatmul.mubr.f32.gmra.mrb[0].mxu0 %v3583
        %v4571 = vpop.f32.mrb[0].mxu0
        %v4572 = vadd.f32 %v3622, %v4571
        %v4573 = vpop.f32.mrb[0].mxu0
        %v4574 = vadd.f32 %v3622, %v4573
        %4575 = vmatprep.mubr.f32.mxu0 0.0
        %4576 = vmatmul.mubr.f32.gmra.mrb[0].mxu0 %v3584
        %v4577 = vpop.f32.mrb[0].mxu0
        %v4578 = vadd.f32 %v3627, %v4577
        %v4579 = vpop.f32.mrb[0].mxu0
        %v4580 = vadd.f32 %v3627, %v4579
        %4581 = vmatprep.mubr.f32.mxu0 0.0
        %4582 = vmatmul.mubr.f32.gmra.mrb[0].mxu0 %v3585
        %v4583 = vpop.f32.mrb[0].mxu0
        %v4584 = vadd.f32 %v3632, %v4583
        %v4585 = vpop.f32.mrb[0].mxu0
        %v4586 = vadd.f32 %v3632, %v4585
        %4587 = vmatprep.mubr.f32.mxu0 0.0
        %4588 = vmatmul.mubr.f32.gmra.mrb[0].mxu0 %v3586
        %v4589 = vpop.f32.mrb[0].mxu0
        %v4590 = vadd.f32 %v3637, %v4589
        %v4591 = vpop.f32.mrb[0].mxu0
        %v4592 = vadd.f32 %v3637, %v4591
        %4593 = vmatprep.mubr.f32.mxu0 0.0
        %4594 = vmatmul.mubr.f32.gmra.mrb[0].mxu0 %v3587
        %v4595 = vpop.f32.mrb[0].mxu0
        %v4596 = vadd.f32 %v3642, %v4595
        %v4597 = vpop.f32.mrb[0].mxu0
        %v4598 = vadd.f32 %v3642, %v4597
        %4599 = vmatprep.mubr.f32.mxu0 0.0
        %4600 = vmatmul.mubr.f32.gmra.mrb[0].mxu0 %v3588
        %v4601 = vpop.f32.mrb[0].mxu0
        %v4602 = vadd.f32 %v3647, %v4601
        %v4603 = vpop.f32.mrb[0].mxu0
        %v4604 = vadd.f32 %v3647, %v4603
        %4605 = vmatprep.mubr.f32.mxu0 0.0
        %4606 = vmatmul.mubr.f32.gmra.mrb[0].mxu0 %v3589
        %v4607 = vpop.f32.mrb[0].mxu0
        %v4608 = vadd.f32 %v3652, %v4607
        %v4609 = vpop.f32.mrb[0].mxu0
        %v4610 = vadd.f32 %v3652, %v4609
        %4611 = vmatprep.mubr.f32.mxu0 0.0
        %4612 = vmatmul.mubr.f32.gmra.mrb[0].mxu0 %v3590
        %v4613 = vpop.f32.mrb[0].mxu0
        %v4614 = vadd.f32 %v3657, %v4613
        %v4615 = vpop.f32.mrb[0].mxu0
        %v4616 = vadd.f32 %v3657, %v4615
        %4617 = vmatprep.mubr.f32.mxu0 0.0
        %4618 = vmatmul.mubr.f32.gmra.mrb[0].mxu0 %v3591
        %v4619 = vpop.f32.mrb[0].mxu0
        %v4620 = vadd.f32 %v3662, %v4619
        %v4621 = vpop.f32.mrb[0].mxu0
        %v4622 = vadd.f32 %v3662, %v4621
        %4623 = vmatprep.mubr.f32.mxu0 0.0
        %4624 = vmatmul.mubr.f32.gmra.mrb[0].mxu0 %v3592
        %v4625 = vpop.f32.mrb[0].mxu0
        %v4626 = vadd.f32 %v3667, %v4625
        %v4627 = vpop.f32.mrb[0].mxu0
        %v4628 = vadd.f32 %v3667, %v4627
        %4629 = vmatprep.mubr.f32.mxu0 0.0
        %4630 = vmatmul.mubr.f32.gmra.mrb[0].mxu0 %v3593
        %v4631 = vpop.f32.mrb[0].mxu0
        %v4632 = vadd.f32 %v3672, %v4631
        %v4633 = vpop.f32.mrb[0].mxu0
        %v4634 = vadd.f32 %v3672, %v4633
        %4635 = vmatprep.mubr.f32.mxu0 0.0
        %4636 = vmatmul.mubr.f32.gmra.mrb[0].mxu0 %v3594
        %v4637 = vpop.f32.mrb[0].mxu0
        %v4638 = vadd.f32 %v3677, %v4637
        %v4639 = vpop.f32.mrb[0].mxu0
        %v4640 = vadd.f32 %v3677, %v4639
        %4641 = vmatprep.mubr.f32.mxu0 0.0
        %4642 = vmatmul.mubr.f32.gmra.mrb[0].mxu0 %v3595
        %v4643 = vpop.f32.mrb[0].mxu0
        %v4644 = vadd.f32 %v3682, %v4643
        %v4645 = vpop.f32.mrb[0].mxu0
        %v4646 = vadd.f32 %v3682, %v4645
        %4647 = vmatprep.mubr.f32.mxu0 0.0
        %4648 = vmatmul.mubr.f32.gmra.mrb[0].mxu0 %v3596
        %v4649 = vpop.f32.mrb[0].mxu0
        %v4650 = vadd.f32 %v3687, %v4649
        %v4651 = vpop.f32.mrb[0].mxu0
        %v4652 = vadd.f32 %v3687, %v4651
        %4653 = vmatprep.mubr.f32.mxu0 0.0
        %4654 = vmatmul.mubr.f32.gmra.mrb[0].mxu0 %v3597
        %v4655 = vpop.f32.mrb[0].mxu0
        %v4656 = vadd.f32 %v3692, %v4655
        %v4657 = vpop.f32.mrb[0].mxu0
        %v4658 = vadd.f32 %v3692, %v4657
        %4659 = vdwg.mxu0
        %4660 = vmatprep.subr.mxu0 %v3339
        %4661 = vmatpush1.msra.mxu0 %v3338
        %4662 = vmatprep.subr.mxu0 %v3355
        %4663 = vmatpush1.msra.mxu0 %v3354
        %4664 = vmatprep.subr.mxu0 %v3371
        %4665 = vmatpush1.msra.mxu0 %v3370
        %4666 = vmatprep.subr.mxu0 %v3387
        %4667 = vmatpush1.msra.mxu0 %v3386
        %4668 = vmatprep.subr.mxu0 %v3403
        %4669 = vmatpush1.msra.mxu0 %v3402
        %4670 = vmatprep.subr.mxu0 %v3419
        %4671 = vmatpush1.msra.mxu0 %v3418
        %4672 = vmatprep.subr.mxu0 %v3435
        %4673 = vmatpush1.msra.mxu0 %v3434
        %4674 = vmatprep.subr.mxu0 %v3451
        %4675 = vmatpush1.msra.mxu0 %v3450
        %4676 = vmatprep.subr.mxu0 %v3467
        %4677 = vmatpush1.msra.mxu0 %v3466
        %4678 = vmatprep.subr.mxu0 %v3483
        %4679 = vmatpush1.msra.mxu0 %v3482
        %4680 = vmatprep.subr.mxu0 %v3499
        %4681 = vmatpush1.msra.mxu0 %v3498
        %4682 = vmatprep.subr.mxu0 %v3515
        %4683 = vmatpush1.msra.mxu0 %v3514
        %4684 = vmatprep.subr.mxu0 %v3531
        %4685 = vmatpush1.msra.mxu0 %v3530
        %4686 = vmatprep.subr.mxu0 %v3547
        %4687 = vmatpush1.msra.mxu0 %v3546
        %4688 = vmatprep.subr.mxu0 %v3563
        %4689 = vmatpush1.msra.mxu0 %v3562
        %4690 = vmatprep.subr.mxu0 %v3579
        %4691 = vmatpush1.msra.mxu0 %v3578
        %4692 = vmatprep.subr.mxu0 0.0
        %4693 = vmatpush1.msra.mxu0 0.0
        %4694 = vmatprep.subr.mxu0 0.0
        %4695 = vmatpush1.msra.mxu0 0.0
        %4696 = vmatprep.subr.mxu0 0.0
        %4697 = vmatpush1.msra.mxu0 0.0
        %4698 = vmatprep.subr.mxu0 0.0
        %4699 = vmatpush1.msra.mxu0 0.0
        %4700 = vmatprep.subr.mxu0 0.0
        %4701 = vmatpush1.msra.mxu0 0.0
        %4702 = vmatprep.subr.mxu0 0.0
        %4703 = vmatpush1.msra.mxu0 0.0
        %4704 = vmatprep.subr.mxu0 0.0
        %4705 = vmatpush1.msra.mxu0 0.0
        %4706 = vmatprep.subr.mxu0 0.0
        %4707 = vmatpush1.msra.mxu0 0.0
        %4708 = vmatprep.subr.mxu0 0.0
        %4709 = vmatpush1.msra.mxu0 0.0
        %4710 = vmatprep.subr.mxu0 0.0
        %4711 = vmatpush1.msra.mxu0 0.0
        %4712 = vmatprep.subr.mxu0 0.0
        %4713 = vmatpush1.msra.mxu0 0.0
        %4714 = vmatprep.subr.mxu0 0.0
        %4715 = vmatpush1.msra.mxu0 0.0
        %4716 = vmatprep.subr.mxu0 0.0
        %4717 = vmatpush1.msra.mxu0 0.0
        %4718 = vmatprep.subr.mxu0 0.0
        %4719 = vmatpush1.msra.mxu0 0.0
        %4720 = vmatprep.subr.mxu0 0.0
        %4721 = vmatpush1.msra.mxu0 0.0
        %4722 = vmatprep.subr.mxu0 0.0
        %4723 = vmatpush1.msra.mxu0 0.0
        %4724 = vmatprep.mubr.f32.mxu0 0.0
        %4725 = vmatmul.mubr.f32.gmra.mrb[0].mxu0 %v3582
        %v4726 = vpop.f32.mrb[0].mxu0
        %v4727 = vadd.f32 %v3617, %v4726
        %v4728 = vpop.f32.mrb[0].mxu0
        %v4729 = vadd.f32 %v3617, %v4728
        %4730 = vmatprep.mubr.f32.mxu0 0.0
        %4731 = vmatmul.mubr.f32.gmra.mrb[0].mxu0 %v3583
        %v4732 = vpop.f32.mrb[0].mxu0
        %v4733 = vadd.f32 %v3622, %v4732
        %v4734 = vpop.f32.mrb[0].mxu0
        %v4735 = vadd.f32 %v3622, %v4734
        %4736 = vmatprep.mubr.f32.mxu0 0.0
        %4737 = vmatmul.mubr.f32.gmra.mrb[0].mxu0 %v3584
        %v4738 = vpop.f32.mrb[0].mxu0
        %v4739 = vadd.f32 %v3627, %v4738
        %v4740 = vpop.f32.mrb[0].mxu0
        %v4741 = vadd.f32 %v3627, %v4740
        %4742 = vmatprep.mubr.f32.mxu0 0.0
        %4743 = vmatmul.mubr.f32.gmra.mrb[0].mxu0 %v3585
        %v4744 = vpop.f32.mrb[0].mxu0
        %v4745 = vadd.f32 %v3632, %v4744
        %v4746 = vpop.f32.mrb[0].mxu0
        %v4747 = vadd.f32 %v3632, %v4746
        %4748 = vmatprep.mubr.f32.mxu0 0.0
        %4749 = vmatmul.mubr.f32.gmra.mrb[0].mxu0 %v3586
        %v4750 = vpop.f32.mrb[0].mxu0
        %v4751 = vadd.f32 %v3637, %v4750
        %v4752 = vpop.f32.mrb[0].mxu0
        %v4753 = vadd.f32 %v3637, %v4752
        %4754 = vmatprep.mubr.f32.mxu0 0.0
        %4755 = vmatmul.mubr.f32.gmra.mrb[0].mxu0 %v3587
        %v4756 = vpop.f32.mrb[0].mxu0
        %v4757 = vadd.f32 %v3642, %v4756
        %v4758 = vpop.f32.mrb[0].mxu0
        %v4759 = vadd.f32 %v3642, %v4758
        %4760 = vmatprep.mubr.f32.mxu0 0.0
        %4761 = vmatmul.mubr.f32.gmra.mrb[0].mxu0 %v3588
        %v4762 = vpop.f32.mrb[0].mxu0
        %v4763 = vadd.f32 %v3647, %v4762
        %v4764 = vpop.f32.mrb[0].mxu0
        %v4765 = vadd.f32 %v3647, %v4764
        %4766 = vmatprep.mubr.f32.mxu0 0.0
        %4767 = vmatmul.mubr.f32.gmra.mrb[0].mxu0 %v3589
        %v4768 = vpop.f32.mrb[0].mxu0
        %v4769 = vadd.f32 %v3652, %v4768
        %v4770 = vpop.f32.mrb[0].mxu0
        %v4771 = vadd.f32 %v3652, %v4770
        %4772 = vmatprep.mubr.f32.mxu0 0.0
        %4773 = vmatmul.mubr.f32.gmra.mrb[0].mxu0 %v3590
        %v4774 = vpop.f32.mrb[0].mxu0
        %v4775 = vadd.f32 %v3657, %v4774
        %v4776 = vpop.f32.mrb[0].mxu0
        %v4777 = vadd.f32 %v3657, %v4776
        %4778 = vmatprep.mubr.f32.mxu0 0.0
        %4779 = vmatmul.mubr.f32.gmra.mrb[0].mxu0 %v3591
        %v4780 = vpop.f32.mrb[0].mxu0
        %v4781 = vadd.f32 %v3662, %v4780
        %v4782 = vpop.f32.mrb[0].mxu0
        %v4783 = vadd.f32 %v3662, %v4782
        %4784 = vmatprep.mubr.f32.mxu0 0.0
        %4785 = vmatmul.mubr.f32.gmra.mrb[0].mxu0 %v3592
        %v4786 = vpop.f32.mrb[0].mxu0
        %v4787 = vadd.f32 %v3667, %v4786
        %v4788 = vpop.f32.mrb[0].mxu0
        %v4789 = vadd.f32 %v3667, %v4788
        %4790 = vmatprep.mubr.f32.mxu0 0.0
        %4791 = vmatmul.mubr.f32.gmra.mrb[0].mxu0 %v3593
        %v4792 = vpop.f32.mrb[0].mxu0
        %v4793 = vadd.f32 %v3672, %v4792
        %v4794 = vpop.f32.mrb[0].mxu0
        %v4795 = vadd.f32 %v3672, %v4794
        %4796 = vmatprep.mubr.f32.mxu0 0.0
        %4797 = vmatmul.mubr.f32.gmra.mrb[0].mxu0 %v3594
        %v4798 = vpop.f32.mrb[0].mxu0
        %v4799 = vadd.f32 %v3677, %v4798
        %v4800 = vpop.f32.mrb[0].mxu0
        %v4801 = vadd.f32 %v3677, %v4800
        %4802 = vmatprep.mubr.f32.mxu0 0.0
        %4803 = vmatmul.mubr.f32.gmra.mrb[0].mxu0 %v3595
        %v4804 = vpop.f32.mrb[0].mxu0
        %v4805 = vadd.f32 %v3682, %v4804
        %v4806 = vpop.f32.mrb[0].mxu0
        %v4807 = vadd.f32 %v3682, %v4806
        %4808 = vmatprep.mubr.f32.mxu0 0.0
        %4809 = vmatmul.mubr.f32.gmra.mrb[0].mxu0 %v3596
        %v4810 = vpop.f32.mrb[0].mxu0
        %v4811 = vadd.f32 %v3687, %v4810
        %v4812 = vpop.f32.mrb[0].mxu0
        %v4813 = vadd.f32 %v3687, %v4812
        %4814 = vmatprep.mubr.f32.mxu0 0.0
        %4815 = vmatmul.mubr.f32.gmra.mrb[0].mxu0 %v3597
        %v4816 = vpop.f32.mrb[0].mxu0
        %v4817 = vadd.f32 %v3692, %v4816
        %v4818 = vpop.f32.mrb[0].mxu0
        %v4819 = vadd.f32 %v3692, %v4818
        %4820 = vdwg.mxu0
        %4821 = vmatprep.subr.mxu0 %v3341
        %4822 = vmatpush1.msra.mxu0 %v3340
        %4823 = vmatprep.subr.mxu0 %v3357
        %4824 = vmatpush1.msra.mxu0 %v3356
        %4825 = vmatprep.subr.mxu0 %v3373
        %4826 = vmatpush1.msra.mxu0 %v3372
        %4827 = vmatprep.subr.mxu0 %v3389
        %4828 = vmatpush1.msra.mxu0 %v3388
        %4829 = vmatprep.subr.mxu0 %v3405
        %4830 = vmatpush1.msra.mxu0 %v3404
        %4831 = vmatprep.subr.mxu0 %v3421
        %4832 = vmatpush1.msra.mxu0 %v3420
        %4833 = vmatprep.subr.mxu0 %v3437
        %4834 = vmatpush1.msra.mxu0 %v3436
        %4835 = vmatprep.subr.mxu0 %v3453
        %4836 = vmatpush1.msra.mxu0 %v3452
        %4837 = vmatprep.subr.mxu0 %v3469
        %4838 = vmatpush1.msra.mxu0 %v3468
        %4839 = vmatprep.subr.mxu0 %v3485
        %4840 = vmatpush1.msra.mxu0 %v3484
        %4841 = vmatprep.subr.mxu0 %v3501
        %4842 = vmatpush1.msra.mxu0 %v3500
        %4843 = vmatprep.subr.mxu0 %v3517
        %4844 = vmatpush1.msra.mxu0 %v3516
        %4845 = vmatprep.subr.mxu0 %v3533
        %4846 = vmatpush1.msra.mxu0 %v3532
        %4847 = vmatprep.subr.mxu0 %v3549
        %4848 = vmatpush1.msra.mxu0 %v3548
        %4849 = vmatprep.subr.mxu0 %v3565
        %4850 = vmatpush1.msra.mxu0 %v3564
        %4851 = vmatprep.subr.mxu0 %v3581
        %4852 = vmatpush1.msra.mxu0 %v3580
        %4853 = vmatprep.subr.mxu0 0.0
        %4854 = vmatpush1.msra.mxu0 0.0
        %4855 = vmatprep.subr.mxu0 0.0
        %4856 = vmatpush1.msra.mxu0 0.0
        %4857 = vmatprep.subr.mxu0 0.0
        %4858 = vmatpush1.msra.mxu0 0.0
        %4859 = vmatprep.subr.mxu0 0.0
        %4860 = vmatpush1.msra.mxu0 0.0
        %4861 = vmatprep.subr.mxu0 0.0
        %4862 = vmatpush1.msra.mxu0 0.0
        %4863 = vmatprep.subr.mxu0 0.0
        %4864 = vmatpush1.msra.mxu0 0.0
        %4865 = vmatprep.subr.mxu0 0.0
        %4866 = vmatpush1.msra.mxu0 0.0
        %4867 = vmatprep.subr.mxu0 0.0
        %4868 = vmatpush1.msra.mxu0 0.0
        %4869 = vmatprep.subr.mxu0 0.0
        %4870 = vmatpush1.msra.mxu0 0.0
        %4871 = vmatprep.subr.mxu0 0.0
        %4872 = vmatpush1.msra.mxu0 0.0
        %4873 = vmatprep.subr.mxu0 0.0
        %4874 = vmatpush1.msra.mxu0 0.0
        %4875 = vmatprep.subr.mxu0 0.0
        %4876 = vmatpush1.msra.mxu0 0.0
        %4877 = vmatprep.subr.mxu0 0.0
        %4878 = vmatpush1.msra.mxu0 0.0
        %4879 = vmatprep.subr.mxu0 0.0
        %4880 = vmatpush1.msra.mxu0 0.0
        %4881 = vmatprep.subr.mxu0 0.0
        %4882 = vmatpush1.msra.mxu0 0.0
        %4883 = vmatprep.subr.mxu0 0.0
        %4884 = vmatpush1.msra.mxu0 0.0
        %4885 = vmatprep.mubr.f32.mxu0 0.0
        %4886 = vmatmul.mubr.f32.gmra.mrb[0].mxu0 %v3582
        %v4887 = vpop.f32.mrb[0].mxu0
        %v4888 = vadd.f32 %v3617, %v4887
        %v4889 = vpop.f32.mrb[0].mxu0
        %v4890 = vadd.f32 %v3617, %v4889
        %4891 = vmatprep.mubr.f32.mxu0 0.0
        %4892 = vmatmul.mubr.f32.gmra.mrb[0].mxu0 %v3583
        %v4893 = vpop.f32.mrb[0].mxu0
        %v4894 = vadd.f32 %v3622, %v4893
        %v4895 = vpop.f32.mrb[0].mxu0
        %v4896 = vadd.f32 %v3622, %v4895
        %4897 = vmatprep.mubr.f32.mxu0 0.0
        %4898 = vmatmul.mubr.f32.gmra.mrb[0].mxu0 %v3584
        %v4899 = vpop.f32.mrb[0].mxu0
        %v4900 = vadd.f32 %v3627, %v4899
        %v4901 = vpop.f32.mrb[0].mxu0
        %v4902 = vadd.f32 %v3627, %v4901
        %4903 = vmatprep.mubr.f32.mxu0 0.0
        %4904 = vmatmul.mubr.f32.gmra.mrb[0].mxu0 %v3585
        %v4905 = vpop.f32.mrb[0].mxu0
        %v4906 = vadd.f32 %v3632, %v4905
        %v4907 = vpop.f32.mrb[0].mxu0
        %v4908 = vadd.f32 %v3632, %v4907
        %4909 = vmatprep.mubr.f32.mxu0 0.0
        %4910 = vmatmul.mubr.f32.gmra.mrb[0].mxu0 %v3586
        %v4911 = vpop.f32.mrb[0].mxu0
        %v4912 = vadd.f32 %v3637, %v4911
        %v4913 = vpop.f32.mrb[0].mxu0
        %v4914 = vadd.f32 %v3637, %v4913
        %4915 = vmatprep.mubr.f32.mxu0 0.0
        %4916 = vmatmul.mubr.f32.gmra.mrb[0].mxu0 %v3587
        %v4917 = vpop.f32.mrb[0].mxu0
        %v4918 = vadd.f32 %v3642, %v4917
        %v4919 = vpop.f32.mrb[0].mxu0
        %v4920 = vadd.f32 %v3642, %v4919
        %4921 = vmatprep.mubr.f32.mxu0 0.0
        %4922 = vmatmul.mubr.f32.gmra.mrb[0].mxu0 %v3588
        %v4923 = vpop.f32.mrb[0].mxu0
        %v4924 = vadd.f32 %v3647, %v4923
        %v4925 = vpop.f32.mrb[0].mxu0
        %v4926 = vadd.f32 %v3647, %v4925
        %4927 = vmatprep.mubr.f32.mxu0 0.0
        %4928 = vmatmul.mubr.f32.gmra.mrb[0].mxu0 %v3589
        %v4929 = vpop.f32.mrb[0].mxu0
        %v4930 = vadd.f32 %v3652, %v4929
        %v4931 = vpop.f32.mrb[0].mxu0
        %v4932 = vadd.f32 %v3652, %v4931
        %4933 = vmatprep.mubr.f32.mxu0 0.0
        %4934 = vmatmul.mubr.f32.gmra.mrb[0].mxu0 %v3590
        %v4935 = vpop.f32.mrb[0].mxu0
        %v4936 = vadd.f32 %v3657, %v4935
        %v4937 = vpop.f32.mrb[0].mxu0
        %v4938 = vadd.f32 %v3657, %v4937
        %4939 = vmatprep.mubr.f32.mxu0 0.0
        %4940 = vmatmul.mubr.f32.gmra.mrb[0].mxu0 %v3591
        %v4941 = vpop.f32.mrb[0].mxu0
        %v4942 = vadd.f32 %v3662, %v4941
        %v4943 = vpop.f32.mrb[0].mxu0
        %v4944 = vadd.f32 %v3662, %v4943
        %4945 = vmatprep.mubr.f32.mxu0 0.0
        %4946 = vmatmul.mubr.f32.gmra.mrb[0].mxu0 %v3592
        %v4947 = vpop.f32.mrb[0].mxu0
        %v4948 = vadd.f32 %v3667, %v4947
        %v4949 = vpop.f32.mrb[0].mxu0
        %v4950 = vadd.f32 %v3667, %v4949
        %4951 = vmatprep.mubr.f32.mxu0 0.0
        %4952 = vmatmul.mubr.f32.gmra.mrb[0].mxu0 %v3593
        %v4953 = vpop.f32.mrb[0].mxu0
        %v4954 = vadd.f32 %v3672, %v4953
        %v4955 = vpop.f32.mrb[0].mxu0
        %v4956 = vadd.f32 %v3672, %v4955
        %4957 = vmatprep.mubr.f32.mxu0 0.0
        %4958 = vmatmul.mubr.f32.gmra.mrb[0].mxu0 %v3594
        %v4959 = vpop.f32.mrb[0].mxu0
        %v4960 = vadd.f32 %v3677, %v4959
        %v4961 = vpop.f32.mrb[0].mxu0
        %v4962 = vadd.f32 %v3677, %v4961
        %4963 = vmatprep.mubr.f32.mxu0 0.0
        %4964 = vmatmul.mubr.f32.gmra.mrb[0].mxu0 %v3595
        %v4965 = vpop.f32.mrb[0].mxu0
        %v4966 = vadd.f32 %v3682, %v4965
        %v4967 = vpop.f32.mrb[0].mxu0
        %v4968 = vadd.f32 %v3682, %v4967
        %4969 = vmatprep.mubr.f32.mxu0 0.0
        %4970 = vmatmul.mubr.f32.gmra.mrb[0].mxu0 %v3596
        %v4971 = vpop.f32.mrb[0].mxu0
        %v4972 = vadd.f32 %v3687, %v4971
        %v4973 = vpop.f32.mrb[0].mxu0
        %v4974 = vadd.f32 %v3687, %v4973
        %4975 = vmatprep.mubr.f32.mxu0 0.0
        %4976 = vmatmul.mubr.f32.gmra.mrb[0].mxu0 %v3597
        %v4977 = vpop.f32.mrb[0].mxu0
        %v4978 = vadd.f32 %v3692, %v4977
        %v4979 = vpop.f32.mrb[0].mxu0
        %v4980 = vadd.f32 %v3692, %v4979
        %4981 = vdwg.mxu0
        %v4982 = vmax.f32 %v3761, 0.0
        %v4983 = vmax.f32 %v3763, 0.0
        %v4984 = vmax.f32 %v3922, 0.0
        %v4985 = vmax.f32 %v3924, 0.0
        %v4986 = vmax.f32 %v4083, 0.0
        %v4987 = vmax.f32 %v4085, 0.0
        %v4988 = vmax.f32 %v4244, 0.0
        %v4989 = vmax.f32 %v4246, 0.0
        %v4990 = vmax.f32 %v4405, 0.0
        %v4991 = vmax.f32 %v4407, 0.0
        %v4992 = vmax.f32 %v4566, 0.0
        %v4993 = vmax.f32 %v4568, 0.0
        %v4994 = vmax.f32 %v4727, 0.0
        %v4995 = vmax.f32 %v4729, 0.0
        %v4996 = vmax.f32 %v4888, 0.0
        %v4997 = vmax.f32 %v4890, 0.0
        %v4998 = vmax.f32 %v3767, 0.0
        %v4999 = vmax.f32 %v3769, 0.0
        %v5000 = vmax.f32 %v3928, 0.0
        %v5001 = vmax.f32 %v3930, 0.0
        %v5002 = vmax.f32 %v4089, 0.0
        %v5003 = vmax.f32 %v4091, 0.0
        %v5004 = vmax.f32 %v4250, 0.0
        %v5005 = vmax.f32 %v4252, 0.0
        %v5006 = vmax.f32 %v4411, 0.0
        %v5007 = vmax.f32 %v4413, 0.0
        %v5008 = vmax.f32 %v4572, 0.0
        %v5009 = vmax.f32 %v4574, 0.0
        %v5010 = vmax.f32 %v4733, 0.0
        %v5011 = vmax.f32 %v4735, 0.0
        %v5012 = vmax.f32 %v4894, 0.0
        %v5013 = vmax.f32 %v4896, 0.0
        %v5014 = vmax.f32 %v3773, 0.0
        %v5015 = vmax.f32 %v3775, 0.0
        %v5016 = vmax.f32 %v3934, 0.0
        %v5017 = vmax.f32 %v3936, 0.0
        %v5018 = vmax.f32 %v4095, 0.0
        %v5019 = vmax.f32 %v4097, 0.0
        %v5020 = vmax.f32 %v4256, 0.0
        %v5021 = vmax.f32 %v4258, 0.0
        %v5022 = vmax.f32 %v4417, 0.0
        %v5023 = vmax.f32 %v4419, 0.0
        %v5024 = vmax.f32 %v4578, 0.0
        %v5025 = vmax.f32 %v4580, 0.0
        %v5026 = vmax.f32 %v4739, 0.0
        %v5027 = vmax.f32 %v4741, 0.0
        %v5028 = vmax.f32 %v4900, 0.0
        %v5029 = vmax.f32 %v4902, 0.0
        %v5030 = vmax.f32 %v3779, 0.0
        %v5031 = vmax.f32 %v3781, 0.0
        %v5032 = vmax.f32 %v3940, 0.0
        %v5033 = vmax.f32 %v3942, 0.0
        %v5034 = vmax.f32 %v4101, 0.0
        %v5035 = vmax.f32 %v4103, 0.0
        %v5036 = vmax.f32 %v4262, 0.0
        %v5037 = vmax.f32 %v4264, 0.0
        %v5038 = vmax.f32 %v4423, 0.0
        %v5039 = vmax.f32 %v4425, 0.0
        %v5040 = vmax.f32 %v4584, 0.0
        %v5041 = vmax.f32 %v4586, 0.0
        %v5042 = vmax.f32 %v4745, 0.0
        %v5043 = vmax.f32 %v4747, 0.0
        %v5044 = vmax.f32 %v4906, 0.0
        %v5045 = vmax.f32 %v4908, 0.0
        %v5046 = vmax.f32 %v3785, 0.0
        %v5047 = vmax.f32 %v3787, 0.0
        %v5048 = vmax.f32 %v3946, 0.0
        %v5049 = vmax.f32 %v3948, 0.0
        %v5050 = vmax.f32 %v4107, 0.0
        %v5051 = vmax.f32 %v4109, 0.0
        %v5052 = vmax.f32 %v4268, 0.0
        %v5053 = vmax.f32 %v4270, 0.0
        %v5054 = vmax.f32 %v4429, 0.0
        %v5055 = vmax.f32 %v4431, 0.0
        %v5056 = vmax.f32 %v4590, 0.0
        %v5057 = vmax.f32 %v4592, 0.0
        %v5058 = vmax.f32 %v4751, 0.0
        %v5059 = vmax.f32 %v4753, 0.0
        %v5060 = vmax.f32 %v4912, 0.0
        %v5061 = vmax.f32 %v4914, 0.0
        %v5062 = vmax.f32 %v3791, 0.0
        %v5063 = vmax.f32 %v3793, 0.0
        %v5064 = vmax.f32 %v3952, 0.0
        %v5065 = vmax.f32 %v3954, 0.0
        %v5066 = vmax.f32 %v4113, 0.0
        %v5067 = vmax.f32 %v4115, 0.0
        %v5068 = vmax.f32 %v4274, 0.0
        %v5069 = vmax.f32 %v4276, 0.0
        %v5070 = vmax.f32 %v4435, 0.0
        %v5071 = vmax.f32 %v4437, 0.0
        %v5072 = vmax.f32 %v4596, 0.0
        %v5073 = vmax.f32 %v4598, 0.0
        %v5074 = vmax.f32 %v4757, 0.0
        %v5075 = vmax.f32 %v4759, 0.0
        %v5076 = vmax.f32 %v4918, 0.0
        %v5077 = vmax.f32 %v4920, 0.0
        %v5078 = vmax.f32 %v3797, 0.0
        %v5079 = vmax.f32 %v3799, 0.0
        %v5080 = vmax.f32 %v3958, 0.0
        %v5081 = vmax.f32 %v3960, 0.0
        %v5082 = vmax.f32 %v4119, 0.0
        %v5083 = vmax.f32 %v4121, 0.0
        %v5084 = vmax.f32 %v4280, 0.0
        %v5085 = vmax.f32 %v4282, 0.0
        %v5086 = vmax.f32 %v4441, 0.0
        %v5087 = vmax.f32 %v4443, 0.0
        %v5088 = vmax.f32 %v4602, 0.0
        %v5089 = vmax.f32 %v4604, 0.0
        %v5090 = vmax.f32 %v4763, 0.0
        %v5091 = vmax.f32 %v4765, 0.0
        %v5092 = vmax.f32 %v4924, 0.0
        %v5093 = vmax.f32 %v4926, 0.0
        %v5094 = vmax.f32 %v3803, 0.0
        %v5095 = vmax.f32 %v3805, 0.0
        %v5096 = vmax.f32 %v3964, 0.0
        %v5097 = vmax.f32 %v3966, 0.0
        %v5098 = vmax.f32 %v4125, 0.0
        %v5099 = vmax.f32 %v4127, 0.0
        %v5100 = vmax.f32 %v4286, 0.0
        %v5101 = vmax.f32 %v4288, 0.0
        %v5102 = vmax.f32 %v4447, 0.0
        %v5103 = vmax.f32 %v4449, 0.0
        %v5104 = vmax.f32 %v4608, 0.0
        %v5105 = vmax.f32 %v4610, 0.0
        %v5106 = vmax.f32 %v4769, 0.0
        %v5107 = vmax.f32 %v4771, 0.0
        %v5108 = vmax.f32 %v4930, 0.0
        %v5109 = vmax.f32 %v4932, 0.0
        %v5110 = vmax.f32 %v3809, 0.0
        %v5111 = vmax.f32 %v3811, 0.0
        %v5112 = vmax.f32 %v3970, 0.0
        %v5113 = vmax.f32 %v3972, 0.0
        %v5114 = vmax.f32 %v4131, 0.0
        %v5115 = vmax.f32 %v4133, 0.0
        %v5116 = vmax.f32 %v4292, 0.0
        %v5117 = vmax.f32 %v4294, 0.0
        %v5118 = vmax.f32 %v4453, 0.0
        %v5119 = vmax.f32 %v4455, 0.0
        %v5120 = vmax.f32 %v4614, 0.0
        %v5121 = vmax.f32 %v4616, 0.0
        %v5122 = vmax.f32 %v4775, 0.0
        %v5123 = vmax.f32 %v4777, 0.0
        %v5124 = vmax.f32 %v4936, 0.0
        %v5125 = vmax.f32 %v4938, 0.0
        %v5126 = vmax.f32 %v3815, 0.0
        %v5127 = vmax.f32 %v3817, 0.0
        %v5128 = vmax.f32 %v3976, 0.0
        %v5129 = vmax.f32 %v3978, 0.0
        %v5130 = vmax.f32 %v4137, 0.0
        %v5131 = vmax.f32 %v4139, 0.0
        %v5132 = vmax.f32 %v4298, 0.0
        %v5133 = vmax.f32 %v4300, 0.0
        %v5134 = vmax.f32 %v4459, 0.0
        %v5135 = vmax.f32 %v4461, 0.0
        %v5136 = vmax.f32 %v4620, 0.0
        %v5137 = vmax.f32 %v4622, 0.0
        %v5138 = vmax.f32 %v4781, 0.0
        %v5139 = vmax.f32 %v4783, 0.0
        %v5140 = vmax.f32 %v4942, 0.0
        %v5141 = vmax.f32 %v4944, 0.0
        %v5142 = vmax.f32 %v3821, 0.0
        %v5143 = vmax.f32 %v3823, 0.0
        %v5144 = vmax.f32 %v3982, 0.0
        %v5145 = vmax.f32 %v3984, 0.0
        %v5146 = vmax.f32 %v4143, 0.0
        %v5147 = vmax.f32 %v4145, 0.0
        %v5148 = vmax.f32 %v4304, 0.0
        %v5149 = vmax.f32 %v4306, 0.0
        %v5150 = vmax.f32 %v4465, 0.0
        %v5151 = vmax.f32 %v4467, 0.0
        %v5152 = vmax.f32 %v4626, 0.0
        %v5153 = vmax.f32 %v4628, 0.0
        %v5154 = vmax.f32 %v4787, 0.0
        %v5155 = vmax.f32 %v4789, 0.0
        %v5156 = vmax.f32 %v4948, 0.0
        %v5157 = vmax.f32 %v4950, 0.0
        %v5158 = vmax.f32 %v3827, 0.0
        %v5159 = vmax.f32 %v3829, 0.0
        %v5160 = vmax.f32 %v3988, 0.0
        %v5161 = vmax.f32 %v3990, 0.0
        %v5162 = vmax.f32 %v4149, 0.0
        %v5163 = vmax.f32 %v4151, 0.0
        %v5164 = vmax.f32 %v4310, 0.0
        %v5165 = vmax.f32 %v4312, 0.0
        %v5166 = vmax.f32 %v4471, 0.0
        %v5167 = vmax.f32 %v4473, 0.0
        %v5168 = vmax.f32 %v4632, 0.0
        %v5169 = vmax.f32 %v4634, 0.0
        %v5170 = vmax.f32 %v4793, 0.0
        %v5171 = vmax.f32 %v4795, 0.0
        %v5172 = vmax.f32 %v4954, 0.0
        %v5173 = vmax.f32 %v4956, 0.0
        %v5174 = vmax.f32 %v3833, 0.0
        %v5175 = vmax.f32 %v3835, 0.0
        %v5176 = vmax.f32 %v3994, 0.0
        %v5177 = vmax.f32 %v3996, 0.0
        %v5178 = vmax.f32 %v4155, 0.0
        %v5179 = vmax.f32 %v4157, 0.0
        %v5180 = vmax.f32 %v4316, 0.0
        %v5181 = vmax.f32 %v4318, 0.0
        %v5182 = vmax.f32 %v4477, 0.0
        %v5183 = vmax.f32 %v4479, 0.0
        %v5184 = vmax.f32 %v4638, 0.0
        %v5185 = vmax.f32 %v4640, 0.0
        %v5186 = vmax.f32 %v4799, 0.0
        %v5187 = vmax.f32 %v4801, 0.0
        %v5188 = vmax.f32 %v4960, 0.0
        %v5189 = vmax.f32 %v4962, 0.0
        %v5190 = vmax.f32 %v3839, 0.0
        %v5191 = vmax.f32 %v3841, 0.0
        %v5192 = vmax.f32 %v4000, 0.0
        %v5193 = vmax.f32 %v4002, 0.0
        %v5194 = vmax.f32 %v4161, 0.0
        %v5195 = vmax.f32 %v4163, 0.0
        %v5196 = vmax.f32 %v4322, 0.0
        %v5197 = vmax.f32 %v4324, 0.0
        %v5198 = vmax.f32 %v4483, 0.0
        %v5199 = vmax.f32 %v4485, 0.0
        %v5200 = vmax.f32 %v4644, 0.0
        %v5201 = vmax.f32 %v4646, 0.0
        %v5202 = vmax.f32 %v4805, 0.0
        %v5203 = vmax.f32 %v4807, 0.0
        %v5204 = vmax.f32 %v4966, 0.0
        %v5205 = vmax.f32 %v4968, 0.0
        %v5206 = vmax.f32 %v3845, 0.0
        %v5207 = vmax.f32 %v3847, 0.0
        %v5208 = vmax.f32 %v4006, 0.0
        %v5209 = vmax.f32 %v4008, 0.0
        %v5210 = vmax.f32 %v4167, 0.0
        %v5211 = vmax.f32 %v4169, 0.0
        %v5212 = vmax.f32 %v4328, 0.0
        %v5213 = vmax.f32 %v4330, 0.0
        %v5214 = vmax.f32 %v4489, 0.0
        %v5215 = vmax.f32 %v4491, 0.0
        %v5216 = vmax.f32 %v4650, 0.0
        %v5217 = vmax.f32 %v4652, 0.0
        %v5218 = vmax.f32 %v4811, 0.0
        %v5219 = vmax.f32 %v4813, 0.0
        %v5220 = vmax.f32 %v4972, 0.0
        %v5221 = vmax.f32 %v4974, 0.0
        %v5222 = vmax.f32 %v3851, 0.0
        %v5223 = vmax.f32 %v3853, 0.0
        %v5224 = vmax.f32 %v4012, 0.0
        %v5225 = vmax.f32 %v4014, 0.0
        %v5226 = vmax.f32 %v4173, 0.0
        %v5227 = vmax.f32 %v4175, 0.0
        %v5228 = vmax.f32 %v4334, 0.0
        %v5229 = vmax.f32 %v4336, 0.0
        %v5230 = vmax.f32 %v4495, 0.0
        %v5231 = vmax.f32 %v4497, 0.0
        %v5232 = vmax.f32 %v4656, 0.0
        %v5233 = vmax.f32 %v4658, 0.0
        %v5234 = vmax.f32 %v4817, 0.0
        %v5235 = vmax.f32 %v4819, 0.0
        %v5236 = vmax.f32 %v4978, 0.0
        %v5237 = vmax.f32 %v4980, 0.0
        %v5238 = vlaneseq
        %v5239 = vshrl.u32 %v5238, 7
        %v5240 = vld [vmem:[%s294] sm:$0xff]
        %v5241 = vld [vmem:[%s294 + $0x8] sm:$0xff]
        %v5242 = vlaneseq
        %v5243 = vshrl.u32 %v5242, 7
        %v5244 = vsub.s32 0, %v5243
        %v5245 = vrot.slane %v5240, %v5244
        %v5246 = vlaneseq
        %v5247 = vshrl.u32 %v5246, 7
        %v5248 = vsub.s32 1, %v5247
        %v5249 = vrot.slane %v5240, %v5248
        %v5250 = vlaneseq
        %v5251 = vshrl.u32 %v5250, 7
        %v5252 = vsub.s32 2, %v5251
        %v5253 = vrot.slane %v5240, %v5252
        %v5254 = vlaneseq
        %v5255 = vshrl.u32 %v5254, 7
        %v5256 = vsub.s32 3, %v5255
        %v5257 = vrot.slane %v5240, %v5256
        %v5258 = vlaneseq
        %v5259 = vshrl.u32 %v5258, 7
        %v5260 = vsub.s32 4, %v5259
        %v5261 = vrot.slane %v5240, %v5260
        %v5262 = vlaneseq
        %v5263 = vshrl.u32 %v5262, 7
        %v5264 = vsub.s32 5, %v5263
        %v5265 = vrot.slane %v5240, %v5264
        %v5266 = vlaneseq
        %v5267 = vshrl.u32 %v5266, 7
        %v5268 = vsub.s32 6, %v5267
        %v5269 = vrot.slane %v5240, %v5268
        %v5270 = vlaneseq
        %v5271 = vshrl.u32 %v5270, 7
        %v5272 = vsub.s32 7, %v5271
        %v5273 = vrot.slane %v5240, %v5272
        %v5274 = vlaneseq
        %v5275 = vshrl.u32 %v5274, 7
        %v5276 = vsub.s32 0, %v5275
        %v5277 = vrot.slane %v5241, %v5276
        %v5278 = vlaneseq
        %v5279 = vshrl.u32 %v5278, 7
        %v5280 = vsub.s32 1, %v5279
        %v5281 = vrot.slane %v5241, %v5280
        %v5282 = vlaneseq
        %v5283 = vshrl.u32 %v5282, 7
        %v5284 = vsub.s32 2, %v5283
        %v5285 = vrot.slane %v5241, %v5284
        %v5286 = vlaneseq
        %v5287 = vshrl.u32 %v5286, 7
        %v5288 = vsub.s32 3, %v5287
        %v5289 = vrot.slane %v5241, %v5288
        %v5290 = vlaneseq
        %v5291 = vshrl.u32 %v5290, 7
        %v5292 = vsub.s32 4, %v5291
        %v5293 = vrot.slane %v5241, %v5292
        %v5294 = vlaneseq
        %v5295 = vshrl.u32 %v5294, 7
        %v5296 = vsub.s32 5, %v5295
        %v5297 = vrot.slane %v5241, %v5296
        %v5298 = vlaneseq
        %v5299 = vshrl.u32 %v5298, 7
        %v5300 = vsub.s32 6, %v5299
        %v5301 = vrot.slane %v5241, %v5300
        %v5302 = vlaneseq
        %v5303 = vshrl.u32 %v5302, 7
        %v5304 = vsub.s32 7, %v5303
        %v5305 = vrot.slane %v5241, %v5304
        %vm5306 = vcmp.eq.s32.totalorder %v5239, %v5245
        %vm5307 = vcmp.eq.s32.totalorder %v5239, %v5249
        %vm5308 = vcmp.eq.s32.totalorder %v5239, %v5253
        %vm5309 = vcmp.eq.s32.totalorder %v5239, %v5257
        %vm5310 = vcmp.eq.s32.totalorder %v5239, %v5261
        %vm5311 = vcmp.eq.s32.totalorder %v5239, %v5265
        %vm5312 = vcmp.eq.s32.totalorder %v5239, %v5269
        %vm5313 = vcmp.eq.s32.totalorder %v5239, %v5273
        %vm5314 = vcmp.eq.s32.totalorder %v5239, %v5277
        %vm5315 = vcmp.eq.s32.totalorder %v5239, %v5281
        %vm5316 = vcmp.eq.s32.totalorder %v5239, %v5285
        %vm5317 = vcmp.eq.s32.totalorder %v5239, %v5289
        %vm5318 = vcmp.eq.s32.totalorder %v5239, %v5293
        %vm5319 = vcmp.eq.s32.totalorder %v5239, %v5297
        %vm5320 = vcmp.eq.s32.totalorder %v5239, %v5301
        %vm5321 = vcmp.eq.s32.totalorder %v5239, %v5305
        %v5322 = vsel %vm5306, 1, 0
        %v5323 = vsel %vm5307, 1, 0
        %v5324 = vsel %vm5308, 1, 0
        %v5325 = vsel %vm5309, 1, 0
        %v5326 = vsel %vm5310, 1, 0
        %v5327 = vsel %vm5311, 1, 0
        %v5328 = vsel %vm5312, 1, 0
        %v5329 = vsel %vm5313, 1, 0
        %v5330 = vsel %vm5314, 1, 0
        %v5331 = vsel %vm5315, 1, 0
        %v5332 = vsel %vm5316, 1, 0
        %v5333 = vsel %vm5317, 1, 0
        %v5334 = vsel %vm5318, 1, 0
        %v5335 = vsel %vm5319, 1, 0
        %v5336 = vsel %vm5320, 1, 0
        %v5337 = vsel %vm5321, 1, 0
        %v5338 = vcvt.s32.f32 %v5322
        %v5339 = vcvt.s32.f32 %v5323
        %v5340 = vcvt.s32.f32 %v5324
        %v5341 = vcvt.s32.f32 %v5325
        %v5342 = vcvt.s32.f32 %v5326
        %v5343 = vcvt.s32.f32 %v5327
        %v5344 = vcvt.s32.f32 %v5328
        %v5345 = vcvt.s32.f32 %v5329
        %v5346 = vcvt.s32.f32 %v5330
        %v5347 = vcvt.s32.f32 %v5331
        %v5348 = vcvt.s32.f32 %v5332
        %v5349 = vcvt.s32.f32 %v5333
        %v5350 = vcvt.s32.f32 %v5334
        %v5351 = vcvt.s32.f32 %v5335
        %v5352 = vcvt.s32.f32 %v5336
        %v5353 = vcvt.s32.f32 %v5337
        %v5354 = vld [vmem:[%s281] sm:$0x3]
        %5355 = vmatprep.subr.mxu0 %v4983
        %5356 = vmatpush1.xpose.msra.mxu0 %v4982
        %5357 = vmatprep.subr.mxu0 %v4999
        %5358 = vmatpush1.xpose.msra.mxu0 %v4998
        %5359 = vmatprep.subr.mxu0 %v5015
        %5360 = vmatpush1.xpose.msra.mxu0 %v5014
        %5361 = vmatprep.subr.mxu0 %v5031
        %5362 = vmatpush1.xpose.msra.mxu0 %v5030
        %5363 = vmatprep.subr.mxu0 %v5047
        %5364 = vmatpush1.xpose.msra.mxu0 %v5046
        %5365 = vmatprep.subr.mxu0 %v5063
        %5366 = vmatpush1.xpose.msra.mxu0 %v5062
        %5367 = vmatprep.subr.mxu0 %v5079
        %5368 = vmatpush1.xpose.msra.mxu0 %v5078
        %5369 = vmatprep.subr.mxu0 %v5095
        %5370 = vmatpush1.xpose.msra.mxu0 %v5094
        %5371 = vmatprep.subr.mxu0 %v5111
        %5372 = vmatpush1.xpose.msra.mxu0 %v5110
        %5373 = vmatprep.subr.mxu0 %v5127
        %5374 = vmatpush1.xpose.msra.mxu0 %v5126
        %5375 = vmatprep.subr.mxu0 %v5143
        %5376 = vmatpush1.xpose.msra.mxu0 %v5142
        %5377 = vmatprep.subr.mxu0 %v5159
        %5378 = vmatpush1.xpose.msra.mxu0 %v5158
        %5379 = vmatprep.subr.mxu0 %v5175
        %5380 = vmatpush1.xpose.msra.mxu0 %v5174
        %5381 = vmatprep.subr.mxu0 %v5191
        %5382 = vmatpush1.xpose.msra.mxu0 %v5190
        %5383 = vmatprep.subr.mxu0 %v5207
        %5384 = vmatpush1.xpose.msra.mxu0 %v5206
        %5385 = vmatprep.subr.mxu0 %v5223
        %5386 = vmatpush1.xpose.msra.mxu0 %v5222
        %5387 = vmatprep.subr.mxu0 0.0
        %5388 = vmatpush1.xpose.msra.mxu0 0.0
        %5389 = vmatprep.subr.mxu0 0.0
        %5390 = vmatpush1.xpose.msra.mxu0 0.0
        %5391 = vmatprep.subr.mxu0 0.0
        %5392 = vmatpush1.xpose.msra.mxu0 0.0
        %5393 = vmatprep.subr.mxu0 0.0
        %5394 = vmatpush1.xpose.msra.mxu0 0.0
        %5395 = vmatprep.subr.mxu0 0.0
        %5396 = vmatpush1.xpose.msra.mxu0 0.0
        %5397 = vmatprep.subr.mxu0 0.0
        %5398 = vmatpush1.xpose.msra.mxu0 0.0
        %5399 = vmatprep.subr.mxu0 0.0
        %5400 = vmatpush1.xpose.msra.mxu0 0.0
        %5401 = vmatprep.subr.mxu0 0.0
        %5402 = vmatpush1.xpose.msra.mxu0 0.0
        %5403 = vmatprep.subr.mxu0 0.0
        %5404 = vmatpush1.xpose.msra.mxu0 0.0
        %5405 = vmatprep.subr.mxu0 0.0
        %5406 = vmatpush1.xpose.msra.mxu0 0.0
        %5407 = vmatprep.subr.mxu0 0.0
        %5408 = vmatpush1.xpose.msra.mxu0 0.0
        %5409 = vmatprep.subr.mxu0 0.0
        %5410 = vmatpush1.xpose.msra.mxu0 0.0
        %5411 = vmatprep.subr.mxu0 0.0
        %5412 = vmatpush1.xpose.msra.mxu0 0.0
        %5413 = vmatprep.subr.mxu0 0.0
        %5414 = vmatpush1.xpose.msra.mxu0 0.0
        %5415 = vmatprep.subr.mxu0 0.0
        %5416 = vmatpush1.xpose.msra.mxu0 0.0
        %5417 = vmatprep.subr.mxu0 0.0
        %5418 = vmatpush1.xpose.msra.mxu0 0.0
        %5419 = vmatprep.mubr.f32.mxu0 %v5339
        %5420 = vmatmul.mubr.f32.gmra.mrb[0].mxu0 %v5338
        %v5421 = vpop.f32.mrb[0].mxu0
        %v5422 = vadd.f32 0.0, %v5421
        %v5423 = vpop.f32.mrb[0].mxu0
        %5424 = vdwg.mxu0
        %5425 = vmatprep.subr.mxu0 %v4985
        %5426 = vmatpush1.xpose.msra.mxu0 %v4984
        %5427 = vmatprep.subr.mxu0 %v5001
        %5428 = vmatpush1.xpose.msra.mxu0 %v5000
        %5429 = vmatprep.subr.mxu0 %v5017
        %5430 = vmatpush1.xpose.msra.mxu0 %v5016
        %5431 = vmatprep.subr.mxu0 %v5033
        %5432 = vmatpush1.xpose.msra.mxu0 %v5032
        %5433 = vmatprep.subr.mxu0 %v5049
        %5434 = vmatpush1.xpose.msra.mxu0 %v5048
        %5435 = vmatprep.subr.mxu0 %v5065
        %5436 = vmatpush1.xpose.msra.mxu0 %v5064
        %5437 = vmatprep.subr.mxu0 %v5081
        %5438 = vmatpush1.xpose.msra.mxu0 %v5080
        %5439 = vmatprep.subr.mxu0 %v5097
        %5440 = vmatpush1.xpose.msra.mxu0 %v5096
        %5441 = vmatprep.subr.mxu0 %v5113
        %5442 = vmatpush1.xpose.msra.mxu0 %v5112
        %5443 = vmatprep.subr.mxu0 %v5129
        %5444 = vmatpush1.xpose.msra.mxu0 %v5128
        %5445 = vmatprep.subr.mxu0 %v5145
        %5446 = vmatpush1.xpose.msra.mxu0 %v5144
        %5447 = vmatprep.subr.mxu0 %v5161
        %5448 = vmatpush1.xpose.msra.mxu0 %v5160
        %5449 = vmatprep.subr.mxu0 %v5177
        %5450 = vmatpush1.xpose.msra.mxu0 %v5176
        %5451 = vmatprep.subr.mxu0 %v5193
        %5452 = vmatpush1.xpose.msra.mxu0 %v5192
        %5453 = vmatprep.subr.mxu0 %v5209
        %5454 = vmatpush1.xpose.msra.mxu0 %v5208
        %5455 = vmatprep.subr.mxu0 %v5225
        %5456 = vmatpush1.xpose.msra.mxu0 %v5224
        %5457 = vmatprep.subr.mxu0 0.0
        %5458 = vmatpush1.xpose.msra.mxu0 0.0
        %5459 = vmatprep.subr.mxu0 0.0
        %5460 = vmatpush1.xpose.msra.mxu0 0.0
        %5461 = vmatprep.subr.mxu0 0.0
        %5462 = vmatpush1.xpose.msra.mxu0 0.0
        %5463 = vmatprep.subr.mxu0 0.0
        %5464 = vmatpush1.xpose.msra.mxu0 0.0
        %5465 = vmatprep.subr.mxu0 0.0
        %5466 = vmatpush1.xpose.msra.mxu0 0.0
        %5467 = vmatprep.subr.mxu0 0.0
        %5468 = vmatpush1.xpose.msra.mxu0 0.0
        %5469 = vmatprep.subr.mxu0 0.0
        %5470 = vmatpush1.xpose.msra.mxu0 0.0
        %5471 = vmatprep.subr.mxu0 0.0
        %5472 = vmatpush1.xpose.msra.mxu0 0.0
        %5473 = vmatprep.subr.mxu0 0.0
        %5474 = vmatpush1.xpose.msra.mxu0 0.0
        %5475 = vmatprep.subr.mxu0 0.0
        %5476 = vmatpush1.xpose.msra.mxu0 0.0
        %5477 = vmatprep.subr.mxu0 0.0
        %5478 = vmatpush1.xpose.msra.mxu0 0.0
        %5479 = vmatprep.subr.mxu0 0.0
        %5480 = vmatpush1.xpose.msra.mxu0 0.0
        %5481 = vmatprep.subr.mxu0 0.0
        %5482 = vmatpush1.xpose.msra.mxu0 0.0
        %5483 = vmatprep.subr.mxu0 0.0
        %5484 = vmatpush1.xpose.msra.mxu0 0.0
        %5485 = vmatprep.subr.mxu0 0.0
        %5486 = vmatpush1.xpose.msra.mxu0 0.0
        %5487 = vmatprep.subr.mxu0 0.0
        %5488 = vmatpush1.xpose.msra.mxu0 0.0
        %5489 = vmatprep.mubr.f32.mxu0 %v5341
        %5490 = vmatmul.mubr.f32.gmra.mrb[0].mxu0 %v5340
        %v5491 = vpop.f32.mrb[0].mxu0
        %v5492 = vadd.f32 %v5422, %v5491
        %v5493 = vpop.f32.mrb[0].mxu0
        %5494 = vdwg.mxu0
        %5495 = vmatprep.subr.mxu0 %v4987
        %5496 = vmatpush1.xpose.msra.mxu0 %v4986
        %5497 = vmatprep.subr.mxu0 %v5003
        %5498 = vmatpush1.xpose.msra.mxu0 %v5002
        %5499 = vmatprep.subr.mxu0 %v5019
        %5500 = vmatpush1.xpose.msra.mxu0 %v5018
        %5501 = vmatprep.subr.mxu0 %v5035
        %5502 = vmatpush1.xpose.msra.mxu0 %v5034
        %5503 = vmatprep.subr.mxu0 %v5051
        %5504 = vmatpush1.xpose.msra.mxu0 %v5050
        %5505 = vmatprep.subr.mxu0 %v5067
        %5506 = vmatpush1.xpose.msra.mxu0 %v5066
        %5507 = vmatprep.subr.mxu0 %v5083
        %5508 = vmatpush1.xpose.msra.mxu0 %v5082
        %5509 = vmatprep.subr.mxu0 %v5099
        %5510 = vmatpush1.xpose.msra.mxu0 %v5098
        %5511 = vmatprep.subr.mxu0 %v5115
        %5512 = vmatpush1.xpose.msra.mxu0 %v5114
        %5513 = vmatprep.subr.mxu0 %v5131
        %5514 = vmatpush1.xpose.msra.mxu0 %v5130
        %5515 = vmatprep.subr.mxu0 %v5147
        %5516 = vmatpush1.xpose.msra.mxu0 %v5146
        %5517 = vmatprep.subr.mxu0 %v5163
        %5518 = vmatpush1.xpose.msra.mxu0 %v5162
        %5519 = vmatprep.subr.mxu0 %v5179
        %5520 = vmatpush1.xpose.msra.mxu0 %v5178
        %5521 = vmatprep.subr.mxu0 %v5195
        %5522 = vmatpush1.xpose.msra.mxu0 %v5194
        %5523 = vmatprep.subr.mxu0 %v5211
        %5524 = vmatpush1.xpose.msra.mxu0 %v5210
        %5525 = vmatprep.subr.mxu0 %v5227
        %5526 = vmatpush1.xpose.msra.mxu0 %v5226
        %5527 = vmatprep.subr.mxu0 0.0
        %5528 = vmatpush1.xpose.msra.mxu0 0.0
        %5529 = vmatprep.subr.mxu0 0.0
        %5530 = vmatpush1.xpose.msra.mxu0 0.0
        %5531 = vmatprep.subr.mxu0 0.0
        %5532 = vmatpush1.xpose.msra.mxu0 0.0
        %5533 = vmatprep.subr.mxu0 0.0
        %5534 = vmatpush1.xpose.msra.mxu0 0.0
        %5535 = vmatprep.subr.mxu0 0.0
        %5536 = vmatpush1.xpose.msra.mxu0 0.0
        %5537 = vmatprep.subr.mxu0 0.0
        %5538 = vmatpush1.xpose.msra.mxu0 0.0
        %5539 = vmatprep.subr.mxu0 0.0
        %5540 = vmatpush1.xpose.msra.mxu0 0.0
        %5541 = vmatprep.subr.mxu0 0.0
        %5542 = vmatpush1.xpose.msra.mxu0 0.0
        %5543 = vmatprep.subr.mxu0 0.0
        %5544 = vmatpush1.xpose.msra.mxu0 0.0
        %5545 = vmatprep.subr.mxu0 0.0
        %5546 = vmatpush1.xpose.msra.mxu0 0.0
        %5547 = vmatprep.subr.mxu0 0.0
        %5548 = vmatpush1.xpose.msra.mxu0 0.0
        %5549 = vmatprep.subr.mxu0 0.0
        %5550 = vmatpush1.xpose.msra.mxu0 0.0
        %5551 = vmatprep.subr.mxu0 0.0
        %5552 = vmatpush1.xpose.msra.mxu0 0.0
        %5553 = vmatprep.subr.mxu0 0.0
        %5554 = vmatpush1.xpose.msra.mxu0 0.0
        %5555 = vmatprep.subr.mxu0 0.0
        %5556 = vmatpush1.xpose.msra.mxu0 0.0
        %5557 = vmatprep.subr.mxu0 0.0
        %5558 = vmatpush1.xpose.msra.mxu0 0.0
        %5559 = vmatprep.mubr.f32.mxu0 %v5343
        %5560 = vmatmul.mubr.f32.gmra.mrb[0].mxu0 %v5342
        %v5561 = vpop.f32.mrb[0].mxu0
        %v5562 = vadd.f32 %v5492, %v5561
        %v5563 = vpop.f32.mrb[0].mxu0
        %5564 = vdwg.mxu0
        %5565 = vmatprep.subr.mxu0 %v4989
        %5566 = vmatpush1.xpose.msra.mxu0 %v4988
        %5567 = vmatprep.subr.mxu0 %v5005
        %5568 = vmatpush1.xpose.msra.mxu0 %v5004
        %5569 = vmatprep.subr.mxu0 %v5021
        %5570 = vmatpush1.xpose.msra.mxu0 %v5020
        %5571 = vmatprep.subr.mxu0 %v5037
        %5572 = vmatpush1.xpose.msra.mxu0 %v5036
        %5573 = vmatprep.subr.mxu0 %v5053
        %5574 = vmatpush1.xpose.msra.mxu0 %v5052
        %5575 = vmatprep.subr.mxu0 %v5069
        %5576 = vmatpush1.xpose.msra.mxu0 %v5068
        %5577 = vmatprep.subr.mxu0 %v5085
        %5578 = vmatpush1.xpose.msra.mxu0 %v5084
        %5579 = vmatprep.subr.mxu0 %v5101
        %5580 = vmatpush1.xpose.msra.mxu0 %v5100
        %5581 = vmatprep.subr.mxu0 %v5117
        %5582 = vmatpush1.xpose.msra.mxu0 %v5116
        %5583 = vmatprep.subr.mxu0 %v5133
        %5584 = vmatpush1.xpose.msra.mxu0 %v5132
        %5585 = vmatprep.subr.mxu0 %v5149
        %5586 = vmatpush1.xpose.msra.mxu0 %v5148
        %5587 = vmatprep.subr.mxu0 %v5165
        %5588 = vmatpush1.xpose.msra.mxu0 %v5164
        %5589 = vmatprep.subr.mxu0 %v5181
        %5590 = vmatpush1.xpose.msra.mxu0 %v5180
        %5591 = vmatprep.subr.mxu0 %v5197
        %5592 = vmatpush1.xpose.msra.mxu0 %v5196
        %5593 = vmatprep.subr.mxu0 %v5213
        %5594 = vmatpush1.xpose.msra.mxu0 %v5212
        %5595 = vmatprep.subr.mxu0 %v5229
        %5596 = vmatpush1.xpose.msra.mxu0 %v5228
        %5597 = vmatprep.subr.mxu0 0.0
        %5598 = vmatpush1.xpose.msra.mxu0 0.0
        %5599 = vmatprep.subr.mxu0 0.0
        %5600 = vmatpush1.xpose.msra.mxu0 0.0
        %5601 = vmatprep.subr.mxu0 0.0
        %5602 = vmatpush1.xpose.msra.mxu0 0.0
        %5603 = vmatprep.subr.mxu0 0.0
        %5604 = vmatpush1.xpose.msra.mxu0 0.0
        %5605 = vmatprep.subr.mxu0 0.0
        %5606 = vmatpush1.xpose.msra.mxu0 0.0
        %5607 = vmatprep.subr.mxu0 0.0
        %5608 = vmatpush1.xpose.msra.mxu0 0.0
        %5609 = vmatprep.subr.mxu0 0.0
        %5610 = vmatpush1.xpose.msra.mxu0 0.0
        %5611 = vmatprep.subr.mxu0 0.0
        %5612 = vmatpush1.xpose.msra.mxu0 0.0
        %5613 = vmatprep.subr.mxu0 0.0
        %5614 = vmatpush1.xpose.msra.mxu0 0.0
        %5615 = vmatprep.subr.mxu0 0.0
        %5616 = vmatpush1.xpose.msra.mxu0 0.0
        %5617 = vmatprep.subr.mxu0 0.0
        %5618 = vmatpush1.xpose.msra.mxu0 0.0
        %5619 = vmatprep.subr.mxu0 0.0
        %5620 = vmatpush1.xpose.msra.mxu0 0.0
        %5621 = vmatprep.subr.mxu0 0.0
        %5622 = vmatpush1.xpose.msra.mxu0 0.0
        %5623 = vmatprep.subr.mxu0 0.0
        %5624 = vmatpush1.xpose.msra.mxu0 0.0
        %5625 = vmatprep.subr.mxu0 0.0
        %5626 = vmatpush1.xpose.msra.mxu0 0.0
        %5627 = vmatprep.subr.mxu0 0.0
        %5628 = vmatpush1.xpose.msra.mxu0 0.0
        %5629 = vmatprep.mubr.f32.mxu0 %v5345
        %5630 = vmatmul.mubr.f32.gmra.mrb[0].mxu0 %v5344
        %v5631 = vpop.f32.mrb[0].mxu0
        %v5632 = vadd.f32 %v5562, %v5631
        %v5633 = vpop.f32.mrb[0].mxu0
        %5634 = vdwg.mxu0
        %5635 = vmatprep.subr.mxu0 %v4991
        %5636 = vmatpush1.xpose.msra.mxu0 %v4990
        %5637 = vmatprep.subr.mxu0 %v5007
        %5638 = vmatpush1.xpose.msra.mxu0 %v5006
        %5639 = vmatprep.subr.mxu0 %v5023
        %5640 = vmatpush1.xpose.msra.mxu0 %v5022
        %5641 = vmatprep.subr.mxu0 %v5039
        %5642 = vmatpush1.xpose.msra.mxu0 %v5038
        %5643 = vmatprep.subr.mxu0 %v5055
        %5644 = vmatpush1.xpose.msra.mxu0 %v5054
        %5645 = vmatprep.subr.mxu0 %v5071
        %5646 = vmatpush1.xpose.msra.mxu0 %v5070
        %5647 = vmatprep.subr.mxu0 %v5087
        %5648 = vmatpush1.xpose.msra.mxu0 %v5086
        %5649 = vmatprep.subr.mxu0 %v5103
        %5650 = vmatpush1.xpose.msra.mxu0 %v5102
        %5651 = vmatprep.subr.mxu0 %v5119
        %5652 = vmatpush1.xpose.msra.mxu0 %v5118
        %5653 = vmatprep.subr.mxu0 %v5135
        %5654 = vmatpush1.xpose.msra.mxu0 %v5134
        %5655 = vmatprep.subr.mxu0 %v5151
        %5656 = vmatpush1.xpose.msra.mxu0 %v5150
        %5657 = vmatprep.subr.mxu0 %v5167
        %5658 = vmatpush1.xpose.msra.mxu0 %v5166
        %5659 = vmatprep.subr.mxu0 %v5183
        %5660 = vmatpush1.xpose.msra.mxu0 %v5182
        %5661 = vmatprep.subr.mxu0 %v5199
        %5662 = vmatpush1.xpose.msra.mxu0 %v5198
        %5663 = vmatprep.subr.mxu0 %v5215
        %5664 = vmatpush1.xpose.msra.mxu0 %v5214
        %5665 = vmatprep.subr.mxu0 %v5231
        %5666 = vmatpush1.xpose.msra.mxu0 %v5230
        %5667 = vmatprep.subr.mxu0 0.0
        %5668 = vmatpush1.xpose.msra.mxu0 0.0
        %5669 = vmatprep.subr.mxu0 0.0
        %5670 = vmatpush1.xpose.msra.mxu0 0.0
        %5671 = vmatprep.subr.mxu0 0.0
        %5672 = vmatpush1.xpose.msra.mxu0 0.0
        %5673 = vmatprep.subr.mxu0 0.0
        %5674 = vmatpush1.xpose.msra.mxu0 0.0
        %5675 = vmatprep.subr.mxu0 0.0
        %5676 = vmatpush1.xpose.msra.mxu0 0.0
        %5677 = vmatprep.subr.mxu0 0.0
        %5678 = vmatpush1.xpose.msra.mxu0 0.0
        %5679 = vmatprep.subr.mxu0 0.0
        %5680 = vmatpush1.xpose.msra.mxu0 0.0
        %5681 = vmatprep.subr.mxu0 0.0
        %5682 = vmatpush1.xpose.msra.mxu0 0.0
        %5683 = vmatprep.subr.mxu0 0.0
        %5684 = vmatpush1.xpose.msra.mxu0 0.0
        %5685 = vmatprep.subr.mxu0 0.0
        %5686 = vmatpush1.xpose.msra.mxu0 0.0
        %5687 = vmatprep.subr.mxu0 0.0
        %5688 = vmatpush1.xpose.msra.mxu0 0.0
        %5689 = vmatprep.subr.mxu0 0.0
        %5690 = vmatpush1.xpose.msra.mxu0 0.0
        %5691 = vmatprep.subr.mxu0 0.0
        %5692 = vmatpush1.xpose.msra.mxu0 0.0
        %5693 = vmatprep.subr.mxu0 0.0
        %5694 = vmatpush1.xpose.msra.mxu0 0.0
        %5695 = vmatprep.subr.mxu0 0.0
        %5696 = vmatpush1.xpose.msra.mxu0 0.0
        %5697 = vmatprep.subr.mxu0 0.0
        %5698 = vmatpush1.xpose.msra.mxu0 0.0
        %5699 = vmatprep.mubr.f32.mxu0 %v5347
        %5700 = vmatmul.mubr.f32.gmra.mrb[0].mxu0 %v5346
        %v5701 = vpop.f32.mrb[0].mxu0
        %v5702 = vadd.f32 %v5632, %v5701
        %v5703 = vpop.f32.mrb[0].mxu0
        %5704 = vdwg.mxu0
        %5705 = vmatprep.subr.mxu0 %v4993
        %5706 = vmatpush1.xpose.msra.mxu0 %v4992
        %5707 = vmatprep.subr.mxu0 %v5009
        %5708 = vmatpush1.xpose.msra.mxu0 %v5008
        %5709 = vmatprep.subr.mxu0 %v5025
        %5710 = vmatpush1.xpose.msra.mxu0 %v5024
        %5711 = vmatprep.subr.mxu0 %v5041
        %5712 = vmatpush1.xpose.msra.mxu0 %v5040
        %5713 = vmatprep.subr.mxu0 %v5057
        %5714 = vmatpush1.xpose.msra.mxu0 %v5056
        %5715 = vmatprep.subr.mxu0 %v5073
        %5716 = vmatpush1.xpose.msra.mxu0 %v5072
        %5717 = vmatprep.subr.mxu0 %v5089
        %5718 = vmatpush1.xpose.msra.mxu0 %v5088
        %5719 = vmatprep.subr.mxu0 %v5105
        %5720 = vmatpush1.xpose.msra.mxu0 %v5104
        %5721 = vmatprep.subr.mxu0 %v5121
        %5722 = vmatpush1.xpose.msra.mxu0 %v5120
        %5723 = vmatprep.subr.mxu0 %v5137
        %5724 = vmatpush1.xpose.msra.mxu0 %v5136
        %5725 = vmatprep.subr.mxu0 %v5153
        %5726 = vmatpush1.xpose.msra.mxu0 %v5152
        %5727 = vmatprep.subr.mxu0 %v5169
        %5728 = vmatpush1.xpose.msra.mxu0 %v5168
        %5729 = vmatprep.subr.mxu0 %v5185
        %5730 = vmatpush1.xpose.msra.mxu0 %v5184
        %5731 = vmatprep.subr.mxu0 %v5201
        %5732 = vmatpush1.xpose.msra.mxu0 %v5200
        %5733 = vmatprep.subr.mxu0 %v5217
        %5734 = vmatpush1.xpose.msra.mxu0 %v5216
        %5735 = vmatprep.subr.mxu0 %v5233
        %5736 = vmatpush1.xpose.msra.mxu0 %v5232
        %5737 = vmatprep.subr.mxu0 0.0
        %5738 = vmatpush1.xpose.msra.mxu0 0.0
        %5739 = vmatprep.subr.mxu0 0.0
        %5740 = vmatpush1.xpose.msra.mxu0 0.0
        %5741 = vmatprep.subr.mxu0 0.0
        %5742 = vmatpush1.xpose.msra.mxu0 0.0
        %5743 = vmatprep.subr.mxu0 0.0
        %5744 = vmatpush1.xpose.msra.mxu0 0.0
        %5745 = vmatprep.subr.mxu0 0.0
        %5746 = vmatpush1.xpose.msra.mxu0 0.0
        %5747 = vmatprep.subr.mxu0 0.0
        %5748 = vmatpush1.xpose.msra.mxu0 0.0
        %5749 = vmatprep.subr.mxu0 0.0
        %5750 = vmatpush1.xpose.msra.mxu0 0.0
        %5751 = vmatprep.subr.mxu0 0.0
        %5752 = vmatpush1.xpose.msra.mxu0 0.0
        %5753 = vmatprep.subr.mxu0 0.0
        %5754 = vmatpush1.xpose.msra.mxu0 0.0
        %5755 = vmatprep.subr.mxu0 0.0
        %5756 = vmatpush1.xpose.msra.mxu0 0.0
        %5757 = vmatprep.subr.mxu0 0.0
        %5758 = vmatpush1.xpose.msra.mxu0 0.0
        %5759 = vmatprep.subr.mxu0 0.0
        %5760 = vmatpush1.xpose.msra.mxu0 0.0
        %5761 = vmatprep.subr.mxu0 0.0
        %5762 = vmatpush1.xpose.msra.mxu0 0.0
        %5763 = vmatprep.subr.mxu0 0.0
        %5764 = vmatpush1.xpose.msra.mxu0 0.0
        %5765 = vmatprep.subr.mxu0 0.0
        %5766 = vmatpush1.xpose.msra.mxu0 0.0
        %5767 = vmatprep.subr.mxu0 0.0
        %5768 = vmatpush1.xpose.msra.mxu0 0.0
        %5769 = vmatprep.mubr.f32.mxu0 %v5349
        %5770 = vmatmul.mubr.f32.gmra.mrb[0].mxu0 %v5348
        %v5771 = vpop.f32.mrb[0].mxu0
        %v5772 = vadd.f32 %v5702, %v5771
        %v5773 = vpop.f32.mrb[0].mxu0
        %5774 = vdwg.mxu0
        %5775 = vmatprep.subr.mxu0 %v4995
        %5776 = vmatpush1.xpose.msra.mxu0 %v4994
        %5777 = vmatprep.subr.mxu0 %v5011
        %5778 = vmatpush1.xpose.msra.mxu0 %v5010
        %5779 = vmatprep.subr.mxu0 %v5027
        %5780 = vmatpush1.xpose.msra.mxu0 %v5026
        %5781 = vmatprep.subr.mxu0 %v5043
        %5782 = vmatpush1.xpose.msra.mxu0 %v5042
        %5783 = vmatprep.subr.mxu0 %v5059
        %5784 = vmatpush1.xpose.msra.mxu0 %v5058
        %5785 = vmatprep.subr.mxu0 %v5075
        %5786 = vmatpush1.xpose.msra.mxu0 %v5074
        %5787 = vmatprep.subr.mxu0 %v5091
        %5788 = vmatpush1.xpose.msra.mxu0 %v5090
        %5789 = vmatprep.subr.mxu0 %v5107
        %5790 = vmatpush1.xpose.msra.mxu0 %v5106
        %5791 = vmatprep.subr.mxu0 %v5123
        %5792 = vmatpush1.xpose.msra.mxu0 %v5122
        %5793 = vmatprep.subr.mxu0 %v5139
        %5794 = vmatpush1.xpose.msra.mxu0 %v5138
        %5795 = vmatprep.subr.mxu0 %v5155
        %5796 = vmatpush1.xpose.msra.mxu0 %v5154
        %5797 = vmatprep.subr.mxu0 %v5171
        %5798 = vmatpush1.xpose.msra.mxu0 %v5170
        %5799 = vmatprep.subr.mxu0 %v5187
        %5800 = vmatpush1.xpose.msra.mxu0 %v5186
        %5801 = vmatprep.subr.mxu0 %v5203
        %5802 = vmatpush1.xpose.msra.mxu0 %v5202
        %5803 = vmatprep.subr.mxu0 %v5219
        %5804 = vmatpush1.xpose.msra.mxu0 %v5218
        %5805 = vmatprep.subr.mxu0 %v5235
        %5806 = vmatpush1.xpose.msra.mxu0 %v5234
        %5807 = vmatprep.subr.mxu0 0.0
        %5808 = vmatpush1.xpose.msra.mxu0 0.0
        %5809 = vmatprep.subr.mxu0 0.0
        %5810 = vmatpush1.xpose.msra.mxu0 0.0
        %5811 = vmatprep.subr.mxu0 0.0
        %5812 = vmatpush1.xpose.msra.mxu0 0.0
        %5813 = vmatprep.subr.mxu0 0.0
        %5814 = vmatpush1.xpose.msra.mxu0 0.0
        %5815 = vmatprep.subr.mxu0 0.0
        %5816 = vmatpush1.xpose.msra.mxu0 0.0
        %5817 = vmatprep.subr.mxu0 0.0
        %5818 = vmatpush1.xpose.msra.mxu0 0.0
        %5819 = vmatprep.subr.mxu0 0.0
        %5820 = vmatpush1.xpose.msra.mxu0 0.0
        %5821 = vmatprep.subr.mxu0 0.0
        %5822 = vmatpush1.xpose.msra.mxu0 0.0
        %5823 = vmatprep.subr.mxu0 0.0
        %5824 = vmatpush1.xpose.msra.mxu0 0.0
        %5825 = vmatprep.subr.mxu0 0.0
        %5826 = vmatpush1.xpose.msra.mxu0 0.0
        %5827 = vmatprep.subr.mxu0 0.0
        %5828 = vmatpush1.xpose.msra.mxu0 0.0
        %5829 = vmatprep.subr.mxu0 0.0
        %5830 = vmatpush1.xpose.msra.mxu0 0.0
        %5831 = vmatprep.subr.mxu0 0.0
        %5832 = vmatpush1.xpose.msra.mxu0 0.0
        %5833 = vmatprep.subr.mxu0 0.0
        %5834 = vmatpush1.xpose.msra.mxu0 0.0
        %5835 = vmatprep.subr.mxu0 0.0
        %5836 = vmatpush1.xpose.msra.mxu0 0.0
        %5837 = vmatprep.subr.mxu0 0.0
        %5838 = vmatpush1.xpose.msra.mxu0 0.0
        %5839 = vmatprep.mubr.f32.mxu0 %v5351
        %5840 = vmatmul.mubr.f32.gmra.mrb[0].mxu0 %v5350
        %v5841 = vpop.f32.mrb[0].mxu0
        %v5842 = vadd.f32 %v5772, %v5841
        %v5843 = vpop.f32.mrb[0].mxu0
        %5844 = vdwg.mxu0
        %5845 = vmatprep.subr.mxu0 %v4997
        %5846 = vmatpush1.xpose.msra.mxu0 %v4996
        %5847 = vmatprep.subr.mxu0 %v5013
        %5848 = vmatpush1.xpose.msra.mxu0 %v5012
        %5849 = vmatprep.subr.mxu0 %v5029
        %5850 = vmatpush1.xpose.msra.mxu0 %v5028
        %5851 = vmatprep.subr.mxu0 %v5045
        %5852 = vmatpush1.xpose.msra.mxu0 %v5044
        %5853 = vmatprep.subr.mxu0 %v5061
        %5854 = vmatpush1.xpose.msra.mxu0 %v5060
        %5855 = vmatprep.subr.mxu0 %v5077
        %5856 = vmatpush1.xpose.msra.mxu0 %v5076
        %5857 = vmatprep.subr.mxu0 %v5093
        %5858 = vmatpush1.xpose.msra.mxu0 %v5092
        %5859 = vmatprep.subr.mxu0 %v5109
        %5860 = vmatpush1.xpose.msra.mxu0 %v5108
        %5861 = vmatprep.subr.mxu0 %v5125
        %5862 = vmatpush1.xpose.msra.mxu0 %v5124
        %5863 = vmatprep.subr.mxu0 %v5141
        %5864 = vmatpush1.xpose.msra.mxu0 %v5140
        %5865 = vmatprep.subr.mxu0 %v5157
        %5866 = vmatpush1.xpose.msra.mxu0 %v5156
        %5867 = vmatprep.subr.mxu0 %v5173
        %5868 = vmatpush1.xpose.msra.mxu0 %v5172
        %5869 = vmatprep.subr.mxu0 %v5189
        %5870 = vmatpush1.xpose.msra.mxu0 %v5188
        %5871 = vmatprep.subr.mxu0 %v5205
        %5872 = vmatpush1.xpose.msra.mxu0 %v5204
        %5873 = vmatprep.subr.mxu0 %v5221
        %5874 = vmatpush1.xpose.msra.mxu0 %v5220
        %5875 = vmatprep.subr.mxu0 %v5237
        %5876 = vmatpush1.xpose.msra.mxu0 %v5236
        %5877 = vmatprep.subr.mxu0 0.0
        %5878 = vmatpush1.xpose.msra.mxu0 0.0
        %5879 = vmatprep.subr.mxu0 0.0
        %5880 = vmatpush1.xpose.msra.mxu0 0.0
        %5881 = vmatprep.subr.mxu0 0.0
        %5882 = vmatpush1.xpose.msra.mxu0 0.0
        %5883 = vmatprep.subr.mxu0 0.0
        %5884 = vmatpush1.xpose.msra.mxu0 0.0
        %5885 = vmatprep.subr.mxu0 0.0
        %5886 = vmatpush1.xpose.msra.mxu0 0.0
        %5887 = vmatprep.subr.mxu0 0.0
        %5888 = vmatpush1.xpose.msra.mxu0 0.0
        %5889 = vmatprep.subr.mxu0 0.0
        %5890 = vmatpush1.xpose.msra.mxu0 0.0
        %5891 = vmatprep.subr.mxu0 0.0
        %5892 = vmatpush1.xpose.msra.mxu0 0.0
        %5893 = vmatprep.subr.mxu0 0.0
        %5894 = vmatpush1.xpose.msra.mxu0 0.0
        %5895 = vmatprep.subr.mxu0 0.0
        %5896 = vmatpush1.xpose.msra.mxu0 0.0
        %5897 = vmatprep.subr.mxu0 0.0
        %5898 = vmatpush1.xpose.msra.mxu0 0.0
        %5899 = vmatprep.subr.mxu0 0.0
        %5900 = vmatpush1.xpose.msra.mxu0 0.0
        %5901 = vmatprep.subr.mxu0 0.0
        %5902 = vmatpush1.xpose.msra.mxu0 0.0
        %5903 = vmatprep.subr.mxu0 0.0
        %5904 = vmatpush1.xpose.msra.mxu0 0.0
        %5905 = vmatprep.subr.mxu0 0.0
        %5906 = vmatpush1.xpose.msra.mxu0 0.0
        %5907 = vmatprep.subr.mxu0 0.0
        %5908 = vmatpush1.xpose.msra.mxu0 0.0
        %5909 = vmatprep.mubr.f32.mxu0 %v5353
        %5910 = vmatmul.mubr.f32.gmra.mrb[0].mxu0 %v5352
        %v5911 = vpop.f32.mrb[0].mxu0
        %v5912 = vadd.f32 %v5842, %v5911
        %v5913 = vpop.f32.mrb[0].mxu0
        %5914 = vdwg.mxu0
        %v5915 = vadd.f32 %v5354, %v5912
        %5916 = vst [vmem:[%s281] sm:$0x3] %v5915
        %s5917 = sand.u32 %s180, 1
        %s5918 = scalar_lea.sflag [#allocation3], %s5917
        %s5919 = sand.u32 %s180, 1
        %s5920 = smul.addr %s5919, 2
        %s5921 = scalar_lea.vmem [#allocation2], %s5920
        // Predicated region
        $region49: #{tpu_custom_call.1} parent=43 // pred_check
          %p5922 = pneg %p190
        $region50: #{tpu_custom_call.1} parent=43 // pred_check_branch
          %5924 = sbr.rel (%p5922) target = $region52
        $region51: #{tpu_custom_call.1} parent=43 // pred_region
          %s5926 = ssub.s32 32, 32
          %5927 = vsyncadd %s5918, %s5926
          %s5928 = smul.addr %s24, 32
          %s5929 = scalar_lea.hbm %s6, %s5928
          %s5931 = sshll.u32 %s5921, 4
          %s5932 = int_to_ptr.vmem [resolvable:$true] %s5931
          %5934 = dma.vmem_to_hbm [thread:$0]  %s5932, 32, %s5929, %s5918
        $region52: #{tpu_custom_call.1} parent=43 // pred_fallthru
          _
      $region44: #{tpu_custom_call.1} parent=5 // pred_fallthru
        _
      %p5935 = scmp.le.s32.totalorder 2, %s15
      // Predicated region
      $region53: #{tpu_custom_call.1} parent=5 // pred_check
        %p5936 = pneg %p5935
      $region54: #{tpu_custom_call.1} parent=5 // pred_check_branch
        %5938 = sbr.rel (%p5936) target = $region56
      $region55: #{tpu_custom_call.1} parent=5 // pred_region
        %s5939 = ssub.s32 %s15, 2
        // Predicated region
        $region57: #{tpu_custom_call.1} parent=55 // pred_check
          %p5940 = pneg %p196
        $region58: #{tpu_custom_call.1} parent=55 // pred_check_branch
          %5942 = sbr.rel (%p5940) target = $region60
        $region59: #{tpu_custom_call.1} parent=55 // pred_region
          %s5943 = sand.u32 %s181, 1
          %s5944 = scalar_lea.sflag [#allocation3], %s5943
          %s5945 = sand.u32 %s181, 1
          %s5946 = smul.addr %s5945, 2
          %s5947 = scalar_lea.vmem [#allocation2], %s5946
          %5948 = dma.done %s5944, 32
        $region60: #{tpu_custom_call.1} parent=55 // pred_fallthru
          _
      $region56: #{tpu_custom_call.1} parent=5 // pred_fallthru
        _
    $region6: #{tpu_custom_call.1} parent=1 // loop_footer
      %s19 = sadd.s32 1, %s15
    $region7: #{tpu_custom_call.1} parent=1 // loop_footer_branch
      %14 = sbr.rel target = $region3
    $region8: #{tpu_custom_call.1} parent=1 // loop_exit
      _
    %5949 = vsyncpa [#allocation3], 1
    %s5950 = scalar_lea.sflag [#allocation3], 1
    %5951 = vsyncpa %s5950, 1

</llo_original>
